<compile_context>
chip_gen: v5e
topology: v5e:2x2
jax: 0.10.0
libtpu: 0.0.40
codegen_flags: <defaults>
</compile_context>

<pallas_src>
import jax
import jax.numpy as jnp
from jax import lax
from jax.experimental import pallas as pl
from jax.experimental.pallas import tpu as pltpu

MXU_DTYPE = jnp.bfloat16          # matmul-operand dtype (f32 accumulate everywhere)


def _tpu_vmem_capacity_bytes():
    try:
        return int(pltpu.get_tpu_info().vmem_capacity_bytes)
    except Exception:
        return 64 * 1024 * 1024   # conservative default (v7x per-core VMEM)


_VMEM_CAP = _tpu_vmem_capacity_bytes()
VMEM_LIMIT = min(int(_VMEM_CAP * 0.75), 112 * 1024 * 1024)   # scoped-vmem limit handed to Mosaic
TILE_BUDGET = min(int(_VMEM_CAP * 0.55), 96 * 1024 * 1024)   # budget for double-buffered blocks + scratch


def _largest_divisor(total, pred, multiple_of=1):
    """Largest divisor of `total` (multiple of `multiple_of`, or == total) satisfying pred."""
    cands = [d for d in range(total, 0, -1)
             if total % d == 0 and (d % multiple_of == 0 or d == total)]
    for d in cands:
        if pred(d):
            return d
    return cands[-1]


# ---------------------------- Pallas kernels ----------------------------

def _spatial_fused_kernel(x_ref, w1_ref, b1_ref, w2_ref, b2_ref, o_ref, pad_ref):
    """conv1(1x1x1)+bn1+relu -> conv2(1,3,3 'same')+bn2+relu for F frames per grid step."""
    F, H, W, Cin = x_ref.shape
    Cmid = w1_ref.shape[1]

    # conv1 (BN1 scale folded into w1) + bias + ReLU -- bf16 MXU operands, f32 accumulate.
    h1 = jnp.dot(x_ref[...].reshape(F * H * W, Cin), w1_ref[...],
                 preferred_element_type=jnp.float32)
    h1 = jnp.maximum(h1 + b1_ref[...], 0.0)                          # (F*H*W, Cmid) f32

    # bf16 H-halo scratch: zero ONLY the two halo row-slabs (interior fully overwritten);
    # single f32->bf16 cast on the interior write.  Re-done every step (megacore-safe).
    pad_ref[:, 0:1] = jnp.zeros((F, 1, W, Cmid), pad_ref.dtype)
    pad_ref[:, H + 1:H + 2] = jnp.zeros((F, 1, W, Cmid), pad_ref.dtype)
    pad_ref[:, 1:H + 1] = h1.reshape(F, H, W, Cmid).astype(pad_ref.dtype)

    # Column-shifted variants (zero at the borders) -> no W halo, no misaligned scratch writes.
    padded = pad_ref[...]                                            # (F, H+2, W, Cmid) bf16
    zcol = jnp.zeros((F, H + 2, 1, Cmid), padded.dtype)
    shifted = (
        jnp.concatenate([zcol, padded[:, :, :W - 1, :]], axis=2),    # value at w is x[.., w-1]
        padded,                                                      # x[.., w]
        jnp.concatenate([padded[:, :, 1:, :], zcol], axis=2),        # x[.., w+1]
    )

    # K-concatenate the 9 taps -> ONE MXU matmul against w2 reshaped to (9*Cmid, Cmid).
    patch = jnp.concatenate(
        [shifted[kw][:, kh:kh + H].reshape(F * H * W, Cmid)
         for kh in range(3) for kw in range(3)],
        axis=-1)                                                     # (F*H*W, 9*Cmid) bf16
    y = jnp.dot(patch, w2_ref[...], preferred_element_type=jnp.float32)
    y = jnp.maximum(y + b2_ref[...], 0.0)
    o_ref[...] = y.reshape(F, H, W, Cmid).astype(o_ref.dtype)


def _temporal_fused_kernel(h_ref, r_ref, w3_ref, b3_ref, w4_ref, b4_ref, o_ref, pad_ref):
    """conv3(3,1,1 'same')+bn3+relu -> conv4(1x1x1)+bn4 + residual + relu, one (n, P-strip)."""
    T, P, Cmid = h_ref.shape
    Cexp = w4_ref.shape[1]

    # bf16 T-halo scratch: zero only the two halo slabs, overwrite the interior (already bf16).
    pad_ref[0:1] = jnp.zeros((1, P, Cmid), pad_ref.dtype)
    pad_ref[T + 1:T + 2] = jnp.zeros((1, P, Cmid), pad_ref.dtype)
    pad_ref[1:T + 1] = h_ref[...]

    # K-concatenate the 3 temporal taps -> ONE MXU matmul against w3 of shape (3*Cmid, Cmid).
    padded = pad_ref[...]                                            # (T+2, P, Cmid) bf16
    patch = jnp.concatenate(
        [padded[dt:dt + T].reshape(T * P, Cmid) for dt in range(3)],
        axis=-1)                                                     # (T*P, 3*Cmid) bf16
    h3 = jnp.dot(patch, w3_ref[...], preferred_element_type=jnp.float32)
    h3 = jnp.maximum(h3 + b3_ref[...], 0.0)                          # (T*P, Cmid) f32

    # conv4 (BN4 folded) + bias + residual (bf16 stream, f32 add) + ReLU epilogue.
    y = jnp.dot(h3.astype(MXU_DTYPE), w4_ref[...],
                preferred_element_type=jnp.float32)
    y = y + b4_ref[...] + r_ref[...].reshape(T * P, Cexp).astype(jnp.float32)
    o_ref[...] = jnp.maximum(y, 0.0).reshape(T, P, Cexp).astype(o_ref.dtype)


# ---------------------------- wrappers ----------------------------

def spatial_stage(x, w1, b1, w2, b2):
    """x: (B, H, W, Cin) bf16 -> (B, H, W, Cmid) bf16; F frames per grid step."""
    B, H, W, Cin = x.shape
    Cmid = w1.shape[1]

    def fits(f, need_two_steps):
        if need_two_steps and B >= 2 and B // f < 2:     # keep >=2 steps for 2-TC chips
            return False
        if f * H * W > 4096:                             # keep the K-concat patch value modest
            return False
        blk = 2 * (f * H * W * (Cin + Cmid) * 2)         # double-buffered bf16 in/out blocks
        blk += f * (H + 2) * W * Cmid * 2                # bf16 halo scratch
        blk += f * H * W * 9 * Cmid * 2                  # transient patch value
        return blk <= TILE_BUDGET

    f = _largest_divisor(B, lambda d: fits(d, True))
    if not fits(f, True):
        f = _largest_divisor(B, lambda d: fits(d, False))

    return pl.pallas_call(
        _spatial_fused_kernel,
        out_shape=jax.ShapeDtypeStruct((B, H, W, Cmid), MXU_DTYPE),
        grid=(B // f,),
        in_specs=[
            pl.BlockSpec((f, H, W, Cin), lambda b: (b, 0, 0, 0)),
            pl.BlockSpec((Cin, Cmid), lambda b: (0, 0)),
            pl.BlockSpec((1, Cmid), lambda b: (0, 0)),
            pl.BlockSpec((9 * Cmid, Cmid), lambda b: (0, 0)),
            pl.BlockSpec((1, Cmid), lambda b: (0, 0)),
        ],
        out_specs=pl.BlockSpec((f, H, W, Cmid), lambda b: (b, 0, 0, 0)),
        scratch_shapes=[pltpu.VMEM((f, H + 2, W, Cmid), MXU_DTYPE)],
        compiler_params=pltpu.CompilerParams(
            dimension_semantics=("parallel",),
            vmem_limit_bytes=VMEM_LIMIT),
    )(x, w1, b1, w2, b2)


def temporal_stage(h, res, w3, b3, w4, b4):
    """h: (N, T, P, Cmid) bf16; res: (N, T, P, Cexp) bf16 -> (N, T, P, Cexp) f32."""
    N, T, P, Cmid = h.shape
    Cexp = w4.shape[1]

    def block_bytes(tp):
        b = 2 * (T * tp * Cmid * 2)        # h blocks (bf16, double-buffered)
        b += 2 * (T * tp * Cexp * 2)       # residual blocks (bf16)
        b += 2 * (T * tp * Cexp * 4)       # output blocks (f32)
        b += (T + 2) * tp * Cmid * 2       # bf16 halo scratch
        b += T * tp * 3 * Cmid * 2         # transient K-concat patch value
        return b

    def fits(tp, need_two_steps):
        if need_two_steps and N * (P // tp) < 2:
            return False
        return block_bytes(tp) <= TILE_BUDGET

    tp = _largest_divisor(P, lambda d: fits(d, True), multiple_of=8)
    if not fits(tp, True):
        tp = _largest_divisor(P, lambda d: fits(d, False), multiple_of=8)

    # NOTE: the former input_output_aliases={1:0} is dropped on purpose -- the residual is now
    # carried in bf16 while the output stays f32 (module contract), so they are no longer
    # byte-compatible; the halved residual HBM read outweighs the alias.
    return pl.pallas_call(
        _temporal_fused_kernel,
        out_shape=jax.ShapeDtypeStruct((N, T, P, Cexp), jnp.float32),
        grid=(N, P // tp),
        in_specs=[
            pl.BlockSpec((pl.Squeezed(), T, tp, Cmid), lambda n, p: (n, 0, p, 0)),
            pl.BlockSpec((pl.Squeezed(), T, tp, Cexp), lambda n, p: (n, 0, p, 0)),
            pl.BlockSpec((3 * Cmid, Cmid), lambda n, p: (0, 0)),
            pl.BlockSpec((1, Cmid), lambda n, p: (0, 0)),
            pl.BlockSpec((Cmid, Cexp), lambda n, p: (0, 0)),
            pl.BlockSpec((1, Cexp), lambda n, p: (0, 0)),
        ],
        out_specs=pl.BlockSpec((pl.Squeezed(), T, tp, Cexp), lambda n, p: (n, 0, p, 0)),
        scratch_shapes=[pltpu.VMEM((T + 2, tp, Cmid), MXU_DTYPE)],
        compiler_params=pltpu.CompilerParams(
            dimension_semantics=("parallel", "parallel"),
            vmem_limit_bytes=VMEM_LIMIT),
    )(h, res, w3, b3, w4, b4)


# ---------------------------- Bottleneck forward ----------------------------

def bottleneck_forward(x, p):
    """x: (N, Cin, T, H, W) float32 in PyTorch NCDHW layout."""
    N, Cin, T, H, W = x.shape
    Cmid = p["w1f"].shape[1]
    Cexp = p["w4f"].shape[1]
    if Cin != Cexp:
        raise ValueError("downsample=None requires inplanes == 4*planes")

    # NCDHW -> channels-last glue (disappears if the surrounding model stays channels-last).
    x_cl = jnp.transpose(x, (0, 2, 3, 4, 1))                     # (N, T, H, W, Cin)
    x_mxu = x_cl.astype(MXU_DTYPE)                               # shared: conv1 input + residual

    # stage 1: conv1 + bn1 + relu + conv2 + bn2 + relu   (F frames per grid step)
    h2 = spatial_stage(x_mxu.reshape(N * T, H, W, Cin),
                       p["w1f"], p["b1f"], p["w2f"], p["b2f"])   # (N*T, H, W, Cmid) bf16

    # stage 2: conv3 + bn3 + relu + conv4 + bn4 + residual + relu
    out = temporal_stage(h2.reshape(N, T, H * W, Cmid),
                         x_mxu.reshape(N, T, H * W, Cexp),
                         p["w3f"], p["b3f"], p["w4f"], p["b4f"])  # (N, T, HW, Cexp) f32

    out = out.reshape(N, T, H, W, Cexp)
    return jnp.transpose(out, (0, 4, 1, 2, 3))                   # back to NCDHW


# ---------------------------- pure-JAX reference ----------------------------

def reference_forward(x, p):
    dn = ("NCDHW", "OIDHW", "NCDHW")

    def bn(y, s, b):
        return y * s[None, :, None, None, None] + b[None, :, None, None, None]

    def conv(y, w, pad):
        return lax.conv_general_dilated(y, w, (1, 1, 1), pad, dimension_numbers=dn)

    relu = lambda y: jnp.maximum(y, 0.0)
    out = relu(bn(conv(x, p["w1"], [(0, 0)] * 3), p["s1"], p["b1"]))
    out = relu(bn(conv(out, p["w2"], [(0, 0), (1, 1), (1, 1)]), p["s2"], p["b2"]))
    out = relu(bn(conv(out, p["w3"], [(1, 1), (0, 0), (0, 0)]), p["s3"], p["b3"]))
    out = bn(conv(out, p["w4"], [(0, 0)] * 3), p["s4"], p["b4"])
    return relu(out + x)


# ---------------------------- parameter setup ----------------------------

def make_params(key, inplanes, planes):
    ks = jax.random.split(key, 20)
    eps = 1e-5

    def bn_fold(kg, kb, km, kv, c):
        gamma = 1.0 + 0.1 * jax.random.normal(kg, (c,), jnp.float32)
        beta = 0.1 * jax.random.normal(kb, (c,), jnp.float32)
        mean = 0.1 * jax.random.normal(km, (c,), jnp.float32)
        var = 0.5 + jax.random.uniform(kv, (c,), jnp.float32)
        s = gamma / jnp.sqrt(var + eps)
        b = beta - mean * s
        return s, b

    w1 = 0.1 * jax.random.normal(ks[0], (planes, inplanes, 1, 1, 1), jnp.float32)
    w2 = 0.1 * jax.random.normal(ks[1], (planes, planes, 1, 3, 3), jnp.float32)
    w3 = 0.1 * jax.random.normal(ks[2], (planes, planes, 3, 1, 1), jnp.float32)
    w4 = 0.1 * jax.random.normal(ks[3], (4 * planes, planes, 1, 1, 1), jnp.float32)

    s1, b1 = bn_fold(ks[4], ks[5], ks[6], ks[7], planes)
    s2, b2 = bn_fold(ks[8], ks[9], ks[10], ks[11], planes)
    s3, b3 = bn_fold(ks[12], ks[13], ks[14], ks[15], planes)
    s4, b4 = bn_fold(ks[16], ks[17], ks[18], ks[19], 4 * planes)

    # Kernel layouts: BN scale folded into the conv weights, taps K-concatenated, bf16 operands.
    w1f = (w1[:, :, 0, 0, 0].T * s1[None, :]).astype(MXU_DTYPE)                 # (Cin, Cmid)
    w2f = (jnp.transpose(w2[:, :, 0, :, :], (2, 3, 1, 0)).reshape(9, planes, planes)
           * s2[None, None, :]).reshape(9 * planes, planes).astype(MXU_DTYPE)   # (9*Cmid, Cmid)
    w3f = (jnp.transpose(w3[:, :, :, 0, 0], (2, 1, 0))
           * s3[None, None, :]).reshape(3 * planes, planes).astype(MXU_DTYPE)   # (3*Cmid, Cmid)
    w4f = (w4[:, :, 0, 0, 0].T * s4[None, :]).astype(MXU_DTYPE)                 # (Cmid, Cexp)

    return {
        # reference (OIDHW) weights + BN params
        "w1": w1, "w2": w2, "w3": w3, "w4": w4,
        "s1": s1, "b1": b1, "s2": s2, "b2": b2,
        "s3": s3, "b3": b3, "s4": s4, "b4": b4,
        # kernel-layout folded weights / f32 biases
        "w1f": w1f, "w2f": w2f, "w3f": w3f, "w4f": w4f,
        "b1f": b1.reshape(1, -1), "b2f": b2.reshape(1, -1),
        "b3f": b3.reshape(1, -1), "b4f": b4.reshape(1, -1),
    }


if __name__ == "__main__":
    # NOTE: toy channel counts (Cmid=4, Cexp=16) under-fill the 128-wide lanes; benchmark the
    # kernel at realistic widths (>=128 channels), not at these shapes.
    N, inplanes, planes, T, H, W = 2, 16, 4, 4, 8, 8   # inplanes == 4*planes (no downsample)
    key = jax.random.PRNGKey(0)
    kx, kp = jax.random.split(key)
    x = jax.random.normal(kx, (N, inplanes, T, H, W), jnp.float32)
    params = make_params(kp, inplanes, planes)

    fwd = jax.jit(bottleneck_forward)
    out = jax.block_until_ready(fwd(x, params))
    ref = jax.block_until_ready(reference_forward(x, params))

    assert out.shape == (N, 4 * planes, T, H, W)
    # bf16 MXU operands + bf16 residual carry -> relaxed tolerance vs the pure-f32 reference.
    err = float(jnp.max(jnp.abs(out - ref)))
    assert err < 6e-2, err
    print("KERNEL_OK")
</pallas_src>

<mosaic_0001>
module attributes {stable_mosaic.version = 11 : i64} {
  func.func @_spatial_fused_kernel(%arg0: i32, %arg1: memref<4x8x8x16xbf16, #tpu.memory_space<vmem>>, %arg2: memref<16x4xbf16, #tpu.memory_space<vmem>>, %arg3: memref<1x4xf32, #tpu.memory_space<vmem>>, %arg4: memref<36x4xbf16, #tpu.memory_space<vmem>>, %arg5: memref<1x4xf32, #tpu.memory_space<vmem>>, %arg6: memref<4x8x8x4xbf16, #tpu.memory_space<vmem>>, %arg7: memref<4x10x8x4xbf16, #tpu.memory_space<vmem>>) attributes {dimension_semantics = [#tpu.dimension_semantics<parallel>], iteration_bounds = array<i64: 2>, scalar_prefetch = 0 : i64, scratch_operands = 1 : i64, tpu.core_type = #tpu.core_type<tc>, window_params = [{transform_indices = @transform_0, window_bounds = array<i64: 4, 8, 8, 16>}, {pipeline_mode = #tpu.pipeline_mode<synchronous>, transform_indices = @transform_1, window_bounds = array<i64: 16, 4>}, {pipeline_mode = #tpu.pipeline_mode<synchronous>, transform_indices = @transform_2, window_bounds = array<i64: 1, 4>}, {pipeline_mode = #tpu.pipeline_mode<synchronous>, transform_indices = @transform_3, window_bounds = array<i64: 36, 4>}, {pipeline_mode = #tpu.pipeline_mode<synchronous>, transform_indices = @transform_4, window_bounds = array<i64: 1, 4>}, {transform_indices = @transform_5, window_bounds = array<i64: 4, 8, 8, 4>}]} {
    %c0 = arith.constant 0 : index
    %c0_0 = arith.constant 0 : index
    %c0_1 = arith.constant 0 : index
    %c0_2 = arith.constant 0 : index
    %0 = vector.load %arg1[%c0, %c0_0, %c0_1, %c0_2] : memref<4x8x8x16xbf16, #tpu.memory_space<vmem>>, vector<4x8x8x16xbf16>
    %1 = vector.shape_cast %0 : vector<4x8x8x16xbf16> to vector<256x16xbf16>
    %c0_3 = arith.constant 0 : index
    %c0_4 = arith.constant 0 : index
    %2 = vector.load %arg2[%c0_3, %c0_4] : memref<16x4xbf16, #tpu.memory_space<vmem>>, vector<16x4xbf16>
    %cst = arith.constant dense<0.000000e+00> : vector<256x4xf32>
    %3 = tpu.matmul %1, %2, %cst {dimension_numbers = #tpu.dot_dimension_numbers<[1], [0], [0], [1], [0, 0, 1, 1], [], []>} : vector<256x16xbf16>, vector<16x4xbf16>, vector<256x4xf32> -> vector<256x4xf32>
    %c0_5 = arith.constant 0 : index
    %c0_6 = arith.constant 0 : index
    %4 = vector.load %arg3[%c0_5, %c0_6] : memref<1x4xf32, #tpu.memory_space<vmem>>, vector<1x4xf32>
    %5 = vector.broadcast %4 : vector<1x4xf32> to vector<256x4xf32>
    %6 = arith.addf %3, %5 : vector<256x4xf32>
    %cst_7 = arith.constant 0.000000e+00 : f32
    %7 = vector.broadcast %cst_7 : f32 to vector<256x4xf32>
    %8 = arith.maximumf %6, %7 : vector<256x4xf32>
    %cst_8 = arith.constant 0.000000e+00 : bf16
    %9 = vector.broadcast %cst_8 : bf16 to vector<4x1x8x4xbf16>
    %c0_9 = arith.constant 0 : index
    %c0_10 = arith.constant 0 : index
    %c0_11 = arith.constant 0 : index
    %c0_12 = arith.constant 0 : index
    %10 = vector.load %arg7[%c0_9, %c0_10, %c0_11, %c0_12] : memref<4x10x8x4xbf16, #tpu.memory_space<vmem>>, vector<4x1x8x4xbf16>
    tpu.vector_store %arg7[%c0_9, %c0_10, %c0_11, %c0_12], %9 {strides = array<i32>} : memref<4x10x8x4xbf16, #tpu.memory_space<vmem>>, vector<4x1x8x4xbf16>,
    %cst_13 = arith.constant 0.000000e+00 : bf16
    %11 = vector.broadcast %cst_13 : bf16 to vector<4x1x8x4xbf16>
    %c0_14 = arith.constant 0 : index
    %c9 = arith.constant 9 : index
    %c0_15 = arith.constant 0 : index
    %c0_16 = arith.constant 0 : index
    %12 = vector.load %arg7[%c0_14, %c9, %c0_15, %c0_16] : memref<4x10x8x4xbf16, #tpu.memory_space<vmem>>, vector<4x1x8x4xbf16>
    tpu.vector_store %arg7[%c0_14, %c9, %c0_15, %c0_16], %11 {strides = array<i32>} : memref<4x10x8x4xbf16, #tpu.memory_space<vmem>>, vector<4x1x8x4xbf16>,
    %13 = vector.shape_cast %8 : vector<256x4xf32> to vector<4x8x8x4xf32>
    %14 = arith.truncf %13 : vector<4x8x8x4xf32> to vector<4x8x8x4xbf16>
    %c0_17 = arith.constant 0 : index
    %c1 = arith.constant 1 : index
    %c0_18 = arith.constant 0 : index
    %c0_19 = arith.constant 0 : index
    %15 = vector.load %arg7[%c0_17, %c1, %c0_18, %c0_19] : memref<4x10x8x4xbf16, #tpu.memory_space<vmem>>, vector<4x8x8x4xbf16>
    tpu.vector_store %arg7[%c0_17, %c1, %c0_18, %c0_19], %14 {strides = array<i32>} : memref<4x10x8x4xbf16, #tpu.memory_space<vmem>>, vector<4x8x8x4xbf16>,
    %c0_20 = arith.constant 0 : index
    %c0_21 = arith.constant 0 : index
    %c0_22 = arith.constant 0 : index
    %c0_23 = arith.constant 0 : index
    %16 = vector.load %arg7[%c0_20, %c0_21, %c0_22, %c0_23] : memref<4x10x8x4xbf16, #tpu.memory_space<vmem>>, vector<4x10x8x4xbf16>
    %cst_24 = arith.constant 0.000000e+00 : bf16
    %17 = vector.broadcast %cst_24 : bf16 to vector<4x10x1x4xbf16>
    %18 = vector.extract_strided_slice %16 {offsets = [0, 0, 0, 0], sizes = [4, 10, 7, 4], strides = [1, 1, 1, 1]} : vector<4x10x8x4xbf16> to vector<4x10x7x4xbf16>
    %19 = tpu.concatenate %17, %18 in 2 : vector<4x10x1x4xbf16>, vector<4x10x7x4xbf16> -> vector<4x10x8x4xbf16>
    %20 = vector.extract_strided_slice %16 {offsets = [0, 0, 1, 0], sizes = [4, 10, 7, 4], strides = [1, 1, 1, 1]} : vector<4x10x8x4xbf16> to vector<4x10x7x4xbf16>
    %21 = tpu.concatenate %20, %17 in 2 : vector<4x10x7x4xbf16>, vector<4x10x1x4xbf16> -> vector<4x10x8x4xbf16>
    %22 = vector.extract_strided_slice %19 {offsets = [0, 0, 0, 0], sizes = [4, 8, 8, 4], strides = [1, 1, 1, 1]} : vector<4x10x8x4xbf16> to vector<4x8x8x4xbf16>
    %23 = vector.shape_cast %22 : vector<4x8x8x4xbf16> to vector<256x4xbf16>
    %24 = vector.extract_strided_slice %16 {offsets = [0, 0, 0, 0], sizes = [4, 8, 8, 4], strides = [1, 1, 1, 1]} : vector<4x10x8x4xbf16> to vector<4x8x8x4xbf16>
    %25 = vector.shape_cast %24 : vector<4x8x8x4xbf16> to vector<256x4xbf16>
    %26 = vector.extract_strided_slice %21 {offsets = [0, 0, 0, 0], sizes = [4, 8, 8, 4], strides = [1, 1, 1, 1]} : vector<4x10x8x4xbf16> to vector<4x8x8x4xbf16>
    %27 = vector.shape_cast %26 : vector<4x8x8x4xbf16> to vector<256x4xbf16>
    %28 = vector.extract_strided_slice %19 {offsets = [0, 1, 0, 0], sizes = [4, 8, 8, 4], strides = [1, 1, 1, 1]} : vector<4x10x8x4xbf16> to vector<4x8x8x4xbf16>
    %29 = vector.shape_cast %28 : vector<4x8x8x4xbf16> to vector<256x4xbf16>
    %30 = vector.extract_strided_slice %16 {offsets = [0, 1, 0, 0], sizes = [4, 8, 8, 4], strides = [1, 1, 1, 1]} : vector<4x10x8x4xbf16> to vector<4x8x8x4xbf16>
    %31 = vector.shape_cast %30 : vector<4x8x8x4xbf16> to vector<256x4xbf16>
    %32 = vector.extract_strided_slice %21 {offsets = [0, 1, 0, 0], sizes = [4, 8, 8, 4], strides = [1, 1, 1, 1]} : vector<4x10x8x4xbf16> to vector<4x8x8x4xbf16>
    %33 = vector.shape_cast %32 : vector<4x8x8x4xbf16> to vector<256x4xbf16>
    %34 = vector.extract_strided_slice %19 {offsets = [0, 2, 0, 0], sizes = [4, 8, 8, 4], strides = [1, 1, 1, 1]} : vector<4x10x8x4xbf16> to vector<4x8x8x4xbf16>
    %35 = vector.shape_cast %34 : vector<4x8x8x4xbf16> to vector<256x4xbf16>
    %36 = vector.extract_strided_slice %16 {offsets = [0, 2, 0, 0], sizes = [4, 8, 8, 4], strides = [1, 1, 1, 1]} : vector<4x10x8x4xbf16> to vector<4x8x8x4xbf16>
    %37 = vector.shape_cast %36 : vector<4x8x8x4xbf16> to vector<256x4xbf16>
    %38 = vector.extract_strided_slice %21 {offsets = [0, 2, 0, 0], sizes = [4, 8, 8, 4], strides = [1, 1, 1, 1]} : vector<4x10x8x4xbf16> to vector<4x8x8x4xbf16>
    %39 = vector.shape_cast %38 : vector<4x8x8x4xbf16> to vector<256x4xbf16>
    %40 = tpu.concatenate %23, %25, %27, %29, %31, %33, %35, %37, %39 in 1 : vector<256x4xbf16>, vector<256x4xbf16>, vector<256x4xbf16>, vector<256x4xbf16>, vector<256x4xbf16>, vector<256x4xbf16>, vector<256x4xbf16>, vector<256x4xbf16>, vector<256x4xbf16> -> vector<256x36xbf16>
    %c0_25 = arith.constant 0 : index
    %c0_26 = arith.constant 0 : index
    %41 = vector.load %arg4[%c0_25, %c0_26] : memref<36x4xbf16, #tpu.memory_space<vmem>>, vector<36x4xbf16>
    %cst_27 = arith.constant dense<0.000000e+00> : vector<256x4xf32>
    %42 = tpu.matmul %40, %41, %cst_27 {dimension_numbers = #tpu.dot_dimension_numbers<[1], [0], [0], [1], [0, 0, 1, 1], [], []>} : vector<256x36xbf16>, vector<36x4xbf16>, vector<256x4xf32> -> vector<256x4xf32>
    %c0_28 = arith.constant 0 : index
    %c0_29 = arith.constant 0 : index
    %43 = vector.load %arg5[%c0_28, %c0_29] : memref<1x4xf32, #tpu.memory_space<vmem>>, vector<1x4xf32>
    %44 = vector.broadcast %43 : vector<1x4xf32> to vector<256x4xf32>
    %45 = arith.addf %42, %44 : vector<256x4xf32>
    %cst_30 = arith.constant 0.000000e+00 : f32
    %46 = vector.broadcast %cst_30 : f32 to vector<256x4xf32>
    %47 = arith.maximumf %45, %46 : vector<256x4xf32>
    %48 = vector.shape_cast %47 : vector<256x4xf32> to vector<4x8x8x4xf32>
    %49 = arith.truncf %48 : vector<4x8x8x4xf32> to vector<4x8x8x4xbf16>
    %c0_31 = arith.constant 0 : index
    %c0_32 = arith.constant 0 : index
    %c0_33 = arith.constant 0 : index
    %c0_34 = arith.constant 0 : index
    %50 = vector.load %arg6[%c0_31, %c0_32, %c0_33, %c0_34] : memref<4x8x8x4xbf16, #tpu.memory_space<vmem>>, vector<4x8x8x4xbf16>
    tpu.vector_store %arg6[%c0_31, %c0_32, %c0_33, %c0_34], %49 {strides = array<i32>} : memref<4x8x8x4xbf16, #tpu.memory_space<vmem>>, vector<4x8x8x4xbf16>,
    return
  }
  func.func @transform_0(%arg0: i32) -> (i32, i32, i32, i32) {
    %c0_i32 = arith.constant 0 : i32
    %c0_i32_0 = arith.constant 0 : i32
    %c0_i32_1 = arith.constant 0 : i32
    %c0_i32_2 = arith.constant 0 : i32
    return %arg0, %c0_i32, %c0_i32_0, %c0_i32_1 : i32, i32, i32, i32
  }
  func.func @transform_1(%arg0: i32) -> (i32, i32) {
    %c0_i32 = arith.constant 0 : i32
    %c0_i32_0 = arith.constant 0 : i32
    %c0_i32_1 = arith.constant 0 : i32
    return %c0_i32, %c0_i32_0 : i32, i32
  }
  func.func @transform_2(%arg0: i32) -> (i32, i32) {
    %c0_i32 = arith.constant 0 : i32
    %c0_i32_0 = arith.constant 0 : i32
    %c0_i32_1 = arith.constant 0 : i32
    return %c0_i32, %c0_i32_0 : i32, i32
  }
  func.func @transform_3(%arg0: i32) -> (i32, i32) {
    %c0_i32 = arith.constant 0 : i32
    %c0_i32_0 = arith.constant 0 : i32
    %c0_i32_1 = arith.constant 0 : i32
    return %c0_i32, %c0_i32_0 : i32, i32
  }
  func.func @transform_4(%arg0: i32) -> (i32, i32) {
    %c0_i32 = arith.constant 0 : i32
    %c0_i32_0 = arith.constant 0 : i32
    %c0_i32_1 = arith.constant 0 : i32
    return %c0_i32, %c0_i32_0 : i32, i32
  }
  func.func @transform_5(%arg0: i32) -> (i32, i32, i32, i32) {
    %c0_i32 = arith.constant 0 : i32
    %c0_i32_0 = arith.constant 0 : i32
    %c0_i32_1 = arith.constant 0 : i32
    %c0_i32_2 = arith.constant 0 : i32
    return %arg0, %c0_i32, %c0_i32_0, %c0_i32_1 : i32, i32, i32, i32
  }
}

module attributes {stable_mosaic.version = 11 : i64} {
  func.func @_temporal_fused_kernel(%arg0: i32, %arg1: i32, %arg2: memref<1x4x64x4xbf16, #tpu.memory_space<vmem>>, %arg3: memref<1x4x64x16xbf16, #tpu.memory_space<vmem>>, %arg4: memref<12x4xbf16, #tpu.memory_space<vmem>>, %arg5: memref<1x4xf32, #tpu.memory_space<vmem>>, %arg6: memref<4x16xbf16, #tpu.memory_space<vmem>>, %arg7: memref<1x16xf32, #tpu.memory_space<vmem>>, %arg8: memref<1x4x64x16xf32, #tpu.memory_space<vmem>>, %arg9: memref<6x64x4xbf16, #tpu.memory_space<vmem>>) attributes {dimension_semantics = [#tpu.dimension_semantics<parallel>, #tpu.dimension_semantics<parallel>], iteration_bounds = array<i64: 2, 1>, scalar_prefetch = 0 : i64, scratch_operands = 1 : i64, tpu.core_type = #tpu.core_type<tc>, window_params = [{transform_indices = @transform_0, window_bounds = array<i64: 1, 4, 64, 4>}, {transform_indices = @transform_1, window_bounds = array<i64: 1, 4, 64, 16>}, {pipeline_mode = #tpu.pipeline_mode<synchronous>, transform_indices = @transform_2, window_bounds = array<i64: 12, 4>}, {pipeline_mode = #tpu.pipeline_mode<synchronous>, transform_indices = @transform_3, window_bounds = array<i64: 1, 4>}, {pipeline_mode = #tpu.pipeline_mode<synchronous>, transform_indices = @transform_4, window_bounds = array<i64: 4, 16>}, {pipeline_mode = #tpu.pipeline_mode<synchronous>, transform_indices = @transform_5, window_bounds = array<i64: 1, 16>}, {transform_indices = @transform_6, window_bounds = array<i64: 1, 4, 64, 16>}]} {
    %cst = arith.constant 0.000000e+00 : bf16
    %0 = vector.broadcast %cst : bf16 to vector<1x64x4xbf16>
    %c0 = arith.constant 0 : index
    %c0_0 = arith.constant 0 : index
    %c0_1 = arith.constant 0 : index
    %1 = vector.load %arg9[%c0, %c0_0, %c0_1] : memref<6x64x4xbf16, #tpu.memory_space<vmem>>, vector<1x64x4xbf16>
    tpu.vector_store %arg9[%c0, %c0_0, %c0_1], %0 {strides = array<i32>} : memref<6x64x4xbf16, #tpu.memory_space<vmem>>, vector<1x64x4xbf16>,
    %cst_2 = arith.constant 0.000000e+00 : bf16
    %2 = vector.broadcast %cst_2 : bf16 to vector<1x64x4xbf16>
    %c5 = arith.constant 5 : index
    %c0_3 = arith.constant 0 : index
    %c0_4 = arith.constant 0 : index
    %3 = vector.load %arg9[%c5, %c0_3, %c0_4] : memref<6x64x4xbf16, #tpu.memory_space<vmem>>, vector<1x64x4xbf16>
    tpu.vector_store %arg9[%c5, %c0_3, %c0_4], %2 {strides = array<i32>} : memref<6x64x4xbf16, #tpu.memory_space<vmem>>, vector<1x64x4xbf16>,
    %c0_5 = arith.constant 0 : index
    %c0_6 = arith.constant 0 : index
    %c0_7 = arith.constant 0 : index
    %c0_8 = arith.constant 0 : index
    %4 = vector.load %arg2[%c0_5, %c0_6, %c0_7, %c0_8] : memref<1x4x64x4xbf16, #tpu.memory_space<vmem>>, vector<1x4x64x4xbf16>
    %5 = vector.shape_cast %4 : vector<1x4x64x4xbf16> to vector<4x64x4xbf16>
    %c1 = arith.constant 1 : index
    %c0_9 = arith.constant 0 : index
    %c0_10 = arith.constant 0 : index
    %6 = vector.load %arg9[%c1, %c0_9, %c0_10] : memref<6x64x4xbf16, #tpu.memory_space<vmem>>, vector<4x64x4xbf16>
    tpu.vector_store %arg9[%c1, %c0_9, %c0_10], %5 {strides = array<i32>} : memref<6x64x4xbf16, #tpu.memory_space<vmem>>, vector<4x64x4xbf16>,
    %c0_11 = arith.constant 0 : index
    %c0_12 = arith.constant 0 : index
    %c0_13 = arith.constant 0 : index
    %7 = vector.load %arg9[%c0_11, %c0_12, %c0_13] : memref<6x64x4xbf16, #tpu.memory_space<vmem>>, vector<6x64x4xbf16>
    %8 = vector.extract_strided_slice %7 {offsets = [0, 0, 0], sizes = [4, 64, 4], strides = [1, 1, 1]} : vector<6x64x4xbf16> to vector<4x64x4xbf16>
    %9 = vector.shape_cast %8 : vector<4x64x4xbf16> to vector<256x4xbf16>
    %10 = vector.extract_strided_slice %7 {offsets = [1, 0, 0], sizes = [4, 64, 4], strides = [1, 1, 1]} : vector<6x64x4xbf16> to vector<4x64x4xbf16>
    %11 = vector.shape_cast %10 : vector<4x64x4xbf16> to vector<256x4xbf16>
    %12 = vector.extract_strided_slice %7 {offsets = [2, 0, 0], sizes = [4, 64, 4], strides = [1, 1, 1]} : vector<6x64x4xbf16> to vector<4x64x4xbf16>
    %13 = vector.shape_cast %12 : vector<4x64x4xbf16> to vector<256x4xbf16>
    %14 = tpu.concatenate %9, %11, %13 in 1 : vector<256x4xbf16>, vector<256x4xbf16>, vector<256x4xbf16> -> vector<256x12xbf16>
    %c0_14 = arith.constant 0 : index
    %c0_15 = arith.constant 0 : index
    %15 = vector.load %arg4[%c0_14, %c0_15] : memref<12x4xbf16, #tpu.memory_space<vmem>>, vector<12x4xbf16>
    %cst_16 = arith.constant dense<0.000000e+00> : vector<256x4xf32>
    %16 = tpu.matmul %14, %15, %cst_16 {dimension_numbers = #tpu.dot_dimension_numbers<[1], [0], [0], [1], [0, 0, 1, 1], [], []>} : vector<256x12xbf16>, vector<12x4xbf16>, vector<256x4xf32> -> vector<256x4xf32>
    %c0_17 = arith.constant 0 : index
    %c0_18 = arith.constant 0 : index
    %17 = vector.load %arg5[%c0_17, %c0_18] : memref<1x4xf32, #tpu.memory_space<vmem>>, vector<1x4xf32>
    %18 = vector.broadcast %17 : vector<1x4xf32> to vector<256x4xf32>
    %19 = arith.addf %16, %18 : vector<256x4xf32>
    %cst_19 = arith.constant 0.000000e+00 : f32
    %20 = vector.broadcast %cst_19 : f32 to vector<256x4xf32>
    %21 = arith.maximumf %19, %20 : vector<256x4xf32>
    %22 = arith.truncf %21 : vector<256x4xf32> to vector<256x4xbf16>
    %c0_20 = arith.constant 0 : index
    %c0_21 = arith.constant 0 : index
    %23 = vector.load %arg6[%c0_20, %c0_21] : memref<4x16xbf16, #tpu.memory_space<vmem>>, vector<4x16xbf16>
    %cst_22 = arith.constant dense<0.000000e+00> : vector<256x16xf32>
    %24 = tpu.matmul %22, %23, %cst_22 {dimension_numbers = #tpu.dot_dimension_numbers<[1], [0], [0], [1], [0, 0, 1, 1], [], []>} : vector<256x4xbf16>, vector<4x16xbf16>, vector<256x16xf32> -> vector<256x16xf32>
    %c0_23 = arith.constant 0 : index
    %c0_24 = arith.constant 0 : index
    %25 = vector.load %arg7[%c0_23, %c0_24] : memref<1x16xf32, #tpu.memory_space<vmem>>, vector<1x16xf32>
    %26 = vector.broadcast %25 : vector<1x16xf32> to vector<256x16xf32>
    %27 = arith.addf %24, %26 : vector<256x16xf32>
    %c0_25 = arith.constant 0 : index
    %c0_26 = arith.constant 0 : index
    %c0_27 = arith.constant 0 : index
    %c0_28 = arith.constant 0 : index
    %28 = vector.load %arg3[%c0_25, %c0_26, %c0_27, %c0_28] : memref<1x4x64x16xbf16, #tpu.memory_space<vmem>>, vector<1x4x64x16xbf16>
    %29 = vector.shape_cast %28 : vector<1x4x64x16xbf16> to vector<4x64x16xbf16>
    %30 = vector.shape_cast %29 : vector<4x64x16xbf16> to vector<256x16xbf16>
    %31 = arith.extf %30 : vector<256x16xbf16> to vector<256x16xf32>
    %32 = arith.addf %27, %31 : vector<256x16xf32>
    %cst_29 = arith.constant 0.000000e+00 : f32
    %33 = vector.broadcast %cst_29 : f32 to vector<256x16xf32>
    %34 = arith.maximumf %32, %33 : vector<256x16xf32>
    %35 = vector.shape_cast %34 : vector<256x16xf32> to vector<4x64x16xf32>
    %c0_30 = arith.constant 0 : index
    %c0_31 = arith.constant 0 : index
    %c0_32 = arith.constant 0 : index
    %c0_33 = arith.constant 0 : index
    %36 = vector.load %arg8[%c0_30, %c0_31, %c0_32, %c0_33] : memref<1x4x64x16xf32, #tpu.memory_space<vmem>>, vector<1x4x64x16xf32>
    %37 = vector.shape_cast %36 : vector<1x4x64x16xf32> to vector<4x64x16xf32>
    %38 = vector.shape_cast %35 : vector<4x64x16xf32> to vector<1x4x64x16xf32>
    tpu.vector_store %arg8[%c0_30, %c0_31, %c0_32, %c0_33], %38 {strides = array<i32>} : memref<1x4x64x16xf32, #tpu.memory_space<vmem>>, vector<1x4x64x16xf32>,
    return
  }
  func.func @transform_0(%arg0: i32, %arg1: i32) -> (i32, i32, i32, i32) {
    %c0_i32 = arith.constant 0 : i32
    %c0_i32_0 = arith.constant 0 : i32
    %c0_i32_1 = arith.constant 0 : i32
    return %arg0, %c0_i32, %arg1, %c0_i32_0 : i32, i32, i32, i32
  }
  func.func @transform_1(%arg0: i32, %arg1: i32) -> (i32, i32, i32, i32) {
    %c0_i32 = arith.constant 0 : i32
    %c0_i32_0 = arith.constant 0 : i32
    %c0_i32_1 = arith.constant 0 : i32
    return %arg0, %c0_i32, %arg1, %c0_i32_0 : i32, i32, i32, i32
  }
  func.func @transform_2(%arg0: i32, %arg1: i32) -> (i32, i32) {
    %c0_i32 = arith.constant 0 : i32
    %c0_i32_0 = arith.constant 0 : i32
    %c0_i32_1 = arith.constant 0 : i32
    return %c0_i32, %c0_i32_0 : i32, i32
  }
  func.func @transform_3(%arg0: i32, %arg1: i32) -> (i32, i32) {
    %c0_i32 = arith.constant 0 : i32
    %c0_i32_0 = arith.constant 0 : i32
    %c0_i32_1 = arith.constant 0 : i32
    return %c0_i32, %c0_i32_0 : i32, i32
  }
  func.func @transform_4(%arg0: i32, %arg1: i32) -> (i32, i32) {
    %c0_i32 = arith.constant 0 : i32
    %c0_i32_0 = arith.constant 0 : i32
    %c0_i32_1 = arith.constant 0 : i32
    return %c0_i32, %c0_i32_0 : i32, i32
  }
  func.func @transform_5(%arg0: i32, %arg1: i32) -> (i32, i32) {
    %c0_i32 = arith.constant 0 : i32
    %c0_i32_0 = arith.constant 0 : i32
    %c0_i32_1 = arith.constant 0 : i32
    return %c0_i32, %c0_i32_0 : i32, i32
  }
  func.func @transform_6(%arg0: i32, %arg1: i32) -> (i32, i32, i32, i32) {
    %c0_i32 = arith.constant 0 : i32
    %c0_i32_0 = arith.constant 0 : i32
    %c0_i32_1 = arith.constant 0 : i32
    return %arg0, %c0_i32, %arg1, %c0_i32_0 : i32, i32, i32, i32
  }
}

</mosaic_0001>

<llo_original>
// kernel: bottleneck_forward.3
$region0: #{bottleneck_forward.3}
  #allocation0 [shape = 'u32[]', space=smem, size = 0x4, offset = 0x4, fixed_abs, tag = 'smem constant byte address 0x4 - core index']
  #allocation1 [shape = 'u32[72,128]{1,0:T(1,128)}', space=vmem, size = 0x9000, scoped, tag = 'internal scratch']
  #allocation2 [shape = 'bf16[6,64,4]{2,1,0:T(8,128)(2,1)}', space=vmem, size = 0x18000, scoped, tag = 'scratch operand']
  %s0 = inlined_call_operand.vmem [shape: bf16[2,4,64,4], index: 0, kind: input, shape index: {}]
  %s1 = inlined_call_operand.vmem [shape: bf16[2,4,64,16], index: 1, kind: input, shape index: {}]
  %s2 = inlined_call_operand.vmem [shape: bf16[12,4], index: 2, kind: input, shape index: {}]
  %s3 = inlined_call_operand.vmem [shape: f32[1,4], index: 3, kind: input, shape index: {}]
  %s4 = inlined_call_operand.vmem [shape: bf16[4,16], index: 4, kind: input, shape index: {}]
  %s5 = inlined_call_operand.vmem [shape: f32[1,16], index: 5, kind: input, shape index: {}]
  %s6 = inlined_call_operand.hbm [shape: f32[2,4,64,16], index: 6, kind: output, shape index: {}]
  %s7 = sld [smem:[#allocation0]]
  $region57: #{bottleneck_forward.3} parent=0
    _
  %s9 = ssub.s32 1, %s7
  %s10 = scalar_select 0, %s9, %s7
  $region1: #{bottleneck_forward.3} parent=0
    #allocation3 [shape = 'u8[262144]{0}', space=vmem, size = 0x40000, scoped, tag = 'output window, operand 0']
    #allocation4 [shape = 's32[2]{0}', space=sflag, size = 0x8, scoped, tag = 'scoped memory for bottleneck_forward.3']
    %11 = vsyncpa [#allocation4], 0
    %s12 = scalar_lea.sflag [#allocation4], 1
    %13 = vsyncpa %s12, 0
    loop: start=0, step=1, limit=4
    $region2: #{bottleneck_forward.3} parent=1 // loop_pre_header
      _
    $region3: #{bottleneck_forward.3} parent=1 // loop_header
      %s15 = sphi 0, %s19
      %p16 = scmp.ge.s32.totalorder %s15, 4
      %s22 = sphi 0, %s34
      %s23 = sphi 0, %s30
      %s24 = sphi 0, %s22
      %s25 = sphi 0, %s23
      %s26 = sphi 0, %s24
      %s27 = sphi 0, %s25
      %s39 = sphi 0, %s41
      %s42 = sphi 0, %s39
      %s43 = sphi 0, %s42
      %s59 = sphi 0, %s43
      %s67 = sphi 0, %s69
      %s70 = sphi 0, %s67
      %s71 = sphi 0, %s70
      %s87 = sphi 0, %s71
      %s91 = sphi 0, %s91
      %s93 = sphi 0, %s91
      %s94 = sphi 0, %s93
      %s108 = sphi 0, %s94
      %s112 = sphi 0, %s112
      %s114 = sphi 0, %s112
      %s115 = sphi 0, %s114
      %s129 = sphi 0, %s115
      %s133 = sphi 0, %s133
      %s135 = sphi 0, %s133
      %s136 = sphi 0, %s135
      %s150 = sphi 0, %s136
      %s154 = sphi 0, %s154
      %s156 = sphi 0, %s154
      %s157 = sphi 0, %s156
      %s171 = sphi 0, %s157
      %s179 = sphi 0, %s181
      %s182 = sphi 0, %s179
      %s183 = sphi 0, %s182
      %s199 = sphi 0, %s183
    $region4: #{bottleneck_forward.3} parent=1 // loop_header_branch
      %18 = sbr.rel (%p16) target = $region8
    $region5: #{bottleneck_forward.3} parent=1 // loop_body
      %s20 = ssub.s32 %s15, 1
      %s21 = ssub.s32 %s15, 2
      %s28 = sadd.s32 1, %s23
      %p29 = scmp.ge.s32.totalorder %s28, 1
      %s30 = scalar_select %p29, 0, %s28
      %s31 = sadd.s32 1, %s22
      %s32 = scalar_select %p29, %s31, %s22
      %p33 = scmp.ge.s32.totalorder %s32, 2
      %s34 = scalar_select %p33, 0, %s32
      %s35 = ssub.s32 %s22, %s34
      %s36 = ssub.s32 %s23, %s30
      %s37 = sor.u32 %s35, %s36
      %p38 = scmp.eq.s32.totalorder %s37, 0
      %s40 = sadd.s32 %s39, 1
      %s41 = scalar_select %p38, %s39, %s40
      %p44 = pneg %p38
      %p45 = scmp.eq.s32.totalorder %s15, 1
      %p46 = por %p44, %p45
      %p47 = scmp.ne.s32.totalorder %s39, %s42
      %p48 = scmp.eq.s32.totalorder %s15, 0
      %p49 = por %p47, %p48
      %p50 = scmp.ne.s32.totalorder %s39, %s42
      %p51 = scmp.eq.s32.totalorder %s20, 1
      %p52 = por %p50, %p51
      %p53 = scmp.ne.s32.totalorder %s42, %s43
      %p54 = scmp.eq.s32.totalorder %s20, 0
      %p55 = por %p53, %p54
      %p56 = scmp.ne.s32.totalorder %s42, %s43
      %p57 = scmp.eq.s32.totalorder %s21, 1
      %p58 = por %p56, %p57
      %p60 = scmp.ne.s32.totalorder %s43, %s59
      %p61 = scmp.eq.s32.totalorder %s21, 0
      %p62 = por %p60, %p61
      %s63 = ssub.s32 %s22, %s34
      %s64 = ssub.s32 %s23, %s30
      %s65 = sor.u32 %s63, %s64
      %p66 = scmp.eq.s32.totalorder %s65, 0
      %s68 = sadd.s32 %s67, 1
      %s69 = scalar_select %p66, %s67, %s68
      %p72 = pneg %p66
      %p73 = scmp.eq.s32.totalorder %s15, 1
      %p74 = por %p72, %p73
      %p75 = scmp.ne.s32.totalorder %s67, %s70
      %p76 = scmp.eq.s32.totalorder %s15, 0
      %p77 = por %p75, %p76
      %p78 = scmp.ne.s32.totalorder %s67, %s70
      %p79 = scmp.eq.s32.totalorder %s20, 1
      %p80 = por %p78, %p79
      %p81 = scmp.ne.s32.totalorder %s70, %s71
      %p82 = scmp.eq.s32.totalorder %s20, 0
      %p83 = por %p81, %p82
      %p84 = scmp.ne.s32.totalorder %s70, %s71
      %p85 = scmp.eq.s32.totalorder %s21, 1
      %p86 = por %p84, %p85
      %p88 = scmp.ne.s32.totalorder %s71, %s87
      %p89 = scmp.eq.s32.totalorder %s21, 0
      %p90 = por %p88, %p89
      %s92 = sadd.s32 %s91, 1
      %p95 = scmp.eq.s32.totalorder %s15, 1
      %p96 = scmp.ne.s32.totalorder %s91, %s93
      %p97 = scmp.eq.s32.totalorder %s15, 0
      %p98 = por %p96, %p97
      %p99 = scmp.ne.s32.totalorder %s91, %s93
      %p100 = scmp.eq.s32.totalorder %s20, 1
      %p101 = por %p99, %p100
      %p102 = scmp.ne.s32.totalorder %s93, %s94
      %p103 = scmp.eq.s32.totalorder %s20, 0
      %p104 = por %p102, %p103
      %p105 = scmp.ne.s32.totalorder %s93, %s94
      %p106 = scmp.eq.s32.totalorder %s21, 1
      %p107 = por %p105, %p106
      %p109 = scmp.ne.s32.totalorder %s94, %s108
      %p110 = scmp.eq.s32.totalorder %s21, 0
      %p111 = por %p109, %p110
      %s113 = sadd.s32 %s112, 1
      %p116 = scmp.eq.s32.totalorder %s15, 1
      %p117 = scmp.ne.s32.totalorder %s112, %s114
      %p118 = scmp.eq.s32.totalorder %s15, 0
      %p119 = por %p117, %p118
      %p120 = scmp.ne.s32.totalorder %s112, %s114
      %p121 = scmp.eq.s32.totalorder %s20, 1
      %p122 = por %p120, %p121
      %p123 = scmp.ne.s32.totalorder %s114, %s115
      %p124 = scmp.eq.s32.totalorder %s20, 0
      %p125 = por %p123, %p124
      %p126 = scmp.ne.s32.totalorder %s114, %s115
      %p127 = scmp.eq.s32.totalorder %s21, 1
      %p128 = por %p126, %p127
      %p130 = scmp.ne.s32.totalorder %s115, %s129
      %p131 = scmp.eq.s32.totalorder %s21, 0
      %p132 = por %p130, %p131
      %s134 = sadd.s32 %s133, 1
      %p137 = scmp.eq.s32.totalorder %s15, 1
      %p138 = scmp.ne.s32.totalorder %s133, %s135
      %p139 = scmp.eq.s32.totalorder %s15, 0
      %p140 = por %p138, %p139
      %p141 = scmp.ne.s32.totalorder %s133, %s135
      %p142 = scmp.eq.s32.totalorder %s20, 1
      %p143 = por %p141, %p142
      %p144 = scmp.ne.s32.totalorder %s135, %s136
      %p145 = scmp.eq.s32.totalorder %s20, 0
      %p146 = por %p144, %p145
      %p147 = scmp.ne.s32.totalorder %s135, %s136
      %p148 = scmp.eq.s32.totalorder %s21, 1
      %p149 = por %p147, %p148
      %p151 = scmp.ne.s32.totalorder %s136, %s150
      %p152 = scmp.eq.s32.totalorder %s21, 0
      %p153 = por %p151, %p152
      %s155 = sadd.s32 %s154, 1
      %p158 = scmp.eq.s32.totalorder %s15, 1
      %p159 = scmp.ne.s32.totalorder %s154, %s156
      %p160 = scmp.eq.s32.totalorder %s15, 0
      %p161 = por %p159, %p160
      %p162 = scmp.ne.s32.totalorder %s154, %s156
      %p163 = scmp.eq.s32.totalorder %s20, 1
      %p164 = por %p162, %p163
      %p165 = scmp.ne.s32.totalorder %s156, %s157
      %p166 = scmp.eq.s32.totalorder %s20, 0
      %p167 = por %p165, %p166
      %p168 = scmp.ne.s32.totalorder %s156, %s157
      %p169 = scmp.eq.s32.totalorder %s21, 1
      %p170 = por %p168, %p169
      %p172 = scmp.ne.s32.totalorder %s157, %s171
      %p173 = scmp.eq.s32.totalorder %s21, 0
      %p174 = por %p172, %p173
      %s175 = ssub.s32 %s22, %s34
      %s176 = ssub.s32 %s23, %s30
      %s177 = sor.u32 %s175, %s176
      %p178 = scmp.eq.s32.totalorder %s177, 0
      %s180 = sadd.s32 %s179, 1
      %s181 = scalar_select %p178, %s179, %s180
      %p184 = pneg %p178
      %p185 = scmp.eq.s32.totalorder %s15, 1
      %p186 = por %p184, %p185
      %p187 = scmp.ne.s32.totalorder %s179, %s182
      %p188 = scmp.eq.s32.totalorder %s15, 0
      %p189 = por %p187, %p188
      %p190 = scmp.ne.s32.totalorder %s179, %s182
      %p191 = scmp.eq.s32.totalorder %s20, 1
      %p192 = por %p190, %p191
      %p193 = scmp.ne.s32.totalorder %s182, %s183
      %p194 = scmp.eq.s32.totalorder %s20, 0
      %p195 = por %p193, %p194
      %p196 = scmp.ne.s32.totalorder %s182, %s183
      %p197 = scmp.eq.s32.totalorder %s21, 1
      %p198 = por %p196, %p197
      %p200 = scmp.ne.s32.totalorder %s183, %s199
      %p201 = scmp.eq.s32.totalorder %s21, 0
      %p202 = por %p200, %p201
      %p203 = scmp.le.s32.totalorder 1, %s15
      %p204 = scmp.lt.s32.totalorder %s15, 3
      %p205 = pnand %p203, %p204
      %p206 = pneg %p205
      // Predicated region
      $region9: #{bottleneck_forward.3} parent=5 // pred_check
        _
      $region10: #{bottleneck_forward.3} parent=5 // pred_check_branch
        %208 = sbr.rel (%p205) target = $region12
      $region11: #{bottleneck_forward.3} parent=5 // pred_region
        %s209 = ssub.s32 %s15, 1
        // Predicated region
        $region13: #{bottleneck_forward.3} parent=11 // pred_check
          %p210 = pneg %p104
        $region14: #{bottleneck_forward.3} parent=11 // pred_check_branch
          %212 = sbr.rel (%p210) target = $region16
        $region15: #{bottleneck_forward.3} parent=11 // pred_region
          _
        $region16: #{bottleneck_forward.3} parent=11 // pred_fallthru
          _
        // Predicated region
        $region17: #{bottleneck_forward.3} parent=11 // pred_check
          %p213 = pneg %p125
        $region18: #{bottleneck_forward.3} parent=11 // pred_check_branch
          %215 = sbr.rel (%p213) target = $region20
        $region19: #{bottleneck_forward.3} parent=11 // pred_region
          _
        $region20: #{bottleneck_forward.3} parent=11 // pred_fallthru
          _
        // Predicated region
        $region21: #{bottleneck_forward.3} parent=11 // pred_check
          %p216 = pneg %p146
        $region22: #{bottleneck_forward.3} parent=11 // pred_check_branch
          %218 = sbr.rel (%p216) target = $region24
        $region23: #{bottleneck_forward.3} parent=11 // pred_region
          _
        $region24: #{bottleneck_forward.3} parent=11 // pred_fallthru
          _
        // Predicated region
        $region25: #{bottleneck_forward.3} parent=11 // pred_check
          %p219 = pneg %p167
        $region26: #{bottleneck_forward.3} parent=11 // pred_check_branch
          %221 = sbr.rel (%p219) target = $region28
        $region27: #{bottleneck_forward.3} parent=11 // pred_region
          _
        $region28: #{bottleneck_forward.3} parent=11 // pred_fallthru
          _
      $region12: #{bottleneck_forward.3} parent=5 // pred_fallthru
        _
      %p222 = scmp.lt.s32.totalorder %s15, 2
      // Predicated region
      $region29: #{bottleneck_forward.3} parent=5 // pred_check
        %p223 = pneg %p222
      $region30: #{bottleneck_forward.3} parent=5 // pred_check_branch
        %225 = sbr.rel (%p223) target = $region32
      $region31: #{bottleneck_forward.3} parent=5 // pred_region
        // Predicated region
        $region33: #{bottleneck_forward.3} parent=31 // pred_check
          %p226 = pneg %p49
        $region34: #{bottleneck_forward.3} parent=31 // pred_check_branch
          %228 = sbr.rel (%p226) target = $region36
        $region35: #{bottleneck_forward.3} parent=31 // pred_region
          %s229 = smul.u32 8, %s23
          %p230 = scmp.lt.s32.totalorder %s22, 1
          %s231 = scalar_select %p230, %s22, 1
          %p232 = scmp.lt.s32.totalorder %s229, 7
          %s233 = scalar_select %p232, %s229, 7
          %s234 = smul.addr %s231, 32
          %s235 = sadd.s32 %s233, %s234
          %s236 = smul.addr %s235, 4
          %s237 = scalar_lea.vmem %s0, %s236
          %s238 = smul.u32 8, %s23
        $region36: #{bottleneck_forward.3} parent=31 // pred_fallthru
          _
        // Predicated region
        $region37: #{bottleneck_forward.3} parent=31 // pred_check
          %p239 = pneg %p77
        $region38: #{bottleneck_forward.3} parent=31 // pred_check_branch
          %241 = sbr.rel (%p239) target = $region40
        $region39: #{bottleneck_forward.3} parent=31 // pred_region
          %s242 = smul.u32 8, %s23
          %p243 = scmp.lt.s32.totalorder %s22, 1
          %s244 = scalar_select %p243, %s22, 1
          %p245 = scmp.lt.s32.totalorder %s242, 7
          %s246 = scalar_select %p245, %s242, 7
          %s247 = smul.addr %s244, 32
          %s248 = sadd.s32 %s246, %s247
          %s249 = smul.addr %s248, 4
          %s250 = scalar_lea.vmem %s1, %s249
          %s251 = smul.u32 8, %s23
        $region40: #{bottleneck_forward.3} parent=31 // pred_fallthru
          _
      $region32: #{bottleneck_forward.3} parent=5 // pred_fallthru
        _
      %p252 = scmp.le.s32.totalorder 1, %s15
      %p253 = scmp.lt.s32.totalorder %s15, 3
      %p254 = pnand %p252, %p253
      %p255 = pneg %p254
      // Predicated region
      $region41: #{bottleneck_forward.3} parent=5 // pred_check
        _
      $region42: #{bottleneck_forward.3} parent=5 // pred_check_branch
        %257 = sbr.rel (%p254) target = $region44
      $region43: #{bottleneck_forward.3} parent=5 // pred_region
        %s258 = ssub.s32 %s15, 1
        %s259 = smul.u32 8, %s25
        %p260 = scmp.lt.s32.totalorder %s24, 1
        %s261 = scalar_select %p260, %s24, 1
        %p262 = scmp.lt.s32.totalorder %s259, 7
        %s263 = scalar_select %p262, %s259, 7
        %s264 = smul.addr %s261, 32
        %s265 = sadd.s32 %s263, %s264
        %s266 = smul.addr %s265, 4
        %s267 = scalar_lea.vmem %s0, %s266
        %p268 = pneg %p55
        %p269 = pneg %p52
        %s270 = smul.u32 8, %s25
        %p271 = scmp.lt.s32.totalorder %s24, 1
        %s272 = scalar_select %p271, %s24, 1
        %p273 = scmp.lt.s32.totalorder %s270, 7
        %s274 = scalar_select %p273, %s270, 7
        %s275 = smul.addr %s272, 32
        %s276 = sadd.s32 %s274, %s275
        %s277 = smul.addr %s276, 4
        %s278 = scalar_lea.vmem %s1, %s277
        %p279 = pneg %p83
        %p280 = pneg %p80
        %p281 = pneg %p104
        %p282 = pneg %p101
        %p283 = pneg %p125
        %p284 = pneg %p122
        %p285 = pneg %p146
        %p286 = pneg %p143
        %p287 = pneg %p167
        %p288 = pneg %p164
        %p289 = pneg %p195
        %p290 = pneg %p192
        %s291 = sand.u32 %s182, 1
        %s292 = scalar_lea.sflag [#allocation4], %s291
        %s293 = sand.u32 %s182, 1
        %s294 = smul.addr %s293, 256
        %s295 = scalar_lea.vmem [#allocation3], %s294
        %s296 = smul.u32 8, %s25
        %p297 = scmp.lt.s32.totalorder %s24, 1
        %s298 = scalar_select %p297, %s24, 1
        %p299 = scmp.lt.s32.totalorder %s296, 7
        %s300 = scalar_select %p299, %s296, 7
        %s301 = smul.addr %s298, 32
        %s302 = sadd.s32 %s300, %s301
        %s303 = smul.addr %s302, 4
        %s304 = scalar_lea.vmem %s0, %s303
        %s305 = smul.u32 8, %s25
        %s306 = smul.u32 8, %s25
        %p307 = scmp.lt.s32.totalorder %s24, 1
        %s308 = scalar_select %p307, %s24, 1
        %p309 = scmp.lt.s32.totalorder %s306, 7
        %s310 = scalar_select %p309, %s306, 7
        %s311 = smul.addr %s308, 32
        %s312 = sadd.s32 %s310, %s311
        %s313 = smul.addr %s312, 4
        %s314 = scalar_lea.vmem %s1, %s313
        %s315 = smul.u32 8, %s25
        %s316 = smul.u32 8, %s25
        %vm318 = vcmask 27648
        %319 = vst.msk [vmem:[#allocation2] sm:$0xf] %vm318, 0
        %320 = vst.msk [vmem:[#allocation2 + $0x4] sm:$0xf] %vm318, 0
        %321 = vst.msk [vmem:[#allocation2 + $0x8] sm:$0xf] %vm318, 0
        %322 = vst.msk [vmem:[#allocation2 + $0xc] sm:$0xf] %vm318, 0
        %323 = vst.msk [vmem:[#allocation2 + $0x10] sm:$0xf] %vm318, 0
        %324 = vst.msk [vmem:[#allocation2 + $0x14] sm:$0xf] %vm318, 0
        %325 = vst.msk [vmem:[#allocation2 + $0x18] sm:$0xf] %vm318, 0
        %326 = vst.msk [vmem:[#allocation2 + $0x1c] sm:$0xf] %vm318, 0
        %s327 = scalar_lea.vmem [#allocation2], 160
        %328 = vst.msk [vmem:[%s327] sm:$0xf] %vm318, 0
        %329 = vst.msk [vmem:[%s327 + $0x4] sm:$0xf] %vm318, 0
        %330 = vst.msk [vmem:[%s327 + $0x8] sm:$0xf] %vm318, 0
        %331 = vst.msk [vmem:[%s327 + $0xc] sm:$0xf] %vm318, 0
        %332 = vst.msk [vmem:[%s327 + $0x10] sm:$0xf] %vm318, 0
        %333 = vst.msk [vmem:[%s327 + $0x14] sm:$0xf] %vm318, 0
        %334 = vst.msk [vmem:[%s327 + $0x18] sm:$0xf] %vm318, 0
        %335 = vst.msk [vmem:[%s327 + $0x1c] sm:$0xf] %vm318, 0
        %v336 = vld [vmem:[%s304] sm:$0xf]
        %v337 = vld [vmem:[%s304 + $0x4] sm:$0xf]
        %v338 = vld [vmem:[%s304 + $0x8] sm:$0xf]
        %v339 = vld [vmem:[%s304 + $0xc] sm:$0xf]
        %v340 = vld [vmem:[%s304 + $0x10] sm:$0xf]
        %v341 = vld [vmem:[%s304 + $0x14] sm:$0xf]
        %v342 = vld [vmem:[%s304 + $0x18] sm:$0xf]
        %v343 = vld [vmem:[%s304 + $0x1c] sm:$0xf]
        %v344 = vld [vmem:[%s304 + $0x20] sm:$0xf]
        %v345 = vld [vmem:[%s304 + $0x24] sm:$0xf]
        %v346 = vld [vmem:[%s304 + $0x28] sm:$0xf]
        %v347 = vld [vmem:[%s304 + $0x2c] sm:$0xf]
        %v348 = vld [vmem:[%s304 + $0x30] sm:$0xf]
        %v349 = vld [vmem:[%s304 + $0x34] sm:$0xf]
        %v350 = vld [vmem:[%s304 + $0x38] sm:$0xf]
        %v351 = vld [vmem:[%s304 + $0x3c] sm:$0xf]
        %v352 = vld [vmem:[%s304 + $0x40] sm:$0xf]
        %v353 = vld [vmem:[%s304 + $0x44] sm:$0xf]
        %v354 = vld [vmem:[%s304 + $0x48] sm:$0xf]
        %v355 = vld [vmem:[%s304 + $0x4c] sm:$0xf]
        %v356 = vld [vmem:[%s304 + $0x50] sm:$0xf]
        %v357 = vld [vmem:[%s304 + $0x54] sm:$0xf]
        %v358 = vld [vmem:[%s304 + $0x58] sm:$0xf]
        %v359 = vld [vmem:[%s304 + $0x5c] sm:$0xf]
        %v360 = vld [vmem:[%s304 + $0x60] sm:$0xf]
        %v361 = vld [vmem:[%s304 + $0x64] sm:$0xf]
        %v362 = vld [vmem:[%s304 + $0x68] sm:$0xf]
        %v363 = vld [vmem:[%s304 + $0x6c] sm:$0xf]
        %v364 = vld [vmem:[%s304 + $0x70] sm:$0xf]
        %v365 = vld [vmem:[%s304 + $0x74] sm:$0xf]
        %v366 = vld [vmem:[%s304 + $0x78] sm:$0xf]
        %v367 = vld [vmem:[%s304 + $0x7c] sm:$0xf]
        %s368 = scalar_lea.vmem [#allocation2], 32
        %369 = vst.msk [vmem:[%s368] sm:$0xf] %vm318, %v336
        %370 = vst.msk [vmem:[%s368 + $0x4] sm:$0xf] %vm318, %v337
        %371 = vst.msk [vmem:[%s368 + $0x8] sm:$0xf] %vm318, %v338
        %372 = vst.msk [vmem:[%s368 + $0xc] sm:$0xf] %vm318, %v339
        %373 = vst.msk [vmem:[%s368 + $0x10] sm:$0xf] %vm318, %v340
        %374 = vst.msk [vmem:[%s368 + $0x14] sm:$0xf] %vm318, %v341
        %375 = vst.msk [vmem:[%s368 + $0x18] sm:$0xf] %vm318, %v342
        %376 = vst.msk [vmem:[%s368 + $0x1c] sm:$0xf] %vm318, %v343
        %377 = vst.msk [vmem:[%s368 + $0x20] sm:$0xf] %vm318, %v344
        %378 = vst.msk [vmem:[%s368 + $0x24] sm:$0xf] %vm318, %v345
        %379 = vst.msk [vmem:[%s368 + $0x28] sm:$0xf] %vm318, %v346
        %380 = vst.msk [vmem:[%s368 + $0x2c] sm:$0xf] %vm318, %v347
        %381 = vst.msk [vmem:[%s368 + $0x30] sm:$0xf] %vm318, %v348
        %382 = vst.msk [vmem:[%s368 + $0x34] sm:$0xf] %vm318, %v349
        %383 = vst.msk [vmem:[%s368 + $0x38] sm:$0xf] %vm318, %v350
        %384 = vst.msk [vmem:[%s368 + $0x3c] sm:$0xf] %vm318, %v351
        %385 = vst.msk [vmem:[%s368 + $0x40] sm:$0xf] %vm318, %v352
        %386 = vst.msk [vmem:[%s368 + $0x44] sm:$0xf] %vm318, %v353
        %387 = vst.msk [vmem:[%s368 + $0x48] sm:$0xf] %vm318, %v354
        %388 = vst.msk [vmem:[%s368 + $0x4c] sm:$0xf] %vm318, %v355
        %389 = vst.msk [vmem:[%s368 + $0x50] sm:$0xf] %vm318, %v356
        %390 = vst.msk [vmem:[%s368 + $0x54] sm:$0xf] %vm318, %v357
        %391 = vst.msk [vmem:[%s368 + $0x58] sm:$0xf] %vm318, %v358
        %392 = vst.msk [vmem:[%s368 + $0x5c] sm:$0xf] %vm318, %v359
        %393 = vst.msk [vmem:[%s368 + $0x60] sm:$0xf] %vm318, %v360
        %394 = vst.msk [vmem:[%s368 + $0x64] sm:$0xf] %vm318, %v361
        %395 = vst.msk [vmem:[%s368 + $0x68] sm:$0xf] %vm318, %v362
        %396 = vst.msk [vmem:[%s368 + $0x6c] sm:$0xf] %vm318, %v363
        %397 = vst.msk [vmem:[%s368 + $0x70] sm:$0xf] %vm318, %v364
        %398 = vst.msk [vmem:[%s368 + $0x74] sm:$0xf] %vm318, %v365
        %399 = vst.msk [vmem:[%s368 + $0x78] sm:$0xf] %vm318, %v366
        %400 = vst.msk [vmem:[%s368 + $0x7c] sm:$0xf] %vm318, %v367
        %v401 = vld [vmem:[#allocation2] sm:$0xf]
        %v402 = vld [vmem:[#allocation2 + $0x4] sm:$0xf]
        %v403 = vld [vmem:[#allocation2 + $0x8] sm:$0xf]
        %v404 = vld [vmem:[#allocation2 + $0xc] sm:$0xf]
        %v405 = vld [vmem:[#allocation2 + $0x10] sm:$0xf]
        %v406 = vld [vmem:[#allocation2 + $0x14] sm:$0xf]
        %v407 = vld [vmem:[#allocation2 + $0x18] sm:$0xf]
        %v408 = vld [vmem:[#allocation2 + $0x1c] sm:$0xf]
        %v409 = vld [vmem:[#allocation2 + $0x20] sm:$0xf]
        %v410 = vld [vmem:[#allocation2 + $0x24] sm:$0xf]
        %v411 = vld [vmem:[#allocation2 + $0x28] sm:$0xf]
        %v412 = vld [vmem:[#allocation2 + $0x2c] sm:$0xf]
        %v413 = vld [vmem:[#allocation2 + $0x30] sm:$0xf]
        %v414 = vld [vmem:[#allocation2 + $0x34] sm:$0xf]
        %v415 = vld [vmem:[#allocation2 + $0x38] sm:$0xf]
        %v416 = vld [vmem:[#allocation2 + $0x3c] sm:$0xf]
        %v417 = vld [vmem:[#allocation2 + $0x40] sm:$0xf]
        %v418 = vld [vmem:[#allocation2 + $0x44] sm:$0xf]
        %v419 = vld [vmem:[#allocation2 + $0x48] sm:$0xf]
        %v420 = vld [vmem:[#allocation2 + $0x4c] sm:$0xf]
        %v421 = vld [vmem:[#allocation2 + $0x50] sm:$0xf]
        %v422 = vld [vmem:[#allocation2 + $0x54] sm:$0xf]
        %v423 = vld [vmem:[#allocation2 + $0x58] sm:$0xf]
        %v424 = vld [vmem:[#allocation2 + $0x5c] sm:$0xf]
        %v425 = vld [vmem:[#allocation2 + $0x60] sm:$0xf]
        %v426 = vld [vmem:[#allocation2 + $0x64] sm:$0xf]
        %v427 = vld [vmem:[#allocation2 + $0x68] sm:$0xf]
        %v428 = vld [vmem:[#allocation2 + $0x6c] sm:$0xf]
        %v429 = vld [vmem:[#allocation2 + $0x70] sm:$0xf]
        %v430 = vld [vmem:[#allocation2 + $0x74] sm:$0xf]
        %v431 = vld [vmem:[#allocation2 + $0x78] sm:$0xf]
        %v432 = vld [vmem:[#allocation2 + $0x7c] sm:$0xf]
        %v433 = vld [vmem:[#allocation2 + $0x80] sm:$0xf]
        %v434 = vld [vmem:[#allocation2 + $0x84] sm:$0xf]
        %v435 = vld [vmem:[#allocation2 + $0x88] sm:$0xf]
        %v436 = vld [vmem:[#allocation2 + $0x8c] sm:$0xf]
        %v437 = vld [vmem:[#allocation2 + $0x90] sm:$0xf]
        %v438 = vld [vmem:[#allocation2 + $0x94] sm:$0xf]
        %v439 = vld [vmem:[#allocation2 + $0x98] sm:$0xf]
        %v440 = vld [vmem:[#allocation2 + $0x9c] sm:$0xf]
        %v441 = vld [vmem:[#allocation2 + $0xa0] sm:$0xf]
        %v442 = vld [vmem:[#allocation2 + $0xa4] sm:$0xf]
        %v443 = vld [vmem:[#allocation2 + $0xa8] sm:$0xf]
        %v444 = vld [vmem:[#allocation2 + $0xac] sm:$0xf]
        %v445 = vld [vmem:[#allocation2 + $0xb0] sm:$0xf]
        %v446 = vld [vmem:[#allocation2 + $0xb4] sm:$0xf]
        %v447 = vld [vmem:[#allocation2 + $0xb8] sm:$0xf]
        %v448 = vld [vmem:[#allocation2 + $0xbc] sm:$0xf]
        %v481 = vunpack.c.l.b16 %v401
        %v482 = vunpack.c.l.b16 %v402
        %v483 = vunpack.c.l.b16 %v403
        %v484 = vunpack.c.l.b16 %v404
        %v485 = vunpack.c.l.b16 %v405
        %v486 = vunpack.c.l.b16 %v406
        %v487 = vunpack.c.l.b16 %v407
        %v488 = vunpack.c.l.b16 %v408
        %v489 = vunpack.c.l.b16 %v409
        %v490 = vunpack.c.l.b16 %v410
        %v491 = vunpack.c.l.b16 %v411
        %v492 = vunpack.c.l.b16 %v412
        %v493 = vunpack.c.l.b16 %v413
        %v494 = vunpack.c.l.b16 %v414
        %v495 = vunpack.c.l.b16 %v415
        %v496 = vunpack.c.l.b16 %v416
        %v497 = vunpack.c.l.b16 %v417
        %v498 = vunpack.c.l.b16 %v418
        %v499 = vunpack.c.l.b16 %v419
        %v500 = vunpack.c.l.b16 %v420
        %v501 = vunpack.c.l.b16 %v421
        %v502 = vunpack.c.l.b16 %v422
        %v503 = vunpack.c.l.b16 %v423
        %v504 = vunpack.c.l.b16 %v424
        %v505 = vunpack.c.l.b16 %v425
        %v506 = vunpack.c.l.b16 %v426
        %v507 = vunpack.c.l.b16 %v427
        %v508 = vunpack.c.l.b16 %v428
        %v509 = vunpack.c.l.b16 %v429
        %v510 = vunpack.c.l.b16 %v430
        %v511 = vunpack.c.l.b16 %v431
        %v512 = vunpack.c.l.b16 %v432
        %v513 = vpack.c.b16 %v482, %v481
        %v514 = vpack.c.b16 %v484, %v483
        %v515 = vpack.c.b16 %v486, %v485
        %v516 = vpack.c.b16 %v488, %v487
        %v517 = vpack.c.b16 %v490, %v489
        %v518 = vpack.c.b16 %v492, %v491
        %v519 = vpack.c.b16 %v494, %v493
        %v520 = vpack.c.b16 %v496, %v495
        %v521 = vpack.c.b16 %v498, %v497
        %v522 = vpack.c.b16 %v500, %v499
        %v523 = vpack.c.b16 %v502, %v501
        %v524 = vpack.c.b16 %v504, %v503
        %v525 = vpack.c.b16 %v506, %v505
        %v526 = vpack.c.b16 %v508, %v507
        %v527 = vpack.c.b16 %v510, %v509
        %v528 = vpack.c.b16 %v512, %v511
        %v537 = vunpack.c.l.b16 %v433
        %v538 = vunpack.c.l.b16 %v434
        %v539 = vunpack.c.l.b16 %v435
        %v540 = vunpack.c.l.b16 %v436
        %v541 = vunpack.c.l.b16 %v437
        %v542 = vunpack.c.l.b16 %v438
        %v543 = vunpack.c.l.b16 %v439
        %v544 = vunpack.c.l.b16 %v440
        %v545 = vpack.c.b16 %v538, %v537
        %v546 = vpack.c.b16 %v540, %v539
        %v547 = vpack.c.b16 %v542, %v541
        %v548 = vpack.c.b16 %v544, %v543
        %549 = vrot.lane.b32.xlu0 %v517, 4
        %v550 = vpop.permute.xlu0 %549
        %551 = vrot.lane.b32.xlu0 %v518, 4
        %v552 = vpop.permute.xlu0 %551
        %553 = vrot.lane.b32.xlu0 %v519, 4
        %v554 = vpop.permute.xlu0 %553
        %555 = vrot.lane.b32.xlu0 %v520, 4
        %v556 = vpop.permute.xlu0 %555
        %557 = vrot.lane.b32.xlu0 %v521, 4
        %v558 = vpop.permute.xlu0 %557
        %559 = vrot.lane.b32.xlu0 %v522, 4
        %v560 = vpop.permute.xlu0 %559
        %561 = vrot.lane.b32.xlu0 %v523, 4
        %v562 = vpop.permute.xlu0 %561
        %563 = vrot.lane.b32.xlu0 %v524, 4
        %v564 = vpop.permute.xlu0 %563
        %565 = vrot.lane.b32.xlu0 %v525, 4
        %v566 = vpop.permute.xlu0 %565
        %567 = vrot.lane.b32.xlu0 %v526, 4
        %v568 = vpop.permute.xlu0 %567
        %569 = vrot.lane.b32.xlu0 %v527, 4
        %v570 = vpop.permute.xlu0 %569
        %571 = vrot.lane.b32.xlu0 %v528, 4
        %v572 = vpop.permute.xlu0 %571
        %573 = vrot.lane.b32.xlu0 %v545, 4
        %v574 = vpop.permute.xlu0 %573
        %575 = vrot.lane.b32.xlu0 %v546, 4
        %v576 = vpop.permute.xlu0 %575
        %577 = vrot.lane.b32.xlu0 %v547, 4
        %v578 = vpop.permute.xlu0 %577
        %579 = vrot.lane.b32.xlu0 %v548, 4
        %v580 = vpop.permute.xlu0 %579
        %v589 = vunpack.c.l.b16 %v441
        %v590 = vunpack.c.l.b16 %v442
        %v591 = vunpack.c.l.b16 %v443
        %v592 = vunpack.c.l.b16 %v444
        %v593 = vunpack.c.l.b16 %v445
        %v594 = vunpack.c.l.b16 %v446
        %v595 = vunpack.c.l.b16 %v447
        %v596 = vunpack.c.l.b16 %v448
        %v597 = vpack.c.b16 %v590, %v589
        %v598 = vpack.c.b16 %v592, %v591
        %v599 = vpack.c.b16 %v594, %v593
        %v600 = vpack.c.b16 %v596, %v595
        %601 = vrot.lane.b32.xlu0 %v521, 8
        %v602 = vpop.permute.xlu0 %601
        %603 = vrot.lane.b32.xlu0 %v522, 8
        %v604 = vpop.permute.xlu0 %603
        %605 = vrot.lane.b32.xlu0 %v523, 8
        %v606 = vpop.permute.xlu0 %605
        %607 = vrot.lane.b32.xlu0 %v524, 8
        %v608 = vpop.permute.xlu0 %607
        %609 = vrot.lane.b32.xlu0 %v525, 8
        %v610 = vpop.permute.xlu0 %609
        %611 = vrot.lane.b32.xlu0 %v526, 8
        %v612 = vpop.permute.xlu0 %611
        %613 = vrot.lane.b32.xlu0 %v527, 8
        %v614 = vpop.permute.xlu0 %613
        %615 = vrot.lane.b32.xlu0 %v528, 8
        %v616 = vpop.permute.xlu0 %615
        %617 = vrot.lane.b32.xlu0 %v545, 8
        %v618 = vpop.permute.xlu0 %617
        %619 = vrot.lane.b32.xlu0 %v546, 8
        %v620 = vpop.permute.xlu0 %619
        %621 = vrot.lane.b32.xlu0 %v547, 8
        %v622 = vpop.permute.xlu0 %621
        %623 = vrot.lane.b32.xlu0 %v548, 8
        %v624 = vpop.permute.xlu0 %623
        %625 = vrot.lane.b32.xlu0 %v597, 8
        %v626 = vpop.permute.xlu0 %625
        %627 = vrot.lane.b32.xlu0 %v598, 8
        %v628 = vpop.permute.xlu0 %627
        %629 = vrot.lane.b32.xlu0 %v599, 8
        %v630 = vpop.permute.xlu0 %629
        %631 = vrot.lane.b32.xlu0 %v600, 8
        %v632 = vpop.permute.xlu0 %631
        %vm633 = vcmask 31744
        %v636 = vsel %vm633, %v513, %v550
        %v639 = vsel %vm633, %v514, %v552
        %v642 = vsel %vm633, %v515, %v554
        %v645 = vsel %vm633, %v516, %v556
        %v648 = vsel %vm633, %v517, %v558
        %v651 = vsel %vm633, %v518, %v560
        %v654 = vsel %vm633, %v519, %v562
        %v657 = vsel %vm633, %v520, %v564
        %v660 = vsel %vm633, %v521, %v566
        %v663 = vsel %vm633, %v522, %v568
        %v666 = vsel %vm633, %v523, %v570
        %v669 = vsel %vm633, %v524, %v572
        %v672 = vsel %vm633, %v525, %v574
        %v675 = vsel %vm633, %v526, %v576
        %v678 = vsel %vm633, %v527, %v578
        %v681 = vsel %vm633, %v528, %v580
        %vm682 = vcmask 64512
        %v684 = vsel %vm682, %v636, %v602
        %v686 = vsel %vm682, %v639, %v604
        %v688 = vsel %vm682, %v642, %v606
        %v690 = vsel %vm682, %v645, %v608
        %v692 = vsel %vm682, %v648, %v610
        %v694 = vsel %vm682, %v651, %v612
        %v696 = vsel %vm682, %v654, %v614
        %v698 = vsel %vm682, %v657, %v616
        %v700 = vsel %vm682, %v660, %v618
        %v702 = vsel %vm682, %v663, %v620
        %v704 = vsel %vm682, %v666, %v622
        %v706 = vsel %vm682, %v669, %v624
        %v708 = vsel %vm682, %v672, %v626
        %v710 = vsel %vm682, %v675, %v628
        %v712 = vsel %vm682, %v678, %v630
        %v714 = vsel %vm682, %v681, %v632
        %v715 = vld [vmem:[%s2] sm:$0xf]
        %v716 = vld [vmem:[%s2 + $0x4] sm:$0x3]
        %v717 = vld [vmem:[%s3] sm:$0x1]
        %v719 = vperm.slane %v717, 0
        %v723 = vunpack.c.l.b16 %v715
        %v724 = vunpack.c.l.b16 %v716
        %v725 = vpack.c.b16 %v724, %v723
        %vm726 = vcmask 97280
        %v727 = vsel %vm726, %v684, 0
        %v729 = vsel %vm726, %v686, 0
        %v731 = vsel %vm726, %v688, 0
        %v733 = vsel %vm726, %v690, 0
        %v735 = vsel %vm726, %v692, 0
        %v737 = vsel %vm726, %v694, 0
        %v739 = vsel %vm726, %v696, 0
        %v741 = vsel %vm726, %v698, 0
        %v743 = vsel %vm726, %v700, 0
        %v745 = vsel %vm726, %v702, 0
        %v747 = vsel %vm726, %v704, 0
        %v749 = vsel %vm726, %v706, 0
        %v751 = vsel %vm726, %v708, 0
        %v753 = vsel %vm726, %v710, 0
        %v755 = vsel %vm726, %v712, 0
        %v757 = vsel %vm726, %v714, 0
        %vm759 = vcmask 1045504
        %v761 = vsel %vm759, %v725, 0
        %763 = vmatpush.bf16.msra.mxu0 0
        %764 = vmatpush.bf16.msra.mxu0 0
        %765 = vmatpush.bf16.msra.mxu0 0
        %766 = vmatpush.bf16.msra.mxu0 0
        %767 = vmatpush.bf16.msra.mxu0 0
        %768 = vmatpush.bf16.msra.mxu0 0
        %769 = vmatpush.bf16.msra.mxu0 0
        %770 = vmatpush.bf16.msra.mxu0 %v761
        %771 = vmatmul.bf16.gmra.mxu0 %v727
        %v772 = vpop.f32.mrf.mxu0
        %v773 = vadd.f32 %v719, %v772
        %v774 = vpop.f32.mrf.mxu0
        %v775 = vadd.f32 %v719, %v774
        %776 = vmatmul.bf16.gmra.mxu0 %v729
        %v777 = vpop.f32.mrf.mxu0
        %v778 = vadd.f32 %v719, %v777
        %v779 = vpop.f32.mrf.mxu0
        %v780 = vadd.f32 %v719, %v779
        %781 = vmatmul.bf16.gmra.mxu0 %v731
        %v782 = vpop.f32.mrf.mxu0
        %v783 = vadd.f32 %v719, %v782
        %v784 = vpop.f32.mrf.mxu0
        %v785 = vadd.f32 %v719, %v784
        %786 = vmatmul.bf16.gmra.mxu0 %v733
        %v787 = vpop.f32.mrf.mxu0
        %v788 = vadd.f32 %v719, %v787
        %v789 = vpop.f32.mrf.mxu0
        %v790 = vadd.f32 %v719, %v789
        %791 = vmatmul.bf16.gmra.mxu0 %v735
        %v792 = vpop.f32.mrf.mxu0
        %v793 = vadd.f32 %v719, %v792
        %v794 = vpop.f32.mrf.mxu0
        %v795 = vadd.f32 %v719, %v794
        %796 = vmatmul.bf16.gmra.mxu0 %v737
        %v797 = vpop.f32.mrf.mxu0
        %v798 = vadd.f32 %v719, %v797
        %v799 = vpop.f32.mrf.mxu0
        %v800 = vadd.f32 %v719, %v799
        %801 = vmatmul.bf16.gmra.mxu0 %v739
        %v802 = vpop.f32.mrf.mxu0
        %v803 = vadd.f32 %v719, %v802
        %v804 = vpop.f32.mrf.mxu0
        %v805 = vadd.f32 %v719, %v804
        %806 = vmatmul.bf16.gmra.mxu0 %v741
        %v807 = vpop.f32.mrf.mxu0
        %v808 = vadd.f32 %v719, %v807
        %v809 = vpop.f32.mrf.mxu0
        %v810 = vadd.f32 %v719, %v809
        %811 = vmatmul.bf16.gmra.mxu0 %v743
        %v812 = vpop.f32.mrf.mxu0
        %v813 = vadd.f32 %v719, %v812
        %v814 = vpop.f32.mrf.mxu0
        %v815 = vadd.f32 %v719, %v814
        %816 = vmatmul.bf16.gmra.mxu0 %v745
        %v817 = vpop.f32.mrf.mxu0
        %v818 = vadd.f32 %v719, %v817
        %v819 = vpop.f32.mrf.mxu0
        %v820 = vadd.f32 %v719, %v819
        %821 = vmatmul.bf16.gmra.mxu0 %v747
        %v822 = vpop.f32.mrf.mxu0
        %v823 = vadd.f32 %v719, %v822
        %v824 = vpop.f32.mrf.mxu0
        %v825 = vadd.f32 %v719, %v824
        %826 = vmatmul.bf16.gmra.mxu0 %v749
        %v827 = vpop.f32.mrf.mxu0
        %v828 = vadd.f32 %v719, %v827
        %v829 = vpop.f32.mrf.mxu0
        %v830 = vadd.f32 %v719, %v829
        %831 = vmatmul.bf16.gmra.mxu0 %v751
        %v832 = vpop.f32.mrf.mxu0
        %v833 = vadd.f32 %v719, %v832
        %v834 = vpop.f32.mrf.mxu0
        %v835 = vadd.f32 %v719, %v834
        %836 = vmatmul.bf16.gmra.mxu0 %v753
        %v837 = vpop.f32.mrf.mxu0
        %v838 = vadd.f32 %v719, %v837
        %v839 = vpop.f32.mrf.mxu0
        %v840 = vadd.f32 %v719, %v839
        %841 = vmatmul.bf16.gmra.mxu0 %v755
        %v842 = vpop.f32.mrf.mxu0
        %v843 = vadd.f32 %v719, %v842
        %v844 = vpop.f32.mrf.mxu0
        %v845 = vadd.f32 %v719, %v844
        %846 = vmatmul.bf16.gmra.mxu0 %v757
        %v847 = vpop.f32.mrf.mxu0
        %v848 = vadd.f32 %v719, %v847
        %v849 = vpop.f32.mrf.mxu0
        %v850 = vadd.f32 %v719, %v849
        %851 = vdwg.mxu0
        %v852 = vmax.f32 %v773, 0.0
        %v853 = vmax.f32 %v775, 0.0
        %v854 = vmax.f32 %v778, 0.0
        %v855 = vmax.f32 %v780, 0.0
        %v856 = vmax.f32 %v783, 0.0
        %v857 = vmax.f32 %v785, 0.0
        %v858 = vmax.f32 %v788, 0.0
        %v859 = vmax.f32 %v790, 0.0
        %v860 = vmax.f32 %v793, 0.0
        %v861 = vmax.f32 %v795, 0.0
        %v862 = vmax.f32 %v798, 0.0
        %v863 = vmax.f32 %v800, 0.0
        %v864 = vmax.f32 %v803, 0.0
        %v865 = vmax.f32 %v805, 0.0
        %v866 = vmax.f32 %v808, 0.0
        %v867 = vmax.f32 %v810, 0.0
        %v868 = vmax.f32 %v813, 0.0
        %v869 = vmax.f32 %v815, 0.0
        %v870 = vmax.f32 %v818, 0.0
        %v871 = vmax.f32 %v820, 0.0
        %v872 = vmax.f32 %v823, 0.0
        %v873 = vmax.f32 %v825, 0.0
        %v874 = vmax.f32 %v828, 0.0
        %v875 = vmax.f32 %v830, 0.0
        %v876 = vmax.f32 %v833, 0.0
        %v877 = vmax.f32 %v835, 0.0
        %v878 = vmax.f32 %v838, 0.0
        %v879 = vmax.f32 %v840, 0.0
        %v880 = vmax.f32 %v843, 0.0
        %v881 = vmax.f32 %v845, 0.0
        %v882 = vmax.f32 %v848, 0.0
        %v883 = vmax.f32 %v850, 0.0
        %v884 = vpack.c.bf16 %v853, %v852
        %v885 = vpack.c.bf16 %v855, %v854
        %v886 = vpack.c.bf16 %v857, %v856
        %v887 = vpack.c.bf16 %v859, %v858
        %v888 = vpack.c.bf16 %v861, %v860
        %v889 = vpack.c.bf16 %v863, %v862
        %v890 = vpack.c.bf16 %v865, %v864
        %v891 = vpack.c.bf16 %v867, %v866
        %v892 = vpack.c.bf16 %v869, %v868
        %v893 = vpack.c.bf16 %v871, %v870
        %v894 = vpack.c.bf16 %v873, %v872
        %v895 = vpack.c.bf16 %v875, %v874
        %v896 = vpack.c.bf16 %v877, %v876
        %v897 = vpack.c.bf16 %v879, %v878
        %v898 = vpack.c.bf16 %v881, %v880
        %v899 = vpack.c.bf16 %v883, %v882
        %v900 = vld [vmem:[%s4] sm:$0x3]
        %v901 = vld [vmem:[%s5] sm:$0x1]
        %v903 = vperm.slane %v901, 0
        %v906 = vsel %vm633, %v884, 0
        %v909 = vsel %vm633, %v885, 0
        %v912 = vsel %vm633, %v886, 0
        %v915 = vsel %vm633, %v887, 0
        %v918 = vsel %vm633, %v888, 0
        %v921 = vsel %vm633, %v889, 0
        %v924 = vsel %vm633, %v890, 0
        %v927 = vsel %vm633, %v891, 0
        %v930 = vsel %vm633, %v892, 0
        %v933 = vsel %vm633, %v893, 0
        %v936 = vsel %vm633, %v894, 0
        %v939 = vsel %vm633, %v895, 0
        %v942 = vsel %vm633, %v896, 0
        %v945 = vsel %vm633, %v897, 0
        %v948 = vsel %vm633, %v898, 0
        %v951 = vsel %vm633, %v899, 0
        %vm953 = vcmask 1041408
        %v955 = vsel %vm953, %v900, 0
        %957 = vmatpush.bf16.msra.mxu0 0
        %958 = vmatpush.bf16.msra.mxu0 0
        %959 = vmatpush.bf16.msra.mxu0 0
        %960 = vmatpush.bf16.msra.mxu0 0
        %961 = vmatpush.bf16.msra.mxu0 0
        %962 = vmatpush.bf16.msra.mxu0 0
        %963 = vmatpush.bf16.msra.mxu0 0
        %964 = vmatpush.bf16.msra.mxu0 %v955
        %965 = vmatmul.bf16.gmra.mxu0 %v906
        %v966 = vpop.f32.mrf.mxu0
        %v967 = vadd.f32 %v903, %v966
        %v968 = vpop.f32.mrf.mxu0
        %v969 = vadd.f32 %v903, %v968
        %970 = vmatmul.bf16.gmra.mxu0 %v909
        %v971 = vpop.f32.mrf.mxu0
        %v972 = vadd.f32 %v903, %v971
        %v973 = vpop.f32.mrf.mxu0
        %v974 = vadd.f32 %v903, %v973
        %975 = vmatmul.bf16.gmra.mxu0 %v912
        %v976 = vpop.f32.mrf.mxu0
        %v977 = vadd.f32 %v903, %v976
        %v978 = vpop.f32.mrf.mxu0
        %v979 = vadd.f32 %v903, %v978
        %980 = vmatmul.bf16.gmra.mxu0 %v915
        %v981 = vpop.f32.mrf.mxu0
        %v982 = vadd.f32 %v903, %v981
        %v983 = vpop.f32.mrf.mxu0
        %v984 = vadd.f32 %v903, %v983
        %985 = vmatmul.bf16.gmra.mxu0 %v918
        %v986 = vpop.f32.mrf.mxu0
        %v987 = vadd.f32 %v903, %v986
        %v988 = vpop.f32.mrf.mxu0
        %v989 = vadd.f32 %v903, %v988
        %990 = vmatmul.bf16.gmra.mxu0 %v921
        %v991 = vpop.f32.mrf.mxu0
        %v992 = vadd.f32 %v903, %v991
        %v993 = vpop.f32.mrf.mxu0
        %v994 = vadd.f32 %v903, %v993
        %995 = vmatmul.bf16.gmra.mxu0 %v924
        %v996 = vpop.f32.mrf.mxu0
        %v997 = vadd.f32 %v903, %v996
        %v998 = vpop.f32.mrf.mxu0
        %v999 = vadd.f32 %v903, %v998
        %1000 = vmatmul.bf16.gmra.mxu0 %v927
        %v1001 = vpop.f32.mrf.mxu0
        %v1002 = vadd.f32 %v903, %v1001
        %v1003 = vpop.f32.mrf.mxu0
        %v1004 = vadd.f32 %v903, %v1003
        %1005 = vmatmul.bf16.gmra.mxu0 %v930
        %v1006 = vpop.f32.mrf.mxu0
        %v1007 = vadd.f32 %v903, %v1006
        %v1008 = vpop.f32.mrf.mxu0
        %v1009 = vadd.f32 %v903, %v1008
        %1010 = vmatmul.bf16.gmra.mxu0 %v933
        %v1011 = vpop.f32.mrf.mxu0
        %v1012 = vadd.f32 %v903, %v1011
        %v1013 = vpop.f32.mrf.mxu0
        %v1014 = vadd.f32 %v903, %v1013
        %1015 = vmatmul.bf16.gmra.mxu0 %v936
        %v1016 = vpop.f32.mrf.mxu0
        %v1017 = vadd.f32 %v903, %v1016
        %v1018 = vpop.f32.mrf.mxu0
        %v1019 = vadd.f32 %v903, %v1018
        %1020 = vmatmul.bf16.gmra.mxu0 %v939
        %v1021 = vpop.f32.mrf.mxu0
        %v1022 = vadd.f32 %v903, %v1021
        %v1023 = vpop.f32.mrf.mxu0
        %v1024 = vadd.f32 %v903, %v1023
        %1025 = vmatmul.bf16.gmra.mxu0 %v942
        %v1026 = vpop.f32.mrf.mxu0
        %v1027 = vadd.f32 %v903, %v1026
        %v1028 = vpop.f32.mrf.mxu0
        %v1029 = vadd.f32 %v903, %v1028
        %1030 = vmatmul.bf16.gmra.mxu0 %v945
        %v1031 = vpop.f32.mrf.mxu0
        %v1032 = vadd.f32 %v903, %v1031
        %v1033 = vpop.f32.mrf.mxu0
        %v1034 = vadd.f32 %v903, %v1033
        %1035 = vmatmul.bf16.gmra.mxu0 %v948
        %v1036 = vpop.f32.mrf.mxu0
        %v1037 = vadd.f32 %v903, %v1036
        %v1038 = vpop.f32.mrf.mxu0
        %v1039 = vadd.f32 %v903, %v1038
        %1040 = vmatmul.bf16.gmra.mxu0 %v951
        %v1041 = vpop.f32.mrf.mxu0
        %v1042 = vadd.f32 %v903, %v1041
        %v1043 = vpop.f32.mrf.mxu0
        %v1044 = vadd.f32 %v903, %v1043
        %1045 = vdwg.mxu0
        %v1046 = vld [vmem:[%s314] sm:$0xf]
        %v1047 = vld [vmem:[%s314 + $0x4] sm:$0xf]
        %v1048 = vld [vmem:[%s314 + $0x8] sm:$0xf]
        %v1049 = vld [vmem:[%s314 + $0xc] sm:$0xf]
        %v1050 = vld [vmem:[%s314 + $0x10] sm:$0xf]
        %v1051 = vld [vmem:[%s314 + $0x14] sm:$0xf]
        %v1052 = vld [vmem:[%s314 + $0x18] sm:$0xf]
        %v1053 = vld [vmem:[%s314 + $0x1c] sm:$0xf]
        %v1054 = vld [vmem:[%s314 + $0x20] sm:$0xf]
        %v1055 = vld [vmem:[%s314 + $0x24] sm:$0xf]
        %v1056 = vld [vmem:[%s314 + $0x28] sm:$0xf]
        %v1057 = vld [vmem:[%s314 + $0x2c] sm:$0xf]
        %v1058 = vld [vmem:[%s314 + $0x30] sm:$0xf]
        %v1059 = vld [vmem:[%s314 + $0x34] sm:$0xf]
        %v1060 = vld [vmem:[%s314 + $0x38] sm:$0xf]
        %v1061 = vld [vmem:[%s314 + $0x3c] sm:$0xf]
        %v1062 = vld [vmem:[%s314 + $0x40] sm:$0xf]
        %v1063 = vld [vmem:[%s314 + $0x44] sm:$0xf]
        %v1064 = vld [vmem:[%s314 + $0x48] sm:$0xf]
        %v1065 = vld [vmem:[%s314 + $0x4c] sm:$0xf]
        %v1066 = vld [vmem:[%s314 + $0x50] sm:$0xf]
        %v1067 = vld [vmem:[%s314 + $0x54] sm:$0xf]
        %v1068 = vld [vmem:[%s314 + $0x58] sm:$0xf]
        %v1069 = vld [vmem:[%s314 + $0x5c] sm:$0xf]
        %v1070 = vld [vmem:[%s314 + $0x60] sm:$0xf]
        %v1071 = vld [vmem:[%s314 + $0x64] sm:$0xf]
        %v1072 = vld [vmem:[%s314 + $0x68] sm:$0xf]
        %v1073 = vld [vmem:[%s314 + $0x6c] sm:$0xf]
        %v1074 = vld [vmem:[%s314 + $0x70] sm:$0xf]
        %v1075 = vld [vmem:[%s314 + $0x74] sm:$0xf]
        %v1076 = vld [vmem:[%s314 + $0x78] sm:$0xf]
        %v1077 = vld [vmem:[%s314 + $0x7c] sm:$0xf]
        %v1078 = vunpack.c.l.bf16 %v1046
        %v1079 = vunpack.c.l.bf16 %v1047
        %v1080 = vunpack.c.l.bf16 %v1048
        %v1081 = vunpack.c.l.bf16 %v1049
        %v1082 = vunpack.c.l.bf16 %v1050
        %v1083 = vunpack.c.l.bf16 %v1051
        %v1084 = vunpack.c.l.bf16 %v1052
        %v1085 = vunpack.c.l.bf16 %v1053
        %v1086 = vunpack.c.l.bf16 %v1054
        %v1087 = vunpack.c.l.bf16 %v1055
        %v1088 = vunpack.c.l.bf16 %v1056
        %v1089 = vunpack.c.l.bf16 %v1057
        %v1090 = vunpack.c.l.bf16 %v1058
        %v1091 = vunpack.c.l.bf16 %v1059
        %v1092 = vunpack.c.l.bf16 %v1060
        %v1093 = vunpack.c.l.bf16 %v1061
        %v1094 = vunpack.c.l.bf16 %v1062
        %v1095 = vunpack.c.l.bf16 %v1063
        %v1096 = vunpack.c.l.bf16 %v1064
        %v1097 = vunpack.c.l.bf16 %v1065
        %v1098 = vunpack.c.l.bf16 %v1066
        %v1099 = vunpack.c.l.bf16 %v1067
        %v1100 = vunpack.c.l.bf16 %v1068
        %v1101 = vunpack.c.l.bf16 %v1069
        %v1102 = vunpack.c.l.bf16 %v1070
        %v1103 = vunpack.c.l.bf16 %v1071
        %v1104 = vunpack.c.l.bf16 %v1072
        %v1105 = vunpack.c.l.bf16 %v1073
        %v1106 = vunpack.c.l.bf16 %v1074
        %v1107 = vunpack.c.l.bf16 %v1075
        %v1108 = vunpack.c.l.bf16 %v1076
        %v1109 = vunpack.c.l.bf16 %v1077
        %v1110 = vadd.f32 %v967, %v1078
        %v1111 = vadd.f32 %v969, %v1079
        %v1112 = vadd.f32 %v972, %v1080
        %v1113 = vadd.f32 %v974, %v1081
        %v1114 = vadd.f32 %v977, %v1082
        %v1115 = vadd.f32 %v979, %v1083
        %v1116 = vadd.f32 %v982, %v1084
        %v1117 = vadd.f32 %v984, %v1085
        %v1118 = vadd.f32 %v987, %v1086
        %v1119 = vadd.f32 %v989, %v1087
        %v1120 = vadd.f32 %v992, %v1088
        %v1121 = vadd.f32 %v994, %v1089
        %v1122 = vadd.f32 %v997, %v1090
        %v1123 = vadd.f32 %v999, %v1091
        %v1124 = vadd.f32 %v1002, %v1092
        %v1125 = vadd.f32 %v1004, %v1093
        %v1126 = vadd.f32 %v1007, %v1094
        %v1127 = vadd.f32 %v1009, %v1095
        %v1128 = vadd.f32 %v1012, %v1096
        %v1129 = vadd.f32 %v1014, %v1097
        %v1130 = vadd.f32 %v1017, %v1098
        %v1131 = vadd.f32 %v1019, %v1099
        %v1132 = vadd.f32 %v1022, %v1100
        %v1133 = vadd.f32 %v1024, %v1101
        %v1134 = vadd.f32 %v1027, %v1102
        %v1135 = vadd.f32 %v1029, %v1103
        %v1136 = vadd.f32 %v1032, %v1104
        %v1137 = vadd.f32 %v1034, %v1105
        %v1138 = vadd.f32 %v1037, %v1106
        %v1139 = vadd.f32 %v1039, %v1107
        %v1140 = vadd.f32 %v1042, %v1108
        %v1141 = vadd.f32 %v1044, %v1109
        %v1142 = vmax.f32 %v1110, 0.0
        %v1143 = vmax.f32 %v1111, 0.0
        %v1144 = vmax.f32 %v1112, 0.0
        %v1145 = vmax.f32 %v1113, 0.0
        %v1146 = vmax.f32 %v1114, 0.0
        %v1147 = vmax.f32 %v1115, 0.0
        %v1148 = vmax.f32 %v1116, 0.0
        %v1149 = vmax.f32 %v1117, 0.0
        %v1150 = vmax.f32 %v1118, 0.0
        %v1151 = vmax.f32 %v1119, 0.0
        %v1152 = vmax.f32 %v1120, 0.0
        %v1153 = vmax.f32 %v1121, 0.0
        %v1154 = vmax.f32 %v1122, 0.0
        %v1155 = vmax.f32 %v1123, 0.0
        %v1156 = vmax.f32 %v1124, 0.0
        %v1157 = vmax.f32 %v1125, 0.0
        %v1158 = vmax.f32 %v1126, 0.0
        %v1159 = vmax.f32 %v1127, 0.0
        %v1160 = vmax.f32 %v1128, 0.0
        %v1161 = vmax.f32 %v1129, 0.0
        %v1162 = vmax.f32 %v1130, 0.0
        %v1163 = vmax.f32 %v1131, 0.0
        %v1164 = vmax.f32 %v1132, 0.0
        %v1165 = vmax.f32 %v1133, 0.0
        %v1166 = vmax.f32 %v1134, 0.0
        %v1167 = vmax.f32 %v1135, 0.0
        %v1168 = vmax.f32 %v1136, 0.0
        %v1169 = vmax.f32 %v1137, 0.0
        %v1170 = vmax.f32 %v1138, 0.0
        %v1171 = vmax.f32 %v1139, 0.0
        %v1172 = vmax.f32 %v1140, 0.0
        %v1173 = vmax.f32 %v1141, 0.0
        %vm1174 = vcmask 130048
        %1175 = vst.msk [vmem:[%s295] sm:$0xff] %vm1174, %v1142
        %1176 = vst.msk [vmem:[%s295 + $0x8] sm:$0xff] %vm1174, %v1143
        %1177 = vst.msk [vmem:[%s295 + $0x10] sm:$0xff] %vm1174, %v1144
        %1178 = vst.msk [vmem:[%s295 + $0x18] sm:$0xff] %vm1174, %v1145
        %1179 = vst.msk [vmem:[%s295 + $0x20] sm:$0xff] %vm1174, %v1146
        %1180 = vst.msk [vmem:[%s295 + $0x28] sm:$0xff] %vm1174, %v1147
        %1181 = vst.msk [vmem:[%s295 + $0x30] sm:$0xff] %vm1174, %v1148
        %1182 = vst.msk [vmem:[%s295 + $0x38] sm:$0xff] %vm1174, %v1149
        %1183 = vst.msk [vmem:[%s295 + $0x40] sm:$0xff] %vm1174, %v1150
        %1184 = vst.msk [vmem:[%s295 + $0x48] sm:$0xff] %vm1174, %v1151
        %1185 = vst.msk [vmem:[%s295 + $0x50] sm:$0xff] %vm1174, %v1152
        %1186 = vst.msk [vmem:[%s295 + $0x58] sm:$0xff] %vm1174, %v1153
        %1187 = vst.msk [vmem:[%s295 + $0x60] sm:$0xff] %vm1174, %v1154
        %1188 = vst.msk [vmem:[%s295 + $0x68] sm:$0xff] %vm1174, %v1155
        %1189 = vst.msk [vmem:[%s295 + $0x70] sm:$0xff] %vm1174, %v1156
        %1190 = vst.msk [vmem:[%s295 + $0x78] sm:$0xff] %vm1174, %v1157
        %1191 = vst.msk [vmem:[%s295 + $0x80] sm:$0xff] %vm1174, %v1158
        %1192 = vst.msk [vmem:[%s295 + $0x88] sm:$0xff] %vm1174, %v1159
        %1193 = vst.msk [vmem:[%s295 + $0x90] sm:$0xff] %vm1174, %v1160
        %1194 = vst.msk [vmem:[%s295 + $0x98] sm:$0xff] %vm1174, %v1161
        %1195 = vst.msk [vmem:[%s295 + $0xa0] sm:$0xff] %vm1174, %v1162
        %1196 = vst.msk [vmem:[%s295 + $0xa8] sm:$0xff] %vm1174, %v1163
        %1197 = vst.msk [vmem:[%s295 + $0xb0] sm:$0xff] %vm1174, %v1164
        %1198 = vst.msk [vmem:[%s295 + $0xb8] sm:$0xff] %vm1174, %v1165
        %1199 = vst.msk [vmem:[%s295 + $0xc0] sm:$0xff] %vm1174, %v1166
        %1200 = vst.msk [vmem:[%s295 + $0xc8] sm:$0xff] %vm1174, %v1167
        %1201 = vst.msk [vmem:[%s295 + $0xd0] sm:$0xff] %vm1174, %v1168
        %1202 = vst.msk [vmem:[%s295 + $0xd8] sm:$0xff] %vm1174, %v1169
        %1203 = vst.msk [vmem:[%s295 + $0xe0] sm:$0xff] %vm1174, %v1170
        %1204 = vst.msk [vmem:[%s295 + $0xe8] sm:$0xff] %vm1174, %v1171
        %1205 = vst.msk [vmem:[%s295 + $0xf0] sm:$0xff] %vm1174, %v1172
        %1206 = vst.msk [vmem:[%s295 + $0xf8] sm:$0xff] %vm1174, %v1173
        %s1207 = sand.u32 %s182, 1
        %s1208 = scalar_lea.sflag [#allocation4], %s1207
        %s1209 = sand.u32 %s182, 1
        %s1210 = smul.addr %s1209, 256
        %s1211 = scalar_lea.vmem [#allocation3], %s1210
        // Predicated region
        $region45: #{bottleneck_forward.3} parent=43 // pred_check
          %p1212 = pneg %p192
        $region46: #{bottleneck_forward.3} parent=43 // pred_check_branch
          %1214 = sbr.rel (%p1212) target = $region48
        $region47: #{bottleneck_forward.3} parent=43 // pred_region
          %s1215 = smul.u32 8, %s25
          %1217 = vsyncadd %s1208, 0
          %s1218 = smul.addr %s24, 32
          %s1219 = sadd.s32 %s1215, %s1218
          %s1220 = smul.addr %s1219, 8
          %s1221 = scalar_lea.hbm %s6, %s1220
          %s1222 = sshll.u32 %s1211, 4
          %s1223 = int_to_ptr.vmem [resolvable:$true] %s1222
          %s1224 = sshll.u32 %s1221, 4
          %s1225 = int_to_ptr.hbm [resolvable:$true] %s1224
          %1230 = dma.vmem_to_hbm [thread:$0]  %s1223, 4096, %s1225, %s1208, 128, 128, 8
        $region48: #{bottleneck_forward.3} parent=43 // pred_fallthru
          _
      $region44: #{bottleneck_forward.3} parent=5 // pred_fallthru
        _
      %p1231 = scmp.le.s32.totalorder 2, %s15
      // Predicated region
      $region49: #{bottleneck_forward.3} parent=5 // pred_check
        %p1232 = pneg %p1231
      $region50: #{bottleneck_forward.3} parent=5 // pred_check_branch
        %1234 = sbr.rel (%p1232) target = $region52
      $region51: #{bottleneck_forward.3} parent=5 // pred_region
        %s1235 = ssub.s32 %s15, 2
        // Predicated region
        $region53: #{bottleneck_forward.3} parent=51 // pred_check
          %p1236 = pneg %p198
        $region54: #{bottleneck_forward.3} parent=51 // pred_check_branch
          %1238 = sbr.rel (%p1236) target = $region56
        $region55: #{bottleneck_forward.3} parent=51 // pred_region
          %s1239 = sand.u32 %s183, 1
          %s1240 = scalar_lea.sflag [#allocation4], %s1239
          %s1241 = sand.u32 %s183, 1
          %s1242 = smul.addr %s1241, 256
          %s1243 = scalar_lea.vmem [#allocation3], %s1242
          %1245 = dma.done %s1240, 4096
        $region56: #{bottleneck_forward.3} parent=51 // pred_fallthru
          _
      $region52: #{bottleneck_forward.3} parent=5 // pred_fallthru
        _
    $region6: #{bottleneck_forward.3} parent=1 // loop_footer
      %s19 = sadd.s32 1, %s15
    $region7: #{bottleneck_forward.3} parent=1 // loop_footer_branch
      %14 = sbr.rel target = $region3
    $region8: #{bottleneck_forward.3} parent=1 // loop_exit
      _
    %1246 = vsyncpa [#allocation4], 1
    %s1247 = scalar_lea.sflag [#allocation4], 1
    %1248 = vsyncpa %s1247, 1

// kernel: bottleneck_forward.2
$region0: #{bottleneck_forward.2}
  #allocation0 [shape = 'u32[]', space=smem, size = 0x4, offset = 0x4, fixed_abs, tag = 'smem constant byte address 0x4 - core index']
  #allocation1 [shape = 'u32[72,128]{1,0:T(1,128)}', space=vmem, size = 0x9000, scoped, tag = 'internal scratch']
  #allocation2 [shape = 'bf16[4,10,8,4]{3,2,1,0:T(8,128)(2,1)}', space=vmem, size = 0x14000, scoped, tag = 'scratch operand']
  %s0 = inlined_call_operand.vmem [shape: bf16[8,8,8,16], index: 0, kind: input, shape index: {}]
  %s1 = inlined_call_operand.vmem [shape: bf16[16,4], index: 1, kind: input, shape index: {}]
  %s2 = inlined_call_operand.vmem [shape: f32[1,4], index: 2, kind: input, shape index: {}]
  %s3 = inlined_call_operand.vmem [shape: bf16[36,4], index: 3, kind: input, shape index: {}]
  %s4 = inlined_call_operand.vmem [shape: f32[1,4], index: 4, kind: input, shape index: {}]
  %s5 = inlined_call_operand.vmem [shape: bf16[8,8,8,4], index: 5, kind: output, shape index: {}]
  %s6 = sld [smem:[#allocation0]]
  $region53: #{bottleneck_forward.2} parent=0
    _
  %s8 = ssub.s32 1, %s6
  %s9 = scalar_select 0, %s8, %s6
  loop: start=0, step=1, limit=4
  $region2: #{bottleneck_forward.2} parent=0 // loop_pre_header
    _
  $region3: #{bottleneck_forward.2} parent=0 // loop_header
    %s11 = sphi 0, %s15
    %p12 = scmp.ge.s32.totalorder %s11, 4
    %s21 = sphi 0, %s23
    %s24 = sphi 0, %s21
    %s25 = sphi 0, %s24
    %s41 = sphi 0, %s25
    %s45 = sphi 0, %s45
    %s47 = sphi 0, %s45
    %s48 = sphi 0, %s47
    %s62 = sphi 0, %s48
    %s66 = sphi 0, %s66
    %s68 = sphi 0, %s66
    %s69 = sphi 0, %s68
    %s83 = sphi 0, %s69
    %s87 = sphi 0, %s87
    %s89 = sphi 0, %s87
    %s90 = sphi 0, %s89
    %s104 = sphi 0, %s90
    %s108 = sphi 0, %s108
    %s110 = sphi 0, %s108
    %s111 = sphi 0, %s110
    %s125 = sphi 0, %s111
    %s131 = sphi 0, %s133
    %s134 = sphi 0, %s131
    %s135 = sphi 0, %s134
    %s151 = sphi 0, %s135
  $region4: #{bottleneck_forward.2} parent=0 // loop_header_branch
    %14 = sbr.rel (%p12) target = $region8
  $region5: #{bottleneck_forward.2} parent=0 // loop_body
    %s16 = ssub.s32 %s11, 1
    %s17 = ssub.s32 %s11, 2
    %s18 = sadd.s32 %s11, 1
    %s19 = ssub.s32 %s11, %s18
    %p20 = scmp.eq.s32.totalorder %s19, 0
    %s22 = sadd.s32 %s21, 1
    %s23 = scalar_select %p20, %s21, %s22
    %p26 = pneg %p20
    %p27 = scmp.eq.s32.totalorder %s11, 1
    %p28 = por %p26, %p27
    %p29 = scmp.ne.s32.totalorder %s21, %s24
    %p30 = scmp.eq.s32.totalorder %s11, 0
    %p31 = por %p29, %p30
    %p32 = scmp.ne.s32.totalorder %s21, %s24
    %p33 = scmp.eq.s32.totalorder %s16, 1
    %p34 = por %p32, %p33
    %p35 = scmp.ne.s32.totalorder %s24, %s25
    %p36 = scmp.eq.s32.totalorder %s16, 0
    %p37 = por %p35, %p36
    %p38 = scmp.ne.s32.totalorder %s24, %s25
    %p39 = scmp.eq.s32.totalorder %s17, 1
    %p40 = por %p38, %p39
    %p42 = scmp.ne.s32.totalorder %s25, %s41
    %p43 = scmp.eq.s32.totalorder %s17, 0
    %p44 = por %p42, %p43
    %s46 = sadd.s32 %s45, 1
    %p49 = scmp.eq.s32.totalorder %s11, 1
    %p50 = scmp.ne.s32.totalorder %s45, %s47
    %p51 = scmp.eq.s32.totalorder %s11, 0
    %p52 = por %p50, %p51
    %p53 = scmp.ne.s32.totalorder %s45, %s47
    %p54 = scmp.eq.s32.totalorder %s16, 1
    %p55 = por %p53, %p54
    %p56 = scmp.ne.s32.totalorder %s47, %s48
    %p57 = scmp.eq.s32.totalorder %s16, 0
    %p58 = por %p56, %p57
    %p59 = scmp.ne.s32.totalorder %s47, %s48
    %p60 = scmp.eq.s32.totalorder %s17, 1
    %p61 = por %p59, %p60
    %p63 = scmp.ne.s32.totalorder %s48, %s62
    %p64 = scmp.eq.s32.totalorder %s17, 0
    %p65 = por %p63, %p64
    %s67 = sadd.s32 %s66, 1
    %p70 = scmp.eq.s32.totalorder %s11, 1
    %p71 = scmp.ne.s32.totalorder %s66, %s68
    %p72 = scmp.eq.s32.totalorder %s11, 0
    %p73 = por %p71, %p72
    %p74 = scmp.ne.s32.totalorder %s66, %s68
    %p75 = scmp.eq.s32.totalorder %s16, 1
    %p76 = por %p74, %p75
    %p77 = scmp.ne.s32.totalorder %s68, %s69
    %p78 = scmp.eq.s32.totalorder %s16, 0
    %p79 = por %p77, %p78
    %p80 = scmp.ne.s32.totalorder %s68, %s69
    %p81 = scmp.eq.s32.totalorder %s17, 1
    %p82 = por %p80, %p81
    %p84 = scmp.ne.s32.totalorder %s69, %s83
    %p85 = scmp.eq.s32.totalorder %s17, 0
    %p86 = por %p84, %p85
    %s88 = sadd.s32 %s87, 1
    %p91 = scmp.eq.s32.totalorder %s11, 1
    %p92 = scmp.ne.s32.totalorder %s87, %s89
    %p93 = scmp.eq.s32.totalorder %s11, 0
    %p94 = por %p92, %p93
    %p95 = scmp.ne.s32.totalorder %s87, %s89
    %p96 = scmp.eq.s32.totalorder %s16, 1
    %p97 = por %p95, %p96
    %p98 = scmp.ne.s32.totalorder %s89, %s90
    %p99 = scmp.eq.s32.totalorder %s16, 0
    %p100 = por %p98, %p99
    %p101 = scmp.ne.s32.totalorder %s89, %s90
    %p102 = scmp.eq.s32.totalorder %s17, 1
    %p103 = por %p101, %p102
    %p105 = scmp.ne.s32.totalorder %s90, %s104
    %p106 = scmp.eq.s32.totalorder %s17, 0
    %p107 = por %p105, %p106
    %s109 = sadd.s32 %s108, 1
    %p112 = scmp.eq.s32.totalorder %s11, 1
    %p113 = scmp.ne.s32.totalorder %s108, %s110
    %p114 = scmp.eq.s32.totalorder %s11, 0
    %p115 = por %p113, %p114
    %p116 = scmp.ne.s32.totalorder %s108, %s110
    %p117 = scmp.eq.s32.totalorder %s16, 1
    %p118 = por %p116, %p117
    %p119 = scmp.ne.s32.totalorder %s110, %s111
    %p120 = scmp.eq.s32.totalorder %s16, 0
    %p121 = por %p119, %p120
    %p122 = scmp.ne.s32.totalorder %s110, %s111
    %p123 = scmp.eq.s32.totalorder %s17, 1
    %p124 = por %p122, %p123
    %p126 = scmp.ne.s32.totalorder %s111, %s125
    %p127 = scmp.eq.s32.totalorder %s17, 0
    %p128 = por %p126, %p127
    %s129 = ssub.s32 %s11, %s18
    %p130 = scmp.eq.s32.totalorder %s129, 0
    %s132 = sadd.s32 %s131, 1
    %s133 = scalar_select %p130, %s131, %s132
    %p136 = pneg %p130
    %p137 = scmp.eq.s32.totalorder %s11, 1
    %p138 = por %p136, %p137
    %p139 = scmp.ne.s32.totalorder %s131, %s134
    %p140 = scmp.eq.s32.totalorder %s11, 0
    %p141 = por %p139, %p140
    %p142 = scmp.ne.s32.totalorder %s131, %s134
    %p143 = scmp.eq.s32.totalorder %s16, 1
    %p144 = por %p142, %p143
    %p145 = scmp.ne.s32.totalorder %s134, %s135
    %p146 = scmp.eq.s32.totalorder %s16, 0
    %p147 = por %p145, %p146
    %p148 = scmp.ne.s32.totalorder %s134, %s135
    %p149 = scmp.eq.s32.totalorder %s17, 1
    %p150 = por %p148, %p149
    %p152 = scmp.ne.s32.totalorder %s135, %s151
    %p153 = scmp.eq.s32.totalorder %s17, 0
    %p154 = por %p152, %p153
    %p155 = scmp.le.s32.totalorder 1, %s11
    %p156 = scmp.lt.s32.totalorder %s11, 3
    %p157 = pnand %p155, %p156
    %p158 = pneg %p157
    // Predicated region
    $region9: #{bottleneck_forward.2} parent=5 // pred_check
      _
    $region10: #{bottleneck_forward.2} parent=5 // pred_check_branch
      %160 = sbr.rel (%p157) target = $region12
    $region11: #{bottleneck_forward.2} parent=5 // pred_region
      %s161 = ssub.s32 %s11, 1
      // Predicated region
      $region13: #{bottleneck_forward.2} parent=11 // pred_check
        %p162 = pneg %p58
      $region14: #{bottleneck_forward.2} parent=11 // pred_check_branch
        %164 = sbr.rel (%p162) target = $region16
      $region15: #{bottleneck_forward.2} parent=11 // pred_region
        _
      $region16: #{bottleneck_forward.2} parent=11 // pred_fallthru
        _
      // Predicated region
      $region17: #{bottleneck_forward.2} parent=11 // pred_check
        %p165 = pneg %p79
      $region18: #{bottleneck_forward.2} parent=11 // pred_check_branch
        %167 = sbr.rel (%p165) target = $region20
      $region19: #{bottleneck_forward.2} parent=11 // pred_region
        _
      $region20: #{bottleneck_forward.2} parent=11 // pred_fallthru
        _
      // Predicated region
      $region21: #{bottleneck_forward.2} parent=11 // pred_check
        %p168 = pneg %p100
      $region22: #{bottleneck_forward.2} parent=11 // pred_check_branch
        %170 = sbr.rel (%p168) target = $region24
      $region23: #{bottleneck_forward.2} parent=11 // pred_region
        _
      $region24: #{bottleneck_forward.2} parent=11 // pred_fallthru
        _
      // Predicated region
      $region25: #{bottleneck_forward.2} parent=11 // pred_check
        %p171 = pneg %p121
      $region26: #{bottleneck_forward.2} parent=11 // pred_check_branch
        %173 = sbr.rel (%p171) target = $region28
      $region27: #{bottleneck_forward.2} parent=11 // pred_region
        _
      $region28: #{bottleneck_forward.2} parent=11 // pred_fallthru
        _
    $region12: #{bottleneck_forward.2} parent=5 // pred_fallthru
      _
    %p174 = scmp.lt.s32.totalorder %s11, 2
    // Predicated region
    $region29: #{bottleneck_forward.2} parent=5 // pred_check
      %p175 = pneg %p174
    $region30: #{bottleneck_forward.2} parent=5 // pred_check_branch
      %177 = sbr.rel (%p175) target = $region32
    $region31: #{bottleneck_forward.2} parent=5 // pred_region
      // Predicated region
      $region33: #{bottleneck_forward.2} parent=31 // pred_check
        %p178 = pneg %p31
      $region34: #{bottleneck_forward.2} parent=31 // pred_check_branch
        %180 = sbr.rel (%p178) target = $region36
      $region35: #{bottleneck_forward.2} parent=31 // pred_region
        %s181 = smul.u32 4, %s11
        %p182 = scmp.lt.s32.totalorder %s181, 7
        %s183 = scalar_select %p182, %s181, 7
        %s184 = smul.addr %s183, 8
        %s185 = smul.addr %s184, 4
        %s186 = scalar_lea.vmem %s0, %s185
        %s187 = smul.u32 4, %s11
      $region36: #{bottleneck_forward.2} parent=31 // pred_fallthru
        _
    $region32: #{bottleneck_forward.2} parent=5 // pred_fallthru
      _
    %p188 = scmp.le.s32.totalorder 1, %s11
    %p189 = scmp.lt.s32.totalorder %s11, 3
    %p190 = pnand %p188, %p189
    %p191 = pneg %p190
    // Predicated region
    $region37: #{bottleneck_forward.2} parent=5 // pred_check
      _
    $region38: #{bottleneck_forward.2} parent=5 // pred_check_branch
      %193 = sbr.rel (%p190) target = $region40
    $region39: #{bottleneck_forward.2} parent=5 // pred_region
      %s194 = ssub.s32 %s11, 1
      %s195 = smul.u32 4, %s16
      %p196 = scmp.lt.s32.totalorder %s195, 7
      %s197 = scalar_select %p196, %s195, 7
      %s198 = smul.addr %s197, 8
      %s199 = smul.addr %s198, 4
      %s200 = scalar_lea.vmem %s0, %s199
      %p201 = pneg %p37
      %p202 = pneg %p34
      %p203 = pneg %p58
      %p204 = pneg %p55
      %p205 = pneg %p79
      %p206 = pneg %p76
      %p207 = pneg %p100
      %p208 = pneg %p97
      %p209 = pneg %p121
      %p210 = pneg %p118
      %p211 = pneg %p147
      %p212 = pneg %p144
      %s213 = smul.u32 4, %s16
      %p214 = scmp.lt.s32.totalorder %s213, 7
      %s215 = scalar_select %p214, %s213, 7
      %s216 = smul.addr %s215, 8
      %s217 = smul.addr %s216, 4
      %s218 = scalar_lea.vmem %s5, %s217
      %s219 = smul.u32 4, %s16
      %p220 = scmp.lt.s32.totalorder %s219, 7
      %s221 = scalar_select %p220, %s219, 7
      %s222 = smul.addr %s221, 8
      %s223 = smul.addr %s222, 4
      %s224 = scalar_lea.vmem %s0, %s223
      %s225 = smul.u32 4, %s16
      %s226 = smul.u32 4, %s16
      %p227 = scmp.lt.s32.totalorder %s226, 7
      %s228 = scalar_select %p227, %s226, 7
      %s229 = smul.addr %s228, 8
      %s230 = smul.addr %s229, 4
      %s231 = scalar_lea.vmem %s5, %s230
      %s232 = smul.u32 4, %s16
      %v234 = vld [vmem:[%s224] sm:$0xf]
      %v235 = vld [vmem:[%s224 + $0x4] sm:$0xf]
      %v236 = vld [vmem:[%s224 + $0x8] sm:$0xf]
      %v237 = vld [vmem:[%s224 + $0xc] sm:$0xf]
      %v238 = vld [vmem:[%s224 + $0x10] sm:$0xf]
      %v239 = vld [vmem:[%s224 + $0x14] sm:$0xf]
      %v240 = vld [vmem:[%s224 + $0x18] sm:$0xf]
      %v241 = vld [vmem:[%s224 + $0x1c] sm:$0xf]
      %v242 = vld [vmem:[%s224 + $0x20] sm:$0xf]
      %v243 = vld [vmem:[%s224 + $0x24] sm:$0xf]
      %v244 = vld [vmem:[%s224 + $0x28] sm:$0xf]
      %v245 = vld [vmem:[%s224 + $0x2c] sm:$0xf]
      %v246 = vld [vmem:[%s224 + $0x30] sm:$0xf]
      %v247 = vld [vmem:[%s224 + $0x34] sm:$0xf]
      %v248 = vld [vmem:[%s224 + $0x38] sm:$0xf]
      %v249 = vld [vmem:[%s224 + $0x3c] sm:$0xf]
      %v250 = vld [vmem:[%s224 + $0x40] sm:$0xf]
      %v251 = vld [vmem:[%s224 + $0x44] sm:$0xf]
      %v252 = vld [vmem:[%s224 + $0x48] sm:$0xf]
      %v253 = vld [vmem:[%s224 + $0x4c] sm:$0xf]
      %v254 = vld [vmem:[%s224 + $0x50] sm:$0xf]
      %v255 = vld [vmem:[%s224 + $0x54] sm:$0xf]
      %v256 = vld [vmem:[%s224 + $0x58] sm:$0xf]
      %v257 = vld [vmem:[%s224 + $0x5c] sm:$0xf]
      %v258 = vld [vmem:[%s224 + $0x60] sm:$0xf]
      %v259 = vld [vmem:[%s224 + $0x64] sm:$0xf]
      %v260 = vld [vmem:[%s224 + $0x68] sm:$0xf]
      %v261 = vld [vmem:[%s224 + $0x6c] sm:$0xf]
      %v262 = vld [vmem:[%s224 + $0x70] sm:$0xf]
      %v263 = vld [vmem:[%s224 + $0x74] sm:$0xf]
      %v264 = vld [vmem:[%s224 + $0x78] sm:$0xf]
      %v265 = vld [vmem:[%s224 + $0x7c] sm:$0xf]
      %v266 = vld [vmem:[%s1] sm:$0xf]
      %v267 = vld [vmem:[%s1 + $0x4] sm:$0xf]
      %v268 = vld [vmem:[%s2] sm:$0x1]
      %v270 = vperm.slane %v268, 0
      %v304 = vunpack.c.l.b16 %v234
      %v305 = vunpack.c.l.b16 %v235
      %v306 = vunpack.c.l.b16 %v236
      %v307 = vunpack.c.l.b16 %v237
      %v308 = vunpack.c.l.b16 %v238
      %v309 = vunpack.c.l.b16 %v239
      %v310 = vunpack.c.l.b16 %v240
      %v311 = vunpack.c.l.b16 %v241
      %v312 = vunpack.c.l.b16 %v242
      %v313 = vunpack.c.l.b16 %v243
      %v314 = vunpack.c.l.b16 %v244
      %v315 = vunpack.c.l.b16 %v245
      %v316 = vunpack.c.l.b16 %v246
      %v317 = vunpack.c.l.b16 %v247
      %v318 = vunpack.c.l.b16 %v248
      %v319 = vunpack.c.l.b16 %v249
      %v320 = vunpack.c.l.b16 %v250
      %v321 = vunpack.c.l.b16 %v251
      %v322 = vunpack.c.l.b16 %v252
      %v323 = vunpack.c.l.b16 %v253
      %v324 = vunpack.c.l.b16 %v254
      %v325 = vunpack.c.l.b16 %v255
      %v326 = vunpack.c.l.b16 %v256
      %v327 = vunpack.c.l.b16 %v257
      %v328 = vunpack.c.l.b16 %v258
      %v329 = vunpack.c.l.b16 %v259
      %v330 = vunpack.c.l.b16 %v260
      %v331 = vunpack.c.l.b16 %v261
      %v332 = vunpack.c.l.b16 %v262
      %v333 = vunpack.c.l.b16 %v263
      %v334 = vunpack.c.l.b16 %v264
      %v335 = vunpack.c.l.b16 %v265
      %v336 = vpack.c.b16 %v305, %v304
      %v337 = vpack.c.b16 %v307, %v306
      %v338 = vpack.c.b16 %v309, %v308
      %v339 = vpack.c.b16 %v311, %v310
      %v340 = vpack.c.b16 %v313, %v312
      %v341 = vpack.c.b16 %v315, %v314
      %v342 = vpack.c.b16 %v317, %v316
      %v343 = vpack.c.b16 %v319, %v318
      %v344 = vpack.c.b16 %v321, %v320
      %v345 = vpack.c.b16 %v323, %v322
      %v346 = vpack.c.b16 %v325, %v324
      %v347 = vpack.c.b16 %v327, %v326
      %v348 = vpack.c.b16 %v329, %v328
      %v349 = vpack.c.b16 %v331, %v330
      %v350 = vpack.c.b16 %v333, %v332
      %v351 = vpack.c.b16 %v335, %v334
      %v354 = vunpack.c.l.b16 %v266
      %v355 = vunpack.c.l.b16 %v267
      %v356 = vpack.c.b16 %v355, %v354
      %vm358 = vcmask 130048
      %v360 = vsel %vm358, %v336, 0
      %v363 = vsel %vm358, %v337, 0
      %v366 = vsel %vm358, %v338, 0
      %v369 = vsel %vm358, %v339, 0
      %v372 = vsel %vm358, %v340, 0
      %v375 = vsel %vm358, %v341, 0
      %v378 = vsel %vm358, %v342, 0
      %v381 = vsel %vm358, %v343, 0
      %v384 = vsel %vm358, %v344, 0
      %v387 = vsel %vm358, %v345, 0
      %v390 = vsel %vm358, %v346, 0
      %v393 = vsel %vm358, %v347, 0
      %v396 = vsel %vm358, %v348, 0
      %v399 = vsel %vm358, %v349, 0
      %v402 = vsel %vm358, %v350, 0
      %v405 = vsel %vm358, %v351, 0
      %407 = vmatpush.bf16.msra.mxu0 0
      %408 = vmatpush.bf16.msra.mxu0 0
      %409 = vmatpush.bf16.msra.mxu0 0
      %410 = vmatpush.bf16.msra.mxu0 0
      %411 = vmatpush.bf16.msra.mxu0 0
      %412 = vmatpush.bf16.msra.mxu0 0
      %413 = vmatpush.bf16.msra.mxu0 0
      %414 = vmatpush.bf16.msra.mxu0 %v356
      %415 = vmatmul.bf16.gmra.mxu0 %v360
      %v416 = vpop.f32.mrf.mxu0
      %v417 = vadd.f32 %v270, %v416
      %v418 = vpop.f32.mrf.mxu0
      %v419 = vadd.f32 %v270, %v418
      %420 = vmatmul.bf16.gmra.mxu0 %v363
      %v421 = vpop.f32.mrf.mxu0
      %v422 = vadd.f32 %v270, %v421
      %v423 = vpop.f32.mrf.mxu0
      %v424 = vadd.f32 %v270, %v423
      %425 = vmatmul.bf16.gmra.mxu0 %v366
      %v426 = vpop.f32.mrf.mxu0
      %v427 = vadd.f32 %v270, %v426
      %v428 = vpop.f32.mrf.mxu0
      %v429 = vadd.f32 %v270, %v428
      %430 = vmatmul.bf16.gmra.mxu0 %v369
      %v431 = vpop.f32.mrf.mxu0
      %v432 = vadd.f32 %v270, %v431
      %v433 = vpop.f32.mrf.mxu0
      %v434 = vadd.f32 %v270, %v433
      %435 = vmatmul.bf16.gmra.mxu0 %v372
      %v436 = vpop.f32.mrf.mxu0
      %v437 = vadd.f32 %v270, %v436
      %v438 = vpop.f32.mrf.mxu0
      %v439 = vadd.f32 %v270, %v438
      %440 = vmatmul.bf16.gmra.mxu0 %v375
      %v441 = vpop.f32.mrf.mxu0
      %v442 = vadd.f32 %v270, %v441
      %v443 = vpop.f32.mrf.mxu0
      %v444 = vadd.f32 %v270, %v443
      %445 = vmatmul.bf16.gmra.mxu0 %v378
      %v446 = vpop.f32.mrf.mxu0
      %v447 = vadd.f32 %v270, %v446
      %v448 = vpop.f32.mrf.mxu0
      %v449 = vadd.f32 %v270, %v448
      %450 = vmatmul.bf16.gmra.mxu0 %v381
      %v451 = vpop.f32.mrf.mxu0
      %v452 = vadd.f32 %v270, %v451
      %v453 = vpop.f32.mrf.mxu0
      %v454 = vadd.f32 %v270, %v453
      %455 = vmatmul.bf16.gmra.mxu0 %v384
      %v456 = vpop.f32.mrf.mxu0
      %v457 = vadd.f32 %v270, %v456
      %v458 = vpop.f32.mrf.mxu0
      %v459 = vadd.f32 %v270, %v458
      %460 = vmatmul.bf16.gmra.mxu0 %v387
      %v461 = vpop.f32.mrf.mxu0
      %v462 = vadd.f32 %v270, %v461
      %v463 = vpop.f32.mrf.mxu0
      %v464 = vadd.f32 %v270, %v463
      %465 = vmatmul.bf16.gmra.mxu0 %v390
      %v466 = vpop.f32.mrf.mxu0
      %v467 = vadd.f32 %v270, %v466
      %v468 = vpop.f32.mrf.mxu0
      %v469 = vadd.f32 %v270, %v468
      %470 = vmatmul.bf16.gmra.mxu0 %v393
      %v471 = vpop.f32.mrf.mxu0
      %v472 = vadd.f32 %v270, %v471
      %v473 = vpop.f32.mrf.mxu0
      %v474 = vadd.f32 %v270, %v473
      %475 = vmatmul.bf16.gmra.mxu0 %v396
      %v476 = vpop.f32.mrf.mxu0
      %v477 = vadd.f32 %v270, %v476
      %v478 = vpop.f32.mrf.mxu0
      %v479 = vadd.f32 %v270, %v478
      %480 = vmatmul.bf16.gmra.mxu0 %v399
      %v481 = vpop.f32.mrf.mxu0
      %v482 = vadd.f32 %v270, %v481
      %v483 = vpop.f32.mrf.mxu0
      %v484 = vadd.f32 %v270, %v483
      %485 = vmatmul.bf16.gmra.mxu0 %v402
      %v486 = vpop.f32.mrf.mxu0
      %v487 = vadd.f32 %v270, %v486
      %v488 = vpop.f32.mrf.mxu0
      %v489 = vadd.f32 %v270, %v488
      %490 = vmatmul.bf16.gmra.mxu0 %v405
      %v491 = vpop.f32.mrf.mxu0
      %v492 = vadd.f32 %v270, %v491
      %v493 = vpop.f32.mrf.mxu0
      %v494 = vadd.f32 %v270, %v493
      %495 = vdwg.mxu0
      %v496 = vmax.f32 %v417, 0.0
      %v497 = vmax.f32 %v419, 0.0
      %v498 = vmax.f32 %v422, 0.0
      %v499 = vmax.f32 %v424, 0.0
      %v500 = vmax.f32 %v427, 0.0
      %v501 = vmax.f32 %v429, 0.0
      %v502 = vmax.f32 %v432, 0.0
      %v503 = vmax.f32 %v434, 0.0
      %v504 = vmax.f32 %v437, 0.0
      %v505 = vmax.f32 %v439, 0.0
      %v506 = vmax.f32 %v442, 0.0
      %v507 = vmax.f32 %v444, 0.0
      %v508 = vmax.f32 %v447, 0.0
      %v509 = vmax.f32 %v449, 0.0
      %v510 = vmax.f32 %v452, 0.0
      %v511 = vmax.f32 %v454, 0.0
      %v512 = vmax.f32 %v457, 0.0
      %v513 = vmax.f32 %v459, 0.0
      %v514 = vmax.f32 %v462, 0.0
      %v515 = vmax.f32 %v464, 0.0
      %v516 = vmax.f32 %v467, 0.0
      %v517 = vmax.f32 %v469, 0.0
      %v518 = vmax.f32 %v472, 0.0
      %v519 = vmax.f32 %v474, 0.0
      %v520 = vmax.f32 %v477, 0.0
      %v521 = vmax.f32 %v479, 0.0
      %v522 = vmax.f32 %v482, 0.0
      %v523 = vmax.f32 %v484, 0.0
      %v524 = vmax.f32 %v487, 0.0
      %v525 = vmax.f32 %v489, 0.0
      %v526 = vmax.f32 %v492, 0.0
      %v527 = vmax.f32 %v494, 0.0
      %vm528 = vcmask 27648
      %529 = vst.msk [vmem:[#allocation2] sm:$0xf] %vm528, 0
      %530 = vst.msk [vmem:[#allocation2 + $0x28] sm:$0xf] %vm528, 0
      %531 = vst.msk [vmem:[#allocation2 + $0x50] sm:$0xf] %vm528, 0
      %532 = vst.msk [vmem:[#allocation2 + $0x78] sm:$0xf] %vm528, 0
      %s533 = scalar_lea.vmem [#allocation2], 36
      %534 = vst.msk [vmem:[%s533] sm:$0xf] %vm528, 0
      %535 = vst.msk [vmem:[%s533 + $0x28] sm:$0xf] %vm528, 0
      %536 = vst.msk [vmem:[%s533 + $0x50] sm:$0xf] %vm528, 0
      %537 = vst.msk [vmem:[%s533 + $0x78] sm:$0xf] %vm528, 0
      %v538 = vpack.c.bf16 %v496, %v496
      %v539 = vpack.c.bf16 %v497, %v497
      %v540 = vpack.c.bf16 %v498, %v498
      %v541 = vpack.c.bf16 %v499, %v499
      %v542 = vpack.c.bf16 %v500, %v500
      %v543 = vpack.c.bf16 %v501, %v501
      %v544 = vpack.c.bf16 %v502, %v502
      %v545 = vpack.c.bf16 %v503, %v503
      %v546 = vpack.c.bf16 %v504, %v504
      %v547 = vpack.c.bf16 %v505, %v505
      %v548 = vpack.c.bf16 %v506, %v506
      %v549 = vpack.c.bf16 %v507, %v507
      %v550 = vpack.c.bf16 %v508, %v508
      %v551 = vpack.c.bf16 %v509, %v509
      %v552 = vpack.c.bf16 %v510, %v510
      %v553 = vpack.c.bf16 %v511, %v511
      %v554 = vpack.c.bf16 %v512, %v512
      %v555 = vpack.c.bf16 %v513, %v513
      %v556 = vpack.c.bf16 %v514, %v514
      %v557 = vpack.c.bf16 %v515, %v515
      %v558 = vpack.c.bf16 %v516, %v516
      %v559 = vpack.c.bf16 %v517, %v517
      %v560 = vpack.c.bf16 %v518, %v518
      %v561 = vpack.c.bf16 %v519, %v519
      %v562 = vpack.c.bf16 %v520, %v520
      %v563 = vpack.c.bf16 %v521, %v521
      %v564 = vpack.c.bf16 %v522, %v522
      %v565 = vpack.c.bf16 %v523, %v523
      %v566 = vpack.c.bf16 %v524, %v524
      %v567 = vpack.c.bf16 %v525, %v525
      %v568 = vpack.c.bf16 %v526, %v526
      %v569 = vpack.c.bf16 %v527, %v527
      %s570 = scalar_lea.vmem [#allocation2], 4
      %571 = vst.msk [vmem:[%s570] sm:$0xf] %vm528, %v538
      %572 = vst.msk [vmem:[%s570 + $0x4] sm:$0xf] %vm528, %v539
      %573 = vst.msk [vmem:[%s570 + $0x8] sm:$0xf] %vm528, %v540
      %574 = vst.msk [vmem:[%s570 + $0xc] sm:$0xf] %vm528, %v541
      %575 = vst.msk [vmem:[%s570 + $0x10] sm:$0xf] %vm528, %v542
      %576 = vst.msk [vmem:[%s570 + $0x14] sm:$0xf] %vm528, %v543
      %577 = vst.msk [vmem:[%s570 + $0x18] sm:$0xf] %vm528, %v544
      %578 = vst.msk [vmem:[%s570 + $0x1c] sm:$0xf] %vm528, %v545
      %579 = vst.msk [vmem:[%s570 + $0x28] sm:$0xf] %vm528, %v546
      %580 = vst.msk [vmem:[%s570 + $0x2c] sm:$0xf] %vm528, %v547
      %581 = vst.msk [vmem:[%s570 + $0x30] sm:$0xf] %vm528, %v548
      %582 = vst.msk [vmem:[%s570 + $0x34] sm:$0xf] %vm528, %v549
      %583 = vst.msk [vmem:[%s570 + $0x38] sm:$0xf] %vm528, %v550
      %584 = vst.msk [vmem:[%s570 + $0x3c] sm:$0xf] %vm528, %v551
      %585 = vst.msk [vmem:[%s570 + $0x40] sm:$0xf] %vm528, %v552
      %586 = vst.msk [vmem:[%s570 + $0x44] sm:$0xf] %vm528, %v553
      %587 = vst.msk [vmem:[%s570 + $0x50] sm:$0xf] %vm528, %v554
      %588 = vst.msk [vmem:[%s570 + $0x54] sm:$0xf] %vm528, %v555
      %589 = vst.msk [vmem:[%s570 + $0x58] sm:$0xf] %vm528, %v556
      %590 = vst.msk [vmem:[%s570 + $0x5c] sm:$0xf] %vm528, %v557
      %591 = vst.msk [vmem:[%s570 + $0x60] sm:$0xf] %vm528, %v558
      %592 = vst.msk [vmem:[%s570 + $0x64] sm:$0xf] %vm528, %v559
      %593 = vst.msk [vmem:[%s570 + $0x68] sm:$0xf] %vm528, %v560
      %594 = vst.msk [vmem:[%s570 + $0x6c] sm:$0xf] %vm528, %v561
      %595 = vst.msk [vmem:[%s570 + $0x78] sm:$0xf] %vm528, %v562
      %596 = vst.msk [vmem:[%s570 + $0x7c] sm:$0xf] %vm528, %v563
      %597 = vst.msk [vmem:[%s570 + $0x80] sm:$0xf] %vm528, %v564
      %598 = vst.msk [vmem:[%s570 + $0x84] sm:$0xf] %vm528, %v565
      %599 = vst.msk [vmem:[%s570 + $0x88] sm:$0xf] %vm528, %v566
      %600 = vst.msk [vmem:[%s570 + $0x8c] sm:$0xf] %vm528, %v567
      %601 = vst.msk [vmem:[%s570 + $0x90] sm:$0xf] %vm528, %v568
      %602 = vst.msk [vmem:[%s570 + $0x94] sm:$0xf] %vm528, %v569
      %v603 = vld [vmem:[#allocation2] sm:$0xf]
      %v604 = vld [vmem:[#allocation2 + $0x4] sm:$0xf]
      %v605 = vld [vmem:[#allocation2 + $0x8] sm:$0xf]
      %v606 = vld [vmem:[#allocation2 + $0xc] sm:$0xf]
      %v607 = vld [vmem:[#allocation2 + $0x10] sm:$0xf]
      %v608 = vld [vmem:[#allocation2 + $0x14] sm:$0xf]
      %v609 = vld [vmem:[#allocation2 + $0x18] sm:$0xf]
      %v610 = vld [vmem:[#allocation2 + $0x1c] sm:$0xf]
      %v611 = vld [vmem:[#allocation2 + $0x20] sm:$0xf]
      %v612 = vld [vmem:[#allocation2 + $0x24] sm:$0xf]
      %v613 = vld [vmem:[#allocation2 + $0x28] sm:$0xf]
      %v614 = vld [vmem:[#allocation2 + $0x2c] sm:$0xf]
      %v615 = vld [vmem:[#allocation2 + $0x30] sm:$0xf]
      %v616 = vld [vmem:[#allocation2 + $0x34] sm:$0xf]
      %v617 = vld [vmem:[#allocation2 + $0x38] sm:$0xf]
      %v618 = vld [vmem:[#allocation2 + $0x3c] sm:$0xf]
      %v619 = vld [vmem:[#allocation2 + $0x40] sm:$0xf]
      %v620 = vld [vmem:[#allocation2 + $0x44] sm:$0xf]
      %v621 = vld [vmem:[#allocation2 + $0x48] sm:$0xf]
      %v622 = vld [vmem:[#allocation2 + $0x4c] sm:$0xf]
      %v623 = vld [vmem:[#allocation2 + $0x50] sm:$0xf]
      %v624 = vld [vmem:[#allocation2 + $0x54] sm:$0xf]
      %v625 = vld [vmem:[#allocation2 + $0x58] sm:$0xf]
      %v626 = vld [vmem:[#allocation2 + $0x5c] sm:$0xf]
      %v627 = vld [vmem:[#allocation2 + $0x60] sm:$0xf]
      %v628 = vld [vmem:[#allocation2 + $0x64] sm:$0xf]
      %v629 = vld [vmem:[#allocation2 + $0x68] sm:$0xf]
      %v630 = vld [vmem:[#allocation2 + $0x6c] sm:$0xf]
      %v631 = vld [vmem:[#allocation2 + $0x70] sm:$0xf]
      %v632 = vld [vmem:[#allocation2 + $0x74] sm:$0xf]
      %v633 = vld [vmem:[#allocation2 + $0x78] sm:$0xf]
      %v634 = vld [vmem:[#allocation2 + $0x7c] sm:$0xf]
      %v635 = vld [vmem:[#allocation2 + $0x80] sm:$0xf]
      %v636 = vld [vmem:[#allocation2 + $0x84] sm:$0xf]
      %v637 = vld [vmem:[#allocation2 + $0x88] sm:$0xf]
      %v638 = vld [vmem:[#allocation2 + $0x8c] sm:$0xf]
      %v639 = vld [vmem:[#allocation2 + $0x90] sm:$0xf]
      %v640 = vld [vmem:[#allocation2 + $0x94] sm:$0xf]
      %v641 = vld [vmem:[#allocation2 + $0x98] sm:$0xf]
      %v642 = vld [vmem:[#allocation2 + $0x9c] sm:$0xf]
      %v683 = vunpack.c.l.b16 %v603
      %v684 = vunpack.c.l.b16 %v604
      %v685 = vunpack.c.l.b16 %v605
      %v686 = vunpack.c.l.b16 %v606
      %v687 = vunpack.c.l.b16 %v607
      %v688 = vunpack.c.l.b16 %v608
      %v689 = vunpack.c.l.b16 %v609
      %v690 = vunpack.c.l.b16 %v610
      %v691 = vunpack.c.l.b16 %v611
      %v692 = vunpack.c.l.b16 %v612
      %v693 = vunpack.c.l.b16 %v613
      %v694 = vunpack.c.l.b16 %v614
      %v695 = vunpack.c.l.b16 %v615
      %v696 = vunpack.c.l.b16 %v616
      %v697 = vunpack.c.l.b16 %v617
      %v698 = vunpack.c.l.b16 %v618
      %v699 = vunpack.c.l.b16 %v619
      %v700 = vunpack.c.l.b16 %v620
      %v701 = vunpack.c.l.b16 %v621
      %v702 = vunpack.c.l.b16 %v622
      %v703 = vunpack.c.l.b16 %v623
      %v704 = vunpack.c.l.b16 %v624
      %v705 = vunpack.c.l.b16 %v625
      %v706 = vunpack.c.l.b16 %v626
      %v707 = vunpack.c.l.b16 %v627
      %v708 = vunpack.c.l.b16 %v628
      %v709 = vunpack.c.l.b16 %v629
      %v710 = vunpack.c.l.b16 %v630
      %v711 = vunpack.c.l.b16 %v631
      %v712 = vunpack.c.l.b16 %v632
      %v713 = vunpack.c.l.b16 %v633
      %v714 = vunpack.c.l.b16 %v634
      %v715 = vunpack.c.l.b16 %v635
      %v716 = vunpack.c.l.b16 %v636
      %v717 = vunpack.c.l.b16 %v637
      %v718 = vunpack.c.l.b16 %v638
      %v719 = vunpack.c.l.b16 %v639
      %v720 = vunpack.c.l.b16 %v640
      %v721 = vunpack.c.l.b16 %v641
      %v722 = vunpack.c.l.b16 %v642
      %v723 = vpack.c.b16 %v683, %v683
      %v724 = vpack.c.b16 %v684, %v684
      %v725 = vpack.c.b16 %v685, %v685
      %v726 = vpack.c.b16 %v686, %v686
      %v727 = vpack.c.b16 %v687, %v687
      %v728 = vpack.c.b16 %v688, %v688
      %v729 = vpack.c.b16 %v689, %v689
      %v730 = vpack.c.b16 %v690, %v690
      %v731 = vpack.c.b16 %v691, %v691
      %v732 = vpack.c.b16 %v692, %v692
      %v733 = vpack.c.b16 %v693, %v693
      %v734 = vpack.c.b16 %v694, %v694
      %v735 = vpack.c.b16 %v695, %v695
      %v736 = vpack.c.b16 %v696, %v696
      %v737 = vpack.c.b16 %v697, %v697
      %v738 = vpack.c.b16 %v698, %v698
      %v739 = vpack.c.b16 %v699, %v699
      %v740 = vpack.c.b16 %v700, %v700
      %v741 = vpack.c.b16 %v701, %v701
      %v742 = vpack.c.b16 %v702, %v702
      %v743 = vpack.c.b16 %v703, %v703
      %v744 = vpack.c.b16 %v704, %v704
      %v745 = vpack.c.b16 %v705, %v705
      %v746 = vpack.c.b16 %v706, %v706
      %v747 = vpack.c.b16 %v707, %v707
      %v748 = vpack.c.b16 %v708, %v708
      %v749 = vpack.c.b16 %v709, %v709
      %v750 = vpack.c.b16 %v710, %v710
      %v751 = vpack.c.b16 %v711, %v711
      %v752 = vpack.c.b16 %v712, %v712
      %v753 = vpack.c.b16 %v713, %v713
      %v754 = vpack.c.b16 %v714, %v714
      %v755 = vpack.c.b16 %v715, %v715
      %v756 = vpack.c.b16 %v716, %v716
      %v757 = vpack.c.b16 %v717, %v717
      %v758 = vpack.c.b16 %v718, %v718
      %v759 = vpack.c.b16 %v719, %v719
      %v760 = vpack.c.b16 %v720, %v720
      %v761 = vpack.c.b16 %v721, %v721
      %v762 = vpack.c.b16 %v722, %v722
      %v764 = vshrl.u32 %v723, 16
      %v766 = vrot.slane %v764, 7
      %v767 = vshll.u32 %v723, 16
      %v769 = vor.u32 %v766, %v767
      %v771 = vshrl.u32 %v724, 16
      %v773 = vrot.slane %v771, 7
      %v774 = vshll.u32 %v724, 16
      %v776 = vor.u32 %v773, %v774
      %v778 = vshrl.u32 %v725, 16
      %v780 = vrot.slane %v778, 7
      %v781 = vshll.u32 %v725, 16
      %v783 = vor.u32 %v780, %v781
      %v785 = vshrl.u32 %v726, 16
      %v787 = vrot.slane %v785, 7
      %v788 = vshll.u32 %v726, 16
      %v790 = vor.u32 %v787, %v788
      %v792 = vshrl.u32 %v727, 16
      %v794 = vrot.slane %v792, 7
      %v795 = vshll.u32 %v727, 16
      %v797 = vor.u32 %v794, %v795
      %v799 = vshrl.u32 %v728, 16
      %v801 = vrot.slane %v799, 7
      %v802 = vshll.u32 %v728, 16
      %v804 = vor.u32 %v801, %v802
      %v806 = vshrl.u32 %v729, 16
      %v808 = vrot.slane %v806, 7
      %v809 = vshll.u32 %v729, 16
      %v811 = vor.u32 %v808, %v809
      %v813 = vshrl.u32 %v730, 16
      %v815 = vrot.slane %v813, 7
      %v816 = vshll.u32 %v730, 16
      %v818 = vor.u32 %v815, %v816
      %v820 = vshrl.u32 %v731, 16
      %v822 = vrot.slane %v820, 7
      %v823 = vshll.u32 %v731, 16
      %v825 = vor.u32 %v822, %v823
      %v827 = vshrl.u32 %v732, 16
      %v829 = vrot.slane %v827, 7
      %v830 = vshll.u32 %v732, 16
      %v832 = vor.u32 %v829, %v830
      %v834 = vshrl.u32 %v733, 16
      %v836 = vrot.slane %v834, 7
      %v837 = vshll.u32 %v733, 16
      %v839 = vor.u32 %v836, %v837
      %v841 = vshrl.u32 %v734, 16
      %v843 = vrot.slane %v841, 7
      %v844 = vshll.u32 %v734, 16
      %v846 = vor.u32 %v843, %v844
      %v848 = vshrl.u32 %v735, 16
      %v850 = vrot.slane %v848, 7
      %v851 = vshll.u32 %v735, 16
      %v853 = vor.u32 %v850, %v851
      %v855 = vshrl.u32 %v736, 16
      %v857 = vrot.slane %v855, 7
      %v858 = vshll.u32 %v736, 16
      %v860 = vor.u32 %v857, %v858
      %v862 = vshrl.u32 %v737, 16
      %v864 = vrot.slane %v862, 7
      %v865 = vshll.u32 %v737, 16
      %v867 = vor.u32 %v864, %v865
      %v869 = vshrl.u32 %v738, 16
      %v871 = vrot.slane %v869, 7
      %v872 = vshll.u32 %v738, 16
      %v874 = vor.u32 %v871, %v872
      %v876 = vshrl.u32 %v739, 16
      %v878 = vrot.slane %v876, 7
      %v879 = vshll.u32 %v739, 16
      %v881 = vor.u32 %v878, %v879
      %v883 = vshrl.u32 %v740, 16
      %v885 = vrot.slane %v883, 7
      %v886 = vshll.u32 %v740, 16
      %v888 = vor.u32 %v885, %v886
      %v890 = vshrl.u32 %v741, 16
      %v892 = vrot.slane %v890, 7
      %v893 = vshll.u32 %v741, 16
      %v895 = vor.u32 %v892, %v893
      %v897 = vshrl.u32 %v742, 16
      %v899 = vrot.slane %v897, 7
      %v900 = vshll.u32 %v742, 16
      %v902 = vor.u32 %v899, %v900
      %v904 = vshrl.u32 %v743, 16
      %v906 = vrot.slane %v904, 7
      %v907 = vshll.u32 %v743, 16
      %v909 = vor.u32 %v906, %v907
      %v911 = vshrl.u32 %v744, 16
      %v913 = vrot.slane %v911, 7
      %v914 = vshll.u32 %v744, 16
      %v916 = vor.u32 %v913, %v914
      %v918 = vshrl.u32 %v745, 16
      %v920 = vrot.slane %v918, 7
      %v921 = vshll.u32 %v745, 16
      %v923 = vor.u32 %v920, %v921
      %v925 = vshrl.u32 %v746, 16
      %v927 = vrot.slane %v925, 7
      %v928 = vshll.u32 %v746, 16
      %v930 = vor.u32 %v927, %v928
      %v932 = vshrl.u32 %v747, 16
      %v934 = vrot.slane %v932, 7
      %v935 = vshll.u32 %v747, 16
      %v937 = vor.u32 %v934, %v935
      %v939 = vshrl.u32 %v748, 16
      %v941 = vrot.slane %v939, 7
      %v942 = vshll.u32 %v748, 16
      %v944 = vor.u32 %v941, %v942
      %v946 = vshrl.u32 %v749, 16
      %v948 = vrot.slane %v946, 7
      %v949 = vshll.u32 %v749, 16
      %v951 = vor.u32 %v948, %v949
      %v953 = vshrl.u32 %v750, 16
      %v955 = vrot.slane %v953, 7
      %v956 = vshll.u32 %v750, 16
      %v958 = vor.u32 %v955, %v956
      %v960 = vshrl.u32 %v751, 16
      %v962 = vrot.slane %v960, 7
      %v963 = vshll.u32 %v751, 16
      %v965 = vor.u32 %v962, %v963
      %v967 = vshrl.u32 %v752, 16
      %v969 = vrot.slane %v967, 7
      %v970 = vshll.u32 %v752, 16
      %v972 = vor.u32 %v969, %v970
      %v974 = vshrl.u32 %v753, 16
      %v976 = vrot.slane %v974, 7
      %v977 = vshll.u32 %v753, 16
      %v979 = vor.u32 %v976, %v977
      %v981 = vshrl.u32 %v754, 16
      %v983 = vrot.slane %v981, 7
      %v984 = vshll.u32 %v754, 16
      %v986 = vor.u32 %v983, %v984
      %v988 = vshrl.u32 %v755, 16
      %v990 = vrot.slane %v988, 7
      %v991 = vshll.u32 %v755, 16
      %v993 = vor.u32 %v990, %v991
      %v995 = vshrl.u32 %v756, 16
      %v997 = vrot.slane %v995, 7
      %v998 = vshll.u32 %v756, 16
      %v1000 = vor.u32 %v997, %v998
      %v1002 = vshrl.u32 %v757, 16
      %v1004 = vrot.slane %v1002, 7
      %v1005 = vshll.u32 %v757, 16
      %v1007 = vor.u32 %v1004, %v1005
      %v1009 = vshrl.u32 %v758, 16
      %v1011 = vrot.slane %v1009, 7
      %v1012 = vshll.u32 %v758, 16
      %v1014 = vor.u32 %v1011, %v1012
      %v1016 = vshrl.u32 %v759, 16
      %v1018 = vrot.slane %v1016, 7
      %v1019 = vshll.u32 %v759, 16
      %v1021 = vor.u32 %v1018, %v1019
      %v1023 = vshrl.u32 %v760, 16
      %v1025 = vrot.slane %v1023, 7
      %v1026 = vshll.u32 %v760, 16
      %v1028 = vor.u32 %v1025, %v1026
      %v1030 = vshrl.u32 %v761, 16
      %v1032 = vrot.slane %v1030, 7
      %v1033 = vshll.u32 %v761, 16
      %v1035 = vor.u32 %v1032, %v1033
      %v1037 = vshrl.u32 %v762, 16
      %v1039 = vrot.slane %v1037, 7
      %v1040 = vshll.u32 %v762, 16
      %v1042 = vor.u32 %v1039, %v1040
      %vm1083 = vcmask 1040384
      %vm1084 = vsmask.f32 256
      %vm1085 = vmand %vm1083, %vm1084
      %v1086 = vsel %vm1085, 0, %v769
      %v1087 = vsel %vm1085, 0, %v776
      %v1088 = vsel %vm1085, 0, %v783
      %v1089 = vsel %vm1085, 0, %v790
      %v1090 = vsel %vm1085, 0, %v797
      %v1091 = vsel %vm1085, 0, %v804
      %v1092 = vsel %vm1085, 0, %v811
      %v1093 = vsel %vm1085, 0, %v818
      %v1094 = vsel %vm1085, 0, %v825
      %v1095 = vsel %vm1085, 0, %v832
      %v1096 = vsel %vm1085, 0, %v839
      %v1097 = vsel %vm1085, 0, %v846
      %v1098 = vsel %vm1085, 0, %v853
      %v1099 = vsel %vm1085, 0, %v860
      %v1100 = vsel %vm1085, 0, %v867
      %v1101 = vsel %vm1085, 0, %v874
      %v1102 = vsel %vm1085, 0, %v881
      %v1103 = vsel %vm1085, 0, %v888
      %v1104 = vsel %vm1085, 0, %v895
      %v1105 = vsel %vm1085, 0, %v902
      %v1106 = vsel %vm1085, 0, %v909
      %v1107 = vsel %vm1085, 0, %v916
      %v1108 = vsel %vm1085, 0, %v923
      %v1109 = vsel %vm1085, 0, %v930
      %v1110 = vsel %vm1085, 0, %v937
      %v1111 = vsel %vm1085, 0, %v944
      %v1112 = vsel %vm1085, 0, %v951
      %v1113 = vsel %vm1085, 0, %v958
      %v1114 = vsel %vm1085, 0, %v965
      %v1115 = vsel %vm1085, 0, %v972
      %v1116 = vsel %vm1085, 0, %v979
      %v1117 = vsel %vm1085, 0, %v986
      %v1118 = vsel %vm1085, 0, %v993
      %v1119 = vsel %vm1085, 0, %v1000
      %v1120 = vsel %vm1085, 0, %v1007
      %v1121 = vsel %vm1085, 0, %v1014
      %v1122 = vsel %vm1085, 0, %v1021
      %v1123 = vsel %vm1085, 0, %v1028
      %v1124 = vsel %vm1085, 0, %v1035
      %v1125 = vsel %vm1085, 0, %v1042
      %v1126 = vrot.slane %v767, 1
      %v1127 = vor.u32 %v764, %v1126
      %v1128 = vrot.slane %v774, 1
      %v1129 = vor.u32 %v771, %v1128
      %v1130 = vrot.slane %v781, 1
      %v1131 = vor.u32 %v778, %v1130
      %v1132 = vrot.slane %v788, 1
      %v1133 = vor.u32 %v785, %v1132
      %v1134 = vrot.slane %v795, 1
      %v1135 = vor.u32 %v792, %v1134
      %v1136 = vrot.slane %v802, 1
      %v1137 = vor.u32 %v799, %v1136
      %v1138 = vrot.slane %v809, 1
      %v1139 = vor.u32 %v806, %v1138
      %v1140 = vrot.slane %v816, 1
      %v1141 = vor.u32 %v813, %v1140
      %v1142 = vrot.slane %v823, 1
      %v1143 = vor.u32 %v820, %v1142
      %v1144 = vrot.slane %v830, 1
      %v1145 = vor.u32 %v827, %v1144
      %v1146 = vrot.slane %v837, 1
      %v1147 = vor.u32 %v834, %v1146
      %v1148 = vrot.slane %v844, 1
      %v1149 = vor.u32 %v841, %v1148
      %v1150 = vrot.slane %v851, 1
      %v1151 = vor.u32 %v848, %v1150
      %v1152 = vrot.slane %v858, 1
      %v1153 = vor.u32 %v855, %v1152
      %v1154 = vrot.slane %v865, 1
      %v1155 = vor.u32 %v862, %v1154
      %v1156 = vrot.slane %v872, 1
      %v1157 = vor.u32 %v869, %v1156
      %v1158 = vrot.slane %v879, 1
      %v1159 = vor.u32 %v876, %v1158
      %v1160 = vrot.slane %v886, 1
      %v1161 = vor.u32 %v883, %v1160
      %v1162 = vrot.slane %v893, 1
      %v1163 = vor.u32 %v890, %v1162
      %v1164 = vrot.slane %v900, 1
      %v1165 = vor.u32 %v897, %v1164
      %v1166 = vrot.slane %v907, 1
      %v1167 = vor.u32 %v904, %v1166
      %v1168 = vrot.slane %v914, 1
      %v1169 = vor.u32 %v911, %v1168
      %v1170 = vrot.slane %v921, 1
      %v1171 = vor.u32 %v918, %v1170
      %v1172 = vrot.slane %v928, 1
      %v1173 = vor.u32 %v925, %v1172
      %v1174 = vrot.slane %v935, 1
      %v1175 = vor.u32 %v932, %v1174
      %v1176 = vrot.slane %v942, 1
      %v1177 = vor.u32 %v939, %v1176
      %v1178 = vrot.slane %v949, 1
      %v1179 = vor.u32 %v946, %v1178
      %v1180 = vrot.slane %v956, 1
      %v1181 = vor.u32 %v953, %v1180
      %v1182 = vrot.slane %v963, 1
      %v1183 = vor.u32 %v960, %v1182
      %v1184 = vrot.slane %v970, 1
      %v1185 = vor.u32 %v967, %v1184
      %v1186 = vrot.slane %v977, 1
      %v1187 = vor.u32 %v974, %v1186
      %v1188 = vrot.slane %v984, 1
      %v1189 = vor.u32 %v981, %v1188
      %v1190 = vrot.slane %v991, 1
      %v1191 = vor.u32 %v988, %v1190
      %v1192 = vrot.slane %v998, 1
      %v1193 = vor.u32 %v995, %v1192
      %v1194 = vrot.slane %v1005, 1
      %v1195 = vor.u32 %v1002, %v1194
      %v1196 = vrot.slane %v1012, 1
      %v1197 = vor.u32 %v1009, %v1196
      %v1198 = vrot.slane %v1019, 1
      %v1199 = vor.u32 %v1016, %v1198
      %v1200 = vrot.slane %v1026, 1
      %v1201 = vor.u32 %v1023, %v1200
      %v1202 = vrot.slane %v1033, 1
      %v1203 = vor.u32 %v1030, %v1202
      %v1204 = vrot.slane %v1040, 1
      %v1205 = vor.u32 %v1037, %v1204
      %vm1246 = vcmask 1043456
      %vm1247 = vsmask.f32 3328
      %vm1248 = vmand %vm1246, %vm1247
      %v1249 = vsel %vm1248, %v1127, 0
      %v1250 = vsel %vm1248, %v1129, 0
      %v1251 = vsel %vm1248, %v1131, 0
      %v1252 = vsel %vm1248, %v1133, 0
      %v1253 = vsel %vm1248, %v1135, 0
      %v1254 = vsel %vm1248, %v1137, 0
      %v1255 = vsel %vm1248, %v1139, 0
      %v1256 = vsel %vm1248, %v1141, 0
      %v1257 = vsel %vm1248, %v1143, 0
      %v1258 = vsel %vm1248, %v1145, 0
      %v1259 = vsel %vm1248, %v1147, 0
      %v1260 = vsel %vm1248, %v1149, 0
      %v1261 = vsel %vm1248, %v1151, 0
      %v1262 = vsel %vm1248, %v1153, 0
      %v1263 = vsel %vm1248, %v1155, 0
      %v1264 = vsel %vm1248, %v1157, 0
      %v1265 = vsel %vm1248, %v1159, 0
      %v1266 = vsel %vm1248, %v1161, 0
      %v1267 = vsel %vm1248, %v1163, 0
      %v1268 = vsel %vm1248, %v1165, 0
      %v1269 = vsel %vm1248, %v1167, 0
      %v1270 = vsel %vm1248, %v1169, 0
      %v1271 = vsel %vm1248, %v1171, 0
      %v1272 = vsel %vm1248, %v1173, 0
      %v1273 = vsel %vm1248, %v1175, 0
      %v1274 = vsel %vm1248, %v1177, 0
      %v1275 = vsel %vm1248, %v1179, 0
      %v1276 = vsel %vm1248, %v1181, 0
      %v1277 = vsel %vm1248, %v1183, 0
      %v1278 = vsel %vm1248, %v1185, 0
      %v1279 = vsel %vm1248, %v1187, 0
      %v1280 = vsel %vm1248, %v1189, 0
      %v1281 = vsel %vm1248, %v1191, 0
      %v1282 = vsel %vm1248, %v1193, 0
      %v1283 = vsel %vm1248, %v1195, 0
      %v1284 = vsel %vm1248, %v1197, 0
      %v1285 = vsel %vm1248, %v1199, 0
      %v1286 = vsel %vm1248, %v1201, 0
      %v1287 = vsel %vm1248, %v1203, 0
      %v1288 = vsel %vm1248, %v1205, 0
      %v1321 = vunpack.c.l.b16 %v1086
      %v1322 = vunpack.c.l.b16 %v1087
      %v1323 = vunpack.c.l.b16 %v1088
      %v1324 = vunpack.c.l.b16 %v1089
      %v1325 = vunpack.c.l.b16 %v1090
      %v1326 = vunpack.c.l.b16 %v1091
      %v1327 = vunpack.c.l.b16 %v1092
      %v1328 = vunpack.c.l.b16 %v1093
      %v1329 = vunpack.c.l.b16 %v1096
      %v1330 = vunpack.c.l.b16 %v1097
      %v1331 = vunpack.c.l.b16 %v1098
      %v1332 = vunpack.c.l.b16 %v1099
      %v1333 = vunpack.c.l.b16 %v1100
      %v1334 = vunpack.c.l.b16 %v1101
      %v1335 = vunpack.c.l.b16 %v1102
      %v1336 = vunpack.c.l.b16 %v1103
      %v1337 = vunpack.c.l.b16 %v1106
      %v1338 = vunpack.c.l.b16 %v1107
      %v1339 = vunpack.c.l.b16 %v1108
      %v1340 = vunpack.c.l.b16 %v1109
      %v1341 = vunpack.c.l.b16 %v1110
      %v1342 = vunpack.c.l.b16 %v1111
      %v1343 = vunpack.c.l.b16 %v1112
      %v1344 = vunpack.c.l.b16 %v1113
      %v1345 = vunpack.c.l.b16 %v1116
      %v1346 = vunpack.c.l.b16 %v1117
      %v1347 = vunpack.c.l.b16 %v1118
      %v1348 = vunpack.c.l.b16 %v1119
      %v1349 = vunpack.c.l.b16 %v1120
      %v1350 = vunpack.c.l.b16 %v1121
      %v1351 = vunpack.c.l.b16 %v1122
      %v1352 = vunpack.c.l.b16 %v1123
      %v1353 = vpack.c.b16 %v1322, %v1321
      %v1354 = vpack.c.b16 %v1324, %v1323
      %v1355 = vpack.c.b16 %v1326, %v1325
      %v1356 = vpack.c.b16 %v1328, %v1327
      %v1357 = vpack.c.b16 %v1330, %v1329
      %v1358 = vpack.c.b16 %v1332, %v1331
      %v1359 = vpack.c.b16 %v1334, %v1333
      %v1360 = vpack.c.b16 %v1336, %v1335
      %v1361 = vpack.c.b16 %v1338, %v1337
      %v1362 = vpack.c.b16 %v1340, %v1339
      %v1363 = vpack.c.b16 %v1342, %v1341
      %v1364 = vpack.c.b16 %v1344, %v1343
      %v1365 = vpack.c.b16 %v1346, %v1345
      %v1366 = vpack.c.b16 %v1348, %v1347
      %v1367 = vpack.c.b16 %v1350, %v1349
      %v1368 = vpack.c.b16 %v1352, %v1351
      %v1369 = vpack.c.b16 %v684, %v683
      %v1370 = vpack.c.b16 %v686, %v685
      %v1371 = vpack.c.b16 %v688, %v687
      %v1372 = vpack.c.b16 %v690, %v689
      %v1373 = vpack.c.b16 %v694, %v693
      %v1374 = vpack.c.b16 %v696, %v695
      %v1375 = vpack.c.b16 %v698, %v697
      %v1376 = vpack.c.b16 %v700, %v699
      %v1377 = vpack.c.b16 %v704, %v703
      %v1378 = vpack.c.b16 %v706, %v705
      %v1379 = vpack.c.b16 %v708, %v707
      %v1380 = vpack.c.b16 %v710, %v709
      %v1381 = vpack.c.b16 %v714, %v713
      %v1382 = vpack.c.b16 %v716, %v715
      %v1383 = vpack.c.b16 %v718, %v717
      %v1384 = vpack.c.b16 %v720, %v719
      %1385 = vrot.lane.b32.xlu0 %v1369, 4
      %v1386 = vpop.permute.xlu0 %1385
      %1387 = vrot.lane.b32.xlu0 %v1370, 4
      %v1388 = vpop.permute.xlu0 %1387
      %1389 = vrot.lane.b32.xlu0 %v1371, 4
      %v1390 = vpop.permute.xlu0 %1389
      %1391 = vrot.lane.b32.xlu0 %v1372, 4
      %v1392 = vpop.permute.xlu0 %1391
      %1393 = vrot.lane.b32.xlu0 %v1373, 4
      %v1394 = vpop.permute.xlu0 %1393
      %1395 = vrot.lane.b32.xlu0 %v1374, 4
      %v1396 = vpop.permute.xlu0 %1395
      %1397 = vrot.lane.b32.xlu0 %v1375, 4
      %v1398 = vpop.permute.xlu0 %1397
      %1399 = vrot.lane.b32.xlu0 %v1376, 4
      %v1400 = vpop.permute.xlu0 %1399
      %1401 = vrot.lane.b32.xlu0 %v1377, 4
      %v1402 = vpop.permute.xlu0 %1401
      %1403 = vrot.lane.b32.xlu0 %v1378, 4
      %v1404 = vpop.permute.xlu0 %1403
      %1405 = vrot.lane.b32.xlu0 %v1379, 4
      %v1406 = vpop.permute.xlu0 %1405
      %1407 = vrot.lane.b32.xlu0 %v1380, 4
      %v1408 = vpop.permute.xlu0 %1407
      %1409 = vrot.lane.b32.xlu0 %v1381, 4
      %v1410 = vpop.permute.xlu0 %1409
      %1411 = vrot.lane.b32.xlu0 %v1382, 4
      %v1412 = vpop.permute.xlu0 %1411
      %1413 = vrot.lane.b32.xlu0 %v1383, 4
      %v1414 = vpop.permute.xlu0 %1413
      %1415 = vrot.lane.b32.xlu0 %v1384, 4
      %v1416 = vpop.permute.xlu0 %1415
      %v1449 = vunpack.c.l.b16 %v1249
      %v1450 = vunpack.c.l.b16 %v1250
      %v1451 = vunpack.c.l.b16 %v1251
      %v1452 = vunpack.c.l.b16 %v1252
      %v1453 = vunpack.c.l.b16 %v1253
      %v1454 = vunpack.c.l.b16 %v1254
      %v1455 = vunpack.c.l.b16 %v1255
      %v1456 = vunpack.c.l.b16 %v1256
      %v1457 = vunpack.c.l.b16 %v1259
      %v1458 = vunpack.c.l.b16 %v1260
      %v1459 = vunpack.c.l.b16 %v1261
      %v1460 = vunpack.c.l.b16 %v1262
      %v1461 = vunpack.c.l.b16 %v1263
      %v1462 = vunpack.c.l.b16 %v1264
      %v1463 = vunpack.c.l.b16 %v1265
      %v1464 = vunpack.c.l.b16 %v1266
      %v1465 = vunpack.c.l.b16 %v1269
      %v1466 = vunpack.c.l.b16 %v1270
      %v1467 = vunpack.c.l.b16 %v1271
      %v1468 = vunpack.c.l.b16 %v1272
      %v1469 = vunpack.c.l.b16 %v1273
      %v1470 = vunpack.c.l.b16 %v1274
      %v1471 = vunpack.c.l.b16 %v1275
      %v1472 = vunpack.c.l.b16 %v1276
      %v1473 = vunpack.c.l.b16 %v1279
      %v1474 = vunpack.c.l.b16 %v1280
      %v1475 = vunpack.c.l.b16 %v1281
      %v1476 = vunpack.c.l.b16 %v1282
      %v1477 = vunpack.c.l.b16 %v1283
      %v1478 = vunpack.c.l.b16 %v1284
      %v1479 = vunpack.c.l.b16 %v1285
      %v1480 = vunpack.c.l.b16 %v1286
      %v1481 = vpack.c.b16 %v1450, %v1449
      %v1482 = vpack.c.b16 %v1452, %v1451
      %v1483 = vpack.c.b16 %v1454, %v1453
      %v1484 = vpack.c.b16 %v1456, %v1455
      %v1485 = vpack.c.b16 %v1458, %v1457
      %v1486 = vpack.c.b16 %v1460, %v1459
      %v1487 = vpack.c.b16 %v1462, %v1461
      %v1488 = vpack.c.b16 %v1464, %v1463
      %v1489 = vpack.c.b16 %v1466, %v1465
      %v1490 = vpack.c.b16 %v1468, %v1467
      %v1491 = vpack.c.b16 %v1470, %v1469
      %v1492 = vpack.c.b16 %v1472, %v1471
      %v1493 = vpack.c.b16 %v1474, %v1473
      %v1494 = vpack.c.b16 %v1476, %v1475
      %v1495 = vpack.c.b16 %v1478, %v1477
      %v1496 = vpack.c.b16 %v1480, %v1479
      %1497 = vrot.lane.b32.xlu0 %v1481, 8
      %v1498 = vpop.permute.xlu0 %1497
      %1499 = vrot.lane.b32.xlu0 %v1482, 8
      %v1500 = vpop.permute.xlu0 %1499
      %1501 = vrot.lane.b32.xlu0 %v1483, 8
      %v1502 = vpop.permute.xlu0 %1501
      %1503 = vrot.lane.b32.xlu0 %v1484, 8
      %v1504 = vpop.permute.xlu0 %1503
      %1505 = vrot.lane.b32.xlu0 %v1485, 8
      %v1506 = vpop.permute.xlu0 %1505
      %1507 = vrot.lane.b32.xlu0 %v1486, 8
      %v1508 = vpop.permute.xlu0 %1507
      %1509 = vrot.lane.b32.xlu0 %v1487, 8
      %v1510 = vpop.permute.xlu0 %1509
      %1511 = vrot.lane.b32.xlu0 %v1488, 8
      %v1512 = vpop.permute.xlu0 %1511
      %1513 = vrot.lane.b32.xlu0 %v1489, 8
      %v1514 = vpop.permute.xlu0 %1513
      %1515 = vrot.lane.b32.xlu0 %v1490, 8
      %v1516 = vpop.permute.xlu0 %1515
      %1517 = vrot.lane.b32.xlu0 %v1491, 8
      %v1518 = vpop.permute.xlu0 %1517
      %1519 = vrot.lane.b32.xlu0 %v1492, 8
      %v1520 = vpop.permute.xlu0 %1519
      %1521 = vrot.lane.b32.xlu0 %v1493, 8
      %v1522 = vpop.permute.xlu0 %1521
      %1523 = vrot.lane.b32.xlu0 %v1494, 8
      %v1524 = vpop.permute.xlu0 %1523
      %1525 = vrot.lane.b32.xlu0 %v1495, 8
      %v1526 = vpop.permute.xlu0 %1525
      %1527 = vrot.lane.b32.xlu0 %v1496, 8
      %v1528 = vpop.permute.xlu0 %1527
      %v1533 = vunpack.c.l.b16 %v1094
      %v1534 = vunpack.c.l.b16 %v1104
      %v1535 = vunpack.c.l.b16 %v1114
      %v1536 = vunpack.c.l.b16 %v1124
      %v1537 = vpack.c.b16 %v1323, %v1322
      %v1538 = vpack.c.b16 %v1325, %v1324
      %v1539 = vpack.c.b16 %v1327, %v1326
      %v1540 = vpack.c.b16 %v1533, %v1328
      %v1541 = vpack.c.b16 %v1331, %v1330
      %v1542 = vpack.c.b16 %v1333, %v1332
      %v1543 = vpack.c.b16 %v1335, %v1334
      %v1544 = vpack.c.b16 %v1534, %v1336
      %v1545 = vpack.c.b16 %v1339, %v1338
      %v1546 = vpack.c.b16 %v1341, %v1340
      %v1547 = vpack.c.b16 %v1343, %v1342
      %v1548 = vpack.c.b16 %v1535, %v1344
      %v1549 = vpack.c.b16 %v1347, %v1346
      %v1550 = vpack.c.b16 %v1349, %v1348
      %v1551 = vpack.c.b16 %v1351, %v1350
      %v1552 = vpack.c.b16 %v1536, %v1352
      %1553 = vrot.lane.b32.xlu0 %v1537, 12
      %v1554 = vpop.permute.xlu0 %1553
      %1555 = vrot.lane.b32.xlu0 %v1538, 12
      %v1556 = vpop.permute.xlu0 %1555
      %1557 = vrot.lane.b32.xlu0 %v1539, 12
      %v1558 = vpop.permute.xlu0 %1557
      %1559 = vrot.lane.b32.xlu0 %v1540, 12
      %v1560 = vpop.permute.xlu0 %1559
      %1561 = vrot.lane.b32.xlu0 %v1541, 12
      %v1562 = vpop.permute.xlu0 %1561
      %1563 = vrot.lane.b32.xlu0 %v1542, 12
      %v1564 = vpop.permute.xlu0 %1563
      %1565 = vrot.lane.b32.xlu0 %v1543, 12
      %v1566 = vpop.permute.xlu0 %1565
      %1567 = vrot.lane.b32.xlu0 %v1544, 12
      %v1568 = vpop.permute.xlu0 %1567
      %1569 = vrot.lane.b32.xlu0 %v1545, 12
      %v1570 = vpop.permute.xlu0 %1569
      %1571 = vrot.lane.b32.xlu0 %v1546, 12
      %v1572 = vpop.permute.xlu0 %1571
      %1573 = vrot.lane.b32.xlu0 %v1547, 12
      %v1574 = vpop.permute.xlu0 %1573
      %1575 = vrot.lane.b32.xlu0 %v1548, 12
      %v1576 = vpop.permute.xlu0 %1575
      %1577 = vrot.lane.b32.xlu0 %v1549, 12
      %v1578 = vpop.permute.xlu0 %1577
      %1579 = vrot.lane.b32.xlu0 %v1550, 12
      %v1580 = vpop.permute.xlu0 %1579
      %1581 = vrot.lane.b32.xlu0 %v1551, 12
      %v1582 = vpop.permute.xlu0 %1581
      %1583 = vrot.lane.b32.xlu0 %v1552, 12
      %v1584 = vpop.permute.xlu0 %1583
      %v1585 = vpack.c.b16 %v685, %v684
      %v1586 = vpack.c.b16 %v687, %v686
      %v1587 = vpack.c.b16 %v689, %v688
      %v1588 = vpack.c.b16 %v691, %v690
      %v1589 = vpack.c.b16 %v695, %v694
      %v1590 = vpack.c.b16 %v697, %v696
      %v1591 = vpack.c.b16 %v699, %v698
      %v1592 = vpack.c.b16 %v701, %v700
      %v1593 = vpack.c.b16 %v705, %v704
      %v1594 = vpack.c.b16 %v707, %v706
      %v1595 = vpack.c.b16 %v709, %v708
      %v1596 = vpack.c.b16 %v711, %v710
      %v1597 = vpack.c.b16 %v715, %v714
      %v1598 = vpack.c.b16 %v717, %v716
      %v1599 = vpack.c.b16 %v719, %v718
      %v1600 = vpack.c.b16 %v721, %v720
      %1601 = vrot.lane.b32.xlu0 %v1585, 16
      %v1602 = vpop.permute.xlu0 %1601
      %1603 = vrot.lane.b32.xlu0 %v1586, 16
      %v1604 = vpop.permute.xlu0 %1603
      %1605 = vrot.lane.b32.xlu0 %v1587, 16
      %v1606 = vpop.permute.xlu0 %1605
      %1607 = vrot.lane.b32.xlu0 %v1588, 16
      %v1608 = vpop.permute.xlu0 %1607
      %1609 = vrot.lane.b32.xlu0 %v1589, 16
      %v1610 = vpop.permute.xlu0 %1609
      %1611 = vrot.lane.b32.xlu0 %v1590, 16
      %v1612 = vpop.permute.xlu0 %1611
      %1613 = vrot.lane.b32.xlu0 %v1591, 16
      %v1614 = vpop.permute.xlu0 %1613
      %1615 = vrot.lane.b32.xlu0 %v1592, 16
      %v1616 = vpop.permute.xlu0 %1615
      %1617 = vrot.lane.b32.xlu0 %v1593, 16
      %v1618 = vpop.permute.xlu0 %1617
      %1619 = vrot.lane.b32.xlu0 %v1594, 16
      %v1620 = vpop.permute.xlu0 %1619
      %1621 = vrot.lane.b32.xlu0 %v1595, 16
      %v1622 = vpop.permute.xlu0 %1621
      %1623 = vrot.lane.b32.xlu0 %v1596, 16
      %v1624 = vpop.permute.xlu0 %1623
      %1625 = vrot.lane.b32.xlu0 %v1597, 16
      %v1626 = vpop.permute.xlu0 %1625
      %1627 = vrot.lane.b32.xlu0 %v1598, 16
      %v1628 = vpop.permute.xlu0 %1627
      %1629 = vrot.lane.b32.xlu0 %v1599, 16
      %v1630 = vpop.permute.xlu0 %1629
      %1631 = vrot.lane.b32.xlu0 %v1600, 16
      %v1632 = vpop.permute.xlu0 %1631
      %v1637 = vunpack.c.l.b16 %v1257
      %v1638 = vunpack.c.l.b16 %v1267
      %v1639 = vunpack.c.l.b16 %v1277
      %v1640 = vunpack.c.l.b16 %v1287
      %v1641 = vpack.c.b16 %v1451, %v1450
      %v1642 = vpack.c.b16 %v1453, %v1452
      %v1643 = vpack.c.b16 %v1455, %v1454
      %v1644 = vpack.c.b16 %v1637, %v1456
      %v1645 = vpack.c.b16 %v1459, %v1458
      %v1646 = vpack.c.b16 %v1461, %v1460
      %v1647 = vpack.c.b16 %v1463, %v1462
      %v1648 = vpack.c.b16 %v1638, %v1464
      %v1649 = vpack.c.b16 %v1467, %v1466
      %v1650 = vpack.c.b16 %v1469, %v1468
      %v1651 = vpack.c.b16 %v1471, %v1470
      %v1652 = vpack.c.b16 %v1639, %v1472
      %v1653 = vpack.c.b16 %v1475, %v1474
      %v1654 = vpack.c.b16 %v1477, %v1476
      %v1655 = vpack.c.b16 %v1479, %v1478
      %v1656 = vpack.c.b16 %v1640, %v1480
      %1657 = vrot.lane.b32.xlu0 %v1641, 20
      %v1658 = vpop.permute.xlu0 %1657
      %1659 = vrot.lane.b32.xlu0 %v1642, 20
      %v1660 = vpop.permute.xlu0 %1659
      %1661 = vrot.lane.b32.xlu0 %v1643, 20
      %v1662 = vpop.permute.xlu0 %1661
      %1663 = vrot.lane.b32.xlu0 %v1644, 20
      %v1664 = vpop.permute.xlu0 %1663
      %1665 = vrot.lane.b32.xlu0 %v1645, 20
      %v1666 = vpop.permute.xlu0 %1665
      %1667 = vrot.lane.b32.xlu0 %v1646, 20
      %v1668 = vpop.permute.xlu0 %1667
      %1669 = vrot.lane.b32.xlu0 %v1647, 20
      %v1670 = vpop.permute.xlu0 %1669
      %1671 = vrot.lane.b32.xlu0 %v1648, 20
      %v1672 = vpop.permute.xlu0 %1671
      %1673 = vrot.lane.b32.xlu0 %v1649, 20
      %v1674 = vpop.permute.xlu0 %1673
      %1675 = vrot.lane.b32.xlu0 %v1650, 20
      %v1676 = vpop.permute.xlu0 %1675
      %1677 = vrot.lane.b32.xlu0 %v1651, 20
      %v1678 = vpop.permute.xlu0 %1677
      %1679 = vrot.lane.b32.xlu0 %v1652, 20
      %v1680 = vpop.permute.xlu0 %1679
      %1681 = vrot.lane.b32.xlu0 %v1653, 20
      %v1682 = vpop.permute.xlu0 %1681
      %1683 = vrot.lane.b32.xlu0 %v1654, 20
      %v1684 = vpop.permute.xlu0 %1683
      %1685 = vrot.lane.b32.xlu0 %v1655, 20
      %v1686 = vpop.permute.xlu0 %1685
      %1687 = vrot.lane.b32.xlu0 %v1656, 20
      %v1688 = vpop.permute.xlu0 %1687
      %v1693 = vunpack.c.l.b16 %v1095
      %v1694 = vunpack.c.l.b16 %v1105
      %v1695 = vunpack.c.l.b16 %v1115
      %v1696 = vunpack.c.l.b16 %v1125
      %v1697 = vpack.c.b16 %v1693, %v1533
      %v1698 = vpack.c.b16 %v1694, %v1534
      %v1699 = vpack.c.b16 %v1695, %v1535
      %v1700 = vpack.c.b16 %v1696, %v1536
      %1701 = vrot.lane.b32.xlu0 %v1354, 24
      %v1702 = vpop.permute.xlu0 %1701
      %1703 = vrot.lane.b32.xlu0 %v1355, 24
      %v1704 = vpop.permute.xlu0 %1703
      %1705 = vrot.lane.b32.xlu0 %v1356, 24
      %v1706 = vpop.permute.xlu0 %1705
      %1707 = vrot.lane.b32.xlu0 %v1697, 24
      %v1708 = vpop.permute.xlu0 %1707
      %1709 = vrot.lane.b32.xlu0 %v1358, 24
      %v1710 = vpop.permute.xlu0 %1709
      %1711 = vrot.lane.b32.xlu0 %v1359, 24
      %v1712 = vpop.permute.xlu0 %1711
      %1713 = vrot.lane.b32.xlu0 %v1360, 24
      %v1714 = vpop.permute.xlu0 %1713
      %1715 = vrot.lane.b32.xlu0 %v1698, 24
      %v1716 = vpop.permute.xlu0 %1715
      %1717 = vrot.lane.b32.xlu0 %v1362, 24
      %v1718 = vpop.permute.xlu0 %1717
      %1719 = vrot.lane.b32.xlu0 %v1363, 24
      %v1720 = vpop.permute.xlu0 %1719
      %1721 = vrot.lane.b32.xlu0 %v1364, 24
      %v1722 = vpop.permute.xlu0 %1721
      %1723 = vrot.lane.b32.xlu0 %v1699, 24
      %v1724 = vpop.permute.xlu0 %1723
      %1725 = vrot.lane.b32.xlu0 %v1366, 24
      %v1726 = vpop.permute.xlu0 %1725
      %1727 = vrot.lane.b32.xlu0 %v1367, 24
      %v1728 = vpop.permute.xlu0 %1727
      %1729 = vrot.lane.b32.xlu0 %v1368, 24
      %v1730 = vpop.permute.xlu0 %1729
      %1731 = vrot.lane.b32.xlu0 %v1700, 24
      %v1732 = vpop.permute.xlu0 %1731
      %v1733 = vpack.c.b16 %v692, %v691
      %v1734 = vpack.c.b16 %v702, %v701
      %v1735 = vpack.c.b16 %v712, %v711
      %v1736 = vpack.c.b16 %v722, %v721
      %1737 = vrot.lane.b32.xlu0 %v1370, 28
      %v1738 = vpop.permute.xlu0 %1737
      %1739 = vrot.lane.b32.xlu0 %v1371, 28
      %v1740 = vpop.permute.xlu0 %1739
      %1741 = vrot.lane.b32.xlu0 %v1372, 28
      %v1742 = vpop.permute.xlu0 %1741
      %1743 = vrot.lane.b32.xlu0 %v1733, 28
      %v1744 = vpop.permute.xlu0 %1743
      %1745 = vrot.lane.b32.xlu0 %v1374, 28
      %v1746 = vpop.permute.xlu0 %1745
      %1747 = vrot.lane.b32.xlu0 %v1375, 28
      %v1748 = vpop.permute.xlu0 %1747
      %1749 = vrot.lane.b32.xlu0 %v1376, 28
      %v1750 = vpop.permute.xlu0 %1749
      %1751 = vrot.lane.b32.xlu0 %v1734, 28
      %v1752 = vpop.permute.xlu0 %1751
      %1753 = vrot.lane.b32.xlu0 %v1378, 28
      %v1754 = vpop.permute.xlu0 %1753
      %1755 = vrot.lane.b32.xlu0 %v1379, 28
      %v1756 = vpop.permute.xlu0 %1755
      %1757 = vrot.lane.b32.xlu0 %v1380, 28
      %v1758 = vpop.permute.xlu0 %1757
      %1759 = vrot.lane.b32.xlu0 %v1735, 28
      %v1760 = vpop.permute.xlu0 %1759
      %1761 = vrot.lane.b32.xlu0 %v1382, 28
      %v1762 = vpop.permute.xlu0 %1761
      %1763 = vrot.lane.b32.xlu0 %v1383, 28
      %v1764 = vpop.permute.xlu0 %1763
      %1765 = vrot.lane.b32.xlu0 %v1384, 28
      %v1766 = vpop.permute.xlu0 %1765
      %1767 = vrot.lane.b32.xlu0 %v1736, 28
      %v1768 = vpop.permute.xlu0 %1767
      %v1773 = vunpack.c.l.b16 %v1258
      %v1774 = vunpack.c.l.b16 %v1268
      %v1775 = vunpack.c.l.b16 %v1278
      %v1776 = vunpack.c.l.b16 %v1288
      %v1777 = vpack.c.b16 %v1773, %v1637
      %v1778 = vpack.c.b16 %v1774, %v1638
      %v1779 = vpack.c.b16 %v1775, %v1639
      %v1780 = vpack.c.b16 %v1776, %v1640
      %1781 = vrot.lane.b32.xlu0 %v1482, 32
      %v1782 = vpop.permute.xlu0 %1781
      %1783 = vrot.lane.b32.xlu0 %v1483, 32
      %v1784 = vpop.permute.xlu0 %1783
      %1785 = vrot.lane.b32.xlu0 %v1484, 32
      %v1786 = vpop.permute.xlu0 %1785
      %1787 = vrot.lane.b32.xlu0 %v1777, 32
      %v1788 = vpop.permute.xlu0 %1787
      %1789 = vrot.lane.b32.xlu0 %v1486, 32
      %v1790 = vpop.permute.xlu0 %1789
      %1791 = vrot.lane.b32.xlu0 %v1487, 32
      %v1792 = vpop.permute.xlu0 %1791
      %1793 = vrot.lane.b32.xlu0 %v1488, 32
      %v1794 = vpop.permute.xlu0 %1793
      %1795 = vrot.lane.b32.xlu0 %v1778, 32
      %v1796 = vpop.permute.xlu0 %1795
      %1797 = vrot.lane.b32.xlu0 %v1490, 32
      %v1798 = vpop.permute.xlu0 %1797
      %1799 = vrot.lane.b32.xlu0 %v1491, 32
      %v1800 = vpop.permute.xlu0 %1799
      %1801 = vrot.lane.b32.xlu0 %v1492, 32
      %v1802 = vpop.permute.xlu0 %1801
      %1803 = vrot.lane.b32.xlu0 %v1779, 32
      %v1804 = vpop.permute.xlu0 %1803
      %1805 = vrot.lane.b32.xlu0 %v1494, 32
      %v1806 = vpop.permute.xlu0 %1805
      %1807 = vrot.lane.b32.xlu0 %v1495, 32
      %v1808 = vpop.permute.xlu0 %1807
      %1809 = vrot.lane.b32.xlu0 %v1496, 32
      %v1810 = vpop.permute.xlu0 %1809
      %1811 = vrot.lane.b32.xlu0 %v1780, 32
      %v1812 = vpop.permute.xlu0 %1811
      %vm1813 = vcmask 31744
      %v1816 = vsel %vm1813, %v1353, %v1386
      %v1819 = vsel %vm1813, %v1354, %v1388
      %v1822 = vsel %vm1813, %v1355, %v1390
      %v1825 = vsel %vm1813, %v1356, %v1392
      %v1828 = vsel %vm1813, %v1357, %v1394
      %v1831 = vsel %vm1813, %v1358, %v1396
      %v1834 = vsel %vm1813, %v1359, %v1398
      %v1837 = vsel %vm1813, %v1360, %v1400
      %v1840 = vsel %vm1813, %v1361, %v1402
      %v1843 = vsel %vm1813, %v1362, %v1404
      %v1846 = vsel %vm1813, %v1363, %v1406
      %v1849 = vsel %vm1813, %v1364, %v1408
      %v1852 = vsel %vm1813, %v1365, %v1410
      %v1855 = vsel %vm1813, %v1366, %v1412
      %v1858 = vsel %vm1813, %v1367, %v1414
      %v1861 = vsel %vm1813, %v1368, %v1416
      %vm1862 = vcmask 64512
      %v1864 = vsel %vm1862, %v1816, %v1498
      %v1866 = vsel %vm1862, %v1819, %v1500
      %v1868 = vsel %vm1862, %v1822, %v1502
      %v1870 = vsel %vm1862, %v1825, %v1504
      %v1872 = vsel %vm1862, %v1828, %v1506
      %v1874 = vsel %vm1862, %v1831, %v1508
      %v1876 = vsel %vm1862, %v1834, %v1510
      %v1878 = vsel %vm1862, %v1837, %v1512
      %v1880 = vsel %vm1862, %v1840, %v1514
      %v1882 = vsel %vm1862, %v1843, %v1516
      %v1884 = vsel %vm1862, %v1846, %v1518
      %v1886 = vsel %vm1862, %v1849, %v1520
      %v1888 = vsel %vm1862, %v1852, %v1522
      %v1890 = vsel %vm1862, %v1855, %v1524
      %v1892 = vsel %vm1862, %v1858, %v1526
      %v1894 = vsel %vm1862, %v1861, %v1528
      %vm1895 = vcmask 97280
      %v1897 = vsel %vm1895, %v1864, %v1554
      %v1899 = vsel %vm1895, %v1866, %v1556
      %v1901 = vsel %vm1895, %v1868, %v1558
      %v1903 = vsel %vm1895, %v1870, %v1560
      %v1905 = vsel %vm1895, %v1872, %v1562
      %v1907 = vsel %vm1895, %v1874, %v1564
      %v1909 = vsel %vm1895, %v1876, %v1566
      %v1911 = vsel %vm1895, %v1878, %v1568
      %v1913 = vsel %vm1895, %v1880, %v1570
      %v1915 = vsel %vm1895, %v1882, %v1572
      %v1917 = vsel %vm1895, %v1884, %v1574
      %v1919 = vsel %vm1895, %v1886, %v1576
      %v1921 = vsel %vm1895, %v1888, %v1578
      %v1923 = vsel %vm1895, %v1890, %v1580
      %v1925 = vsel %vm1895, %v1892, %v1582
      %v1927 = vsel %vm1895, %v1894, %v1584
      %v1929 = vsel %vm358, %v1897, %v1602
      %v1931 = vsel %vm358, %v1899, %v1604
      %v1933 = vsel %vm358, %v1901, %v1606
      %v1935 = vsel %vm358, %v1903, %v1608
      %v1937 = vsel %vm358, %v1905, %v1610
      %v1939 = vsel %vm358, %v1907, %v1612
      %v1941 = vsel %vm358, %v1909, %v1614
      %v1943 = vsel %vm358, %v1911, %v1616
      %v1945 = vsel %vm358, %v1913, %v1618
      %v1947 = vsel %vm358, %v1915, %v1620
      %v1949 = vsel %vm358, %v1917, %v1622
      %v1951 = vsel %vm358, %v1919, %v1624
      %v1953 = vsel %vm358, %v1921, %v1626
      %v1955 = vsel %vm358, %v1923, %v1628
      %v1957 = vsel %vm358, %v1925, %v1630
      %v1959 = vsel %vm358, %v1927, %v1632
      %vm1960 = vcmask 162816
      %v1962 = vsel %vm1960, %v1929, %v1658
      %v1964 = vsel %vm1960, %v1931, %v1660
      %v1966 = vsel %vm1960, %v1933, %v1662
      %v1968 = vsel %vm1960, %v1935, %v1664
      %v1970 = vsel %vm1960, %v1937, %v1666
      %v1972 = vsel %vm1960, %v1939, %v1668
      %v1974 = vsel %vm1960, %v1941, %v1670
      %v1976 = vsel %vm1960, %v1943, %v1672
      %v1978 = vsel %vm1960, %v1945, %v1674
      %v1980 = vsel %vm1960, %v1947, %v1676
      %v1982 = vsel %vm1960, %v1949, %v1678
      %v1984 = vsel %vm1960, %v1951, %v1680
      %v1986 = vsel %vm1960, %v1953, %v1682
      %v1988 = vsel %vm1960, %v1955, %v1684
      %v1990 = vsel %vm1960, %v1957, %v1686
      %v1992 = vsel %vm1960, %v1959, %v1688
      %vm1993 = vcmask 195584
      %v1995 = vsel %vm1993, %v1962, %v1702
      %v1997 = vsel %vm1993, %v1964, %v1704
      %v1999 = vsel %vm1993, %v1966, %v1706
      %v2001 = vsel %vm1993, %v1968, %v1708
      %v2003 = vsel %vm1993, %v1970, %v1710
      %v2005 = vsel %vm1993, %v1972, %v1712
      %v2007 = vsel %vm1993, %v1974, %v1714
      %v2009 = vsel %vm1993, %v1976, %v1716
      %v2011 = vsel %vm1993, %v1978, %v1718
      %v2013 = vsel %vm1993, %v1980, %v1720
      %v2015 = vsel %vm1993, %v1982, %v1722
      %v2017 = vsel %vm1993, %v1984, %v1724
      %v2019 = vsel %vm1993, %v1986, %v1726
      %v2021 = vsel %vm1993, %v1988, %v1728
      %v2023 = vsel %vm1993, %v1990, %v1730
      %v2025 = vsel %vm1993, %v1992, %v1732
      %vm2026 = vcmask 228352
      %v2028 = vsel %vm2026, %v1995, %v1738
      %v2030 = vsel %vm2026, %v1997, %v1740
      %v2032 = vsel %vm2026, %v1999, %v1742
      %v2034 = vsel %vm2026, %v2001, %v1744
      %v2036 = vsel %vm2026, %v2003, %v1746
      %v2038 = vsel %vm2026, %v2005, %v1748
      %v2040 = vsel %vm2026, %v2007, %v1750
      %v2042 = vsel %vm2026, %v2009, %v1752
      %v2044 = vsel %vm2026, %v2011, %v1754
      %v2046 = vsel %vm2026, %v2013, %v1756
      %v2048 = vsel %vm2026, %v2015, %v1758
      %v2050 = vsel %vm2026, %v2017, %v1760
      %v2052 = vsel %vm2026, %v2019, %v1762
      %v2054 = vsel %vm2026, %v2021, %v1764
      %v2056 = vsel %vm2026, %v2023, %v1766
      %v2058 = vsel %vm2026, %v2025, %v1768
      %vm2059 = vcmask 261120
      %v2061 = vsel %vm2059, %v2028, %v1782
      %v2063 = vsel %vm2059, %v2030, %v1784
      %v2065 = vsel %vm2059, %v2032, %v1786
      %v2067 = vsel %vm2059, %v2034, %v1788
      %v2069 = vsel %vm2059, %v2036, %v1790
      %v2071 = vsel %vm2059, %v2038, %v1792
      %v2073 = vsel %vm2059, %v2040, %v1794
      %v2075 = vsel %vm2059, %v2042, %v1796
      %v2077 = vsel %vm2059, %v2044, %v1798
      %v2079 = vsel %vm2059, %v2046, %v1800
      %v2081 = vsel %vm2059, %v2048, %v1802
      %v2083 = vsel %vm2059, %v2050, %v1804
      %v2085 = vsel %vm2059, %v2052, %v1806
      %v2087 = vsel %vm2059, %v2054, %v1808
      %v2089 = vsel %vm2059, %v2056, %v1810
      %v2091 = vsel %vm2059, %v2058, %v1812
      %v2092 = vld [vmem:[%s3] sm:$0xf]
      %v2093 = vld [vmem:[%s3 + $0x4] sm:$0xf]
      %v2094 = vld [vmem:[%s3 + $0x8] sm:$0xf]
      %v2095 = vld [vmem:[%s3 + $0xc] sm:$0xf]
      %v2096 = vld [vmem:[%s3 + $0x10] sm:$0x3]
      %v2097 = vld [vmem:[%s4] sm:$0x1]
      %v2099 = vperm.slane %v2097, 0
      %v2106 = vunpack.c.l.b16 %v2092
      %v2107 = vunpack.c.l.b16 %v2093
      %v2108 = vunpack.c.l.b16 %v2094
      %v2109 = vunpack.c.l.b16 %v2095
      %v2110 = vunpack.c.l.b16 %v2096
      %v2111 = vpack.c.b16 %v2107, %v2106
      %v2112 = vpack.c.b16 %v2109, %v2108
      %v2113 = vpack.c.b16 %v2110, %v2110
      %vm2116 = vcmask 293888
      %v2117 = vsel %vm2116, %v2061, 0
      %v2119 = vsel %vm2116, %v2063, 0
      %v2121 = vsel %vm2116, %v2065, 0
      %v2123 = vsel %vm2116, %v2067, 0
      %v2125 = vsel %vm2116, %v2069, 0
      %v2127 = vsel %vm2116, %v2071, 0
      %v2129 = vsel %vm2116, %v2073, 0
      %v2131 = vsel %vm2116, %v2075, 0
      %v2133 = vsel %vm2116, %v2077, 0
      %v2135 = vsel %vm2116, %v2079, 0
      %v2137 = vsel %vm2116, %v2081, 0
      %v2139 = vsel %vm2116, %v2083, 0
      %v2141 = vsel %vm2116, %v2085, 0
      %v2143 = vsel %vm2116, %v2087, 0
      %v2145 = vsel %vm2116, %v2089, 0
      %v2147 = vsel %vm2116, %v2091, 0
      %vm2149 = vcmask 1041408
      %v2151 = vsel %vm2149, %v2113, 0
      %2153 = vmatpush.bf16.msra.mxu0 0
      %2154 = vmatpush.bf16.msra.mxu0 0
      %2155 = vmatpush.bf16.msra.mxu0 0
      %2156 = vmatpush.bf16.msra.mxu0 0
      %2157 = vmatpush.bf16.msra.mxu0 0
      %2158 = vmatpush.bf16.msra.mxu0 %v2151
      %2159 = vmatpush.bf16.msra.mxu0 %v2112
      %2160 = vmatpush.bf16.msra.mxu0 %v2111
      %2161 = vmatmul.bf16.gmra.mxu0 %v2117
      %v2162 = vpop.f32.mrf.mxu0
      %v2163 = vadd.f32 %v2099, %v2162
      %v2164 = vpop.f32.mrf.mxu0
      %v2165 = vadd.f32 %v2099, %v2164
      %2166 = vmatmul.bf16.gmra.mxu0 %v2119
      %v2167 = vpop.f32.mrf.mxu0
      %v2168 = vadd.f32 %v2099, %v2167
      %v2169 = vpop.f32.mrf.mxu0
      %v2170 = vadd.f32 %v2099, %v2169
      %2171 = vmatmul.bf16.gmra.mxu0 %v2121
      %v2172 = vpop.f32.mrf.mxu0
      %v2173 = vadd.f32 %v2099, %v2172
      %v2174 = vpop.f32.mrf.mxu0
      %v2175 = vadd.f32 %v2099, %v2174
      %2176 = vmatmul.bf16.gmra.mxu0 %v2123
      %v2177 = vpop.f32.mrf.mxu0
      %v2178 = vadd.f32 %v2099, %v2177
      %v2179 = vpop.f32.mrf.mxu0
      %v2180 = vadd.f32 %v2099, %v2179
      %2181 = vmatmul.bf16.gmra.mxu0 %v2125
      %v2182 = vpop.f32.mrf.mxu0
      %v2183 = vadd.f32 %v2099, %v2182
      %v2184 = vpop.f32.mrf.mxu0
      %v2185 = vadd.f32 %v2099, %v2184
      %2186 = vmatmul.bf16.gmra.mxu0 %v2127
      %v2187 = vpop.f32.mrf.mxu0
      %v2188 = vadd.f32 %v2099, %v2187
      %v2189 = vpop.f32.mrf.mxu0
      %v2190 = vadd.f32 %v2099, %v2189
      %2191 = vmatmul.bf16.gmra.mxu0 %v2129
      %v2192 = vpop.f32.mrf.mxu0
      %v2193 = vadd.f32 %v2099, %v2192
      %v2194 = vpop.f32.mrf.mxu0
      %v2195 = vadd.f32 %v2099, %v2194
      %2196 = vmatmul.bf16.gmra.mxu0 %v2131
      %v2197 = vpop.f32.mrf.mxu0
      %v2198 = vadd.f32 %v2099, %v2197
      %v2199 = vpop.f32.mrf.mxu0
      %v2200 = vadd.f32 %v2099, %v2199
      %2201 = vmatmul.bf16.gmra.mxu0 %v2133
      %v2202 = vpop.f32.mrf.mxu0
      %v2203 = vadd.f32 %v2099, %v2202
      %v2204 = vpop.f32.mrf.mxu0
      %v2205 = vadd.f32 %v2099, %v2204
      %2206 = vmatmul.bf16.gmra.mxu0 %v2135
      %v2207 = vpop.f32.mrf.mxu0
      %v2208 = vadd.f32 %v2099, %v2207
      %v2209 = vpop.f32.mrf.mxu0
      %v2210 = vadd.f32 %v2099, %v2209
      %2211 = vmatmul.bf16.gmra.mxu0 %v2137
      %v2212 = vpop.f32.mrf.mxu0
      %v2213 = vadd.f32 %v2099, %v2212
      %v2214 = vpop.f32.mrf.mxu0
      %v2215 = vadd.f32 %v2099, %v2214
      %2216 = vmatmul.bf16.gmra.mxu0 %v2139
      %v2217 = vpop.f32.mrf.mxu0
      %v2218 = vadd.f32 %v2099, %v2217
      %v2219 = vpop.f32.mrf.mxu0
      %v2220 = vadd.f32 %v2099, %v2219
      %2221 = vmatmul.bf16.gmra.mxu0 %v2141
      %v2222 = vpop.f32.mrf.mxu0
      %v2223 = vadd.f32 %v2099, %v2222
      %v2224 = vpop.f32.mrf.mxu0
      %v2225 = vadd.f32 %v2099, %v2224
      %2226 = vmatmul.bf16.gmra.mxu0 %v2143
      %v2227 = vpop.f32.mrf.mxu0
      %v2228 = vadd.f32 %v2099, %v2227
      %v2229 = vpop.f32.mrf.mxu0
      %v2230 = vadd.f32 %v2099, %v2229
      %2231 = vmatmul.bf16.gmra.mxu0 %v2145
      %v2232 = vpop.f32.mrf.mxu0
      %v2233 = vadd.f32 %v2099, %v2232
      %v2234 = vpop.f32.mrf.mxu0
      %v2235 = vadd.f32 %v2099, %v2234
      %2236 = vmatmul.bf16.gmra.mxu0 %v2147
      %v2237 = vpop.f32.mrf.mxu0
      %v2238 = vadd.f32 %v2099, %v2237
      %v2239 = vpop.f32.mrf.mxu0
      %v2240 = vadd.f32 %v2099, %v2239
      %2241 = vdwg.mxu0
      %v2242 = vmax.f32 %v2163, 0.0
      %v2243 = vmax.f32 %v2165, 0.0
      %v2244 = vmax.f32 %v2168, 0.0
      %v2245 = vmax.f32 %v2170, 0.0
      %v2246 = vmax.f32 %v2173, 0.0
      %v2247 = vmax.f32 %v2175, 0.0
      %v2248 = vmax.f32 %v2178, 0.0
      %v2249 = vmax.f32 %v2180, 0.0
      %v2250 = vmax.f32 %v2183, 0.0
      %v2251 = vmax.f32 %v2185, 0.0
      %v2252 = vmax.f32 %v2188, 0.0
      %v2253 = vmax.f32 %v2190, 0.0
      %v2254 = vmax.f32 %v2193, 0.0
      %v2255 = vmax.f32 %v2195, 0.0
      %v2256 = vmax.f32 %v2198, 0.0
      %v2257 = vmax.f32 %v2200, 0.0
      %v2258 = vmax.f32 %v2203, 0.0
      %v2259 = vmax.f32 %v2205, 0.0
      %v2260 = vmax.f32 %v2208, 0.0
      %v2261 = vmax.f32 %v2210, 0.0
      %v2262 = vmax.f32 %v2213, 0.0
      %v2263 = vmax.f32 %v2215, 0.0
      %v2264 = vmax.f32 %v2218, 0.0
      %v2265 = vmax.f32 %v2220, 0.0
      %v2266 = vmax.f32 %v2223, 0.0
      %v2267 = vmax.f32 %v2225, 0.0
      %v2268 = vmax.f32 %v2228, 0.0
      %v2269 = vmax.f32 %v2230, 0.0
      %v2270 = vmax.f32 %v2233, 0.0
      %v2271 = vmax.f32 %v2235, 0.0
      %v2272 = vmax.f32 %v2238, 0.0
      %v2273 = vmax.f32 %v2240, 0.0
      %v2274 = vpack.c.bf16 %v2242, %v2242
      %v2275 = vpack.c.bf16 %v2243, %v2243
      %v2276 = vpack.c.bf16 %v2244, %v2244
      %v2277 = vpack.c.bf16 %v2245, %v2245
      %v2278 = vpack.c.bf16 %v2246, %v2246
      %v2279 = vpack.c.bf16 %v2247, %v2247
      %v2280 = vpack.c.bf16 %v2248, %v2248
      %v2281 = vpack.c.bf16 %v2249, %v2249
      %v2282 = vpack.c.bf16 %v2250, %v2250
      %v2283 = vpack.c.bf16 %v2251, %v2251
      %v2284 = vpack.c.bf16 %v2252, %v2252
      %v2285 = vpack.c.bf16 %v2253, %v2253
      %v2286 = vpack.c.bf16 %v2254, %v2254
      %v2287 = vpack.c.bf16 %v2255, %v2255
      %v2288 = vpack.c.bf16 %v2256, %v2256
      %v2289 = vpack.c.bf16 %v2257, %v2257
      %v2290 = vpack.c.bf16 %v2258, %v2258
      %v2291 = vpack.c.bf16 %v2259, %v2259
      %v2292 = vpack.c.bf16 %v2260, %v2260
      %v2293 = vpack.c.bf16 %v2261, %v2261
      %v2294 = vpack.c.bf16 %v2262, %v2262
      %v2295 = vpack.c.bf16 %v2263, %v2263
      %v2296 = vpack.c.bf16 %v2264, %v2264
      %v2297 = vpack.c.bf16 %v2265, %v2265
      %v2298 = vpack.c.bf16 %v2266, %v2266
      %v2299 = vpack.c.bf16 %v2267, %v2267
      %v2300 = vpack.c.bf16 %v2268, %v2268
      %v2301 = vpack.c.bf16 %v2269, %v2269
      %v2302 = vpack.c.bf16 %v2270, %v2270
      %v2303 = vpack.c.bf16 %v2271, %v2271
      %v2304 = vpack.c.bf16 %v2272, %v2272
      %v2305 = vpack.c.bf16 %v2273, %v2273
      %2306 = vst.msk [vmem:[%s231] sm:$0xf] %vm528, %v2274
      %2307 = vst.msk [vmem:[%s231 + $0x4] sm:$0xf] %vm528, %v2275
      %2308 = vst.msk [vmem:[%s231 + $0x8] sm:$0xf] %vm528, %v2276
      %2309 = vst.msk [vmem:[%s231 + $0xc] sm:$0xf] %vm528, %v2277
      %2310 = vst.msk [vmem:[%s231 + $0x10] sm:$0xf] %vm528, %v2278
      %2311 = vst.msk [vmem:[%s231 + $0x14] sm:$0xf] %vm528, %v2279
      %2312 = vst.msk [vmem:[%s231 + $0x18] sm:$0xf] %vm528, %v2280
      %2313 = vst.msk [vmem:[%s231 + $0x1c] sm:$0xf] %vm528, %v2281
      %2314 = vst.msk [vmem:[%s231 + $0x20] sm:$0xf] %vm528, %v2282
      %2315 = vst.msk [vmem:[%s231 + $0x24] sm:$0xf] %vm528, %v2283
      %2316 = vst.msk [vmem:[%s231 + $0x28] sm:$0xf] %vm528, %v2284
      %2317 = vst.msk [vmem:[%s231 + $0x2c] sm:$0xf] %vm528, %v2285
      %2318 = vst.msk [vmem:[%s231 + $0x30] sm:$0xf] %vm528, %v2286
      %2319 = vst.msk [vmem:[%s231 + $0x34] sm:$0xf] %vm528, %v2287
      %2320 = vst.msk [vmem:[%s231 + $0x38] sm:$0xf] %vm528, %v2288
      %2321 = vst.msk [vmem:[%s231 + $0x3c] sm:$0xf] %vm528, %v2289
      %2322 = vst.msk [vmem:[%s231 + $0x40] sm:$0xf] %vm528, %v2290
      %2323 = vst.msk [vmem:[%s231 + $0x44] sm:$0xf] %vm528, %v2291
      %2324 = vst.msk [vmem:[%s231 + $0x48] sm:$0xf] %vm528, %v2292
      %2325 = vst.msk [vmem:[%s231 + $0x4c] sm:$0xf] %vm528, %v2293
      %2326 = vst.msk [vmem:[%s231 + $0x50] sm:$0xf] %vm528, %v2294
      %2327 = vst.msk [vmem:[%s231 + $0x54] sm:$0xf] %vm528, %v2295
      %2328 = vst.msk [vmem:[%s231 + $0x58] sm:$0xf] %vm528, %v2296
      %2329 = vst.msk [vmem:[%s231 + $0x5c] sm:$0xf] %vm528, %v2297
      %2330 = vst.msk [vmem:[%s231 + $0x60] sm:$0xf] %vm528, %v2298
      %2331 = vst.msk [vmem:[%s231 + $0x64] sm:$0xf] %vm528, %v2299
      %2332 = vst.msk [vmem:[%s231 + $0x68] sm:$0xf] %vm528, %v2300
      %2333 = vst.msk [vmem:[%s231 + $0x6c] sm:$0xf] %vm528, %v2301
      %2334 = vst.msk [vmem:[%s231 + $0x70] sm:$0xf] %vm528, %v2302
      %2335 = vst.msk [vmem:[%s231 + $0x74] sm:$0xf] %vm528, %v2303
      %2336 = vst.msk [vmem:[%s231 + $0x78] sm:$0xf] %vm528, %v2304
      %2337 = vst.msk [vmem:[%s231 + $0x7c] sm:$0xf] %vm528, %v2305
      %s2338 = smul.u32 4, %s16
      %p2339 = scmp.lt.s32.totalorder %s2338, 7
      %s2340 = scalar_select %p2339, %s2338, 7
      %s2341 = smul.addr %s2340, 8
      %s2342 = smul.addr %s2341, 4
      %s2343 = scalar_lea.vmem %s5, %s2342
      // Predicated region
      $region41: #{bottleneck_forward.2} parent=39 // pred_check
        %p2344 = pneg %p144
      $region42: #{bottleneck_forward.2} parent=39 // pred_check_branch
        %2346 = sbr.rel (%p2344) target = $region44
      $region43: #{bottleneck_forward.2} parent=39 // pred_region
        %s2347 = smul.u32 4, %s16
      $region44: #{bottleneck_forward.2} parent=39 // pred_fallthru
        _
    $region40: #{bottleneck_forward.2} parent=5 // pred_fallthru
      _
    %p2348 = scmp.le.s32.totalorder 2, %s11
    // Predicated region
    $region45: #{bottleneck_forward.2} parent=5 // pred_check
      %p2349 = pneg %p2348
    $region46: #{bottleneck_forward.2} parent=5 // pred_check_branch
      %2351 = sbr.rel (%p2349) target = $region48
    $region47: #{bottleneck_forward.2} parent=5 // pred_region
      %s2352 = ssub.s32 %s11, 2
      // Predicated region
      $region49: #{bottleneck_forward.2} parent=47 // pred_check
        %p2353 = pneg %p150
      $region50: #{bottleneck_forward.2} parent=47 // pred_check_branch
        %2355 = sbr.rel (%p2353) target = $region52
      $region51: #{bottleneck_forward.2} parent=47 // pred_region
        %s2356 = smul.u32 4, %s17
        %p2357 = scmp.lt.s32.totalorder %s2356, 7
        %s2358 = scalar_select %p2357, %s2356, 7
        %s2359 = smul.addr %s2358, 8
        %s2360 = smul.addr %s2359, 4
        %s2361 = scalar_lea.vmem %s5, %s2360
      $region52: #{bottleneck_forward.2} parent=47 // pred_fallthru
        _
    $region48: #{bottleneck_forward.2} parent=5 // pred_fallthru
      _
  $region6: #{bottleneck_forward.2} parent=0 // loop_footer
    %s15 = sadd.s32 1, %s11
  $region7: #{bottleneck_forward.2} parent=0 // loop_footer_branch
    %10 = sbr.rel target = $region3
  $region8: #{bottleneck_forward.2} parent=0 // loop_exit
    _

</llo_original>
